<compile_context>
chip_gen: v7x
topology: tpu7x:2x2x1
jax: 0.10.0
libtpu: 0.0.40
codegen_flags: <defaults>
</compile_context>

<pallas_src>
import jax
import jax.numpy as jnp
from jax.experimental import pallas as pl
from jax.experimental.pallas import tpu as pltpu


def _round_up(a, b):
    return ((a + b - 1) // b) * b


def attn_net_kernel(x_ref, w1_ref, b1_ref, w2t_ref, b2_ref, a_ref):
    # x tile: (TN, L); W1: (L, D) bf16; b1: (1, D) f32; W2^T: (C, D) f32; b2: (C, 1) f32
    x = x_ref[...].astype(jnp.bfloat16)     # no-op if the caller already streams bf16
    h = jnp.dot(x, w1_ref[...], preferred_element_type=jnp.float32)  # (TN, D) bf16 MXU, f32 acc
    h = jnp.tanh(h + b1_ref[...])                                    # f32 VPU + EUP epilogue

    # Second "matmul" has an n_classes-wide output (1 for CLAM): keep it off the MXU.
    # Per class: VPU multiply, fold lanes D -> 128 (halves XLU work), one cross-lane reduce.
    # TODO(synk): if n_classes is ever large (>= ~32), switch this back to jnp.dot on the MXU.
    w2t = w2t_ref[...]                      # (C, D)
    C, D = w2t.shape
    rows = []
    for c in range(C):                      # static, tiny
        prod = h * w2t[c:c + 1, :]          # (TN, D) on VPU
        d = D
        while d > 128 and d % 2 == 0:       # pre-fold before the cross-lane reduce
            prod = prod[:, : d // 2] + prod[:, d // 2:]
            d //= 2
        rows.append(jnp.sum(prod, axis=-1)[None, :])       # (1, TN)
    a = rows[0] if C == 1 else jnp.concatenate(rows, axis=0)  # (C, TN)

    # Lane-dense (transposed) output block: last dim is tile_n (>= 128 full lanes).
    # TODO(synk): A/B against an untransposed (TN, C) out block (masked vst) per review.
    a_ref[...] = (a + b2_ref[...]).astype(a_ref.dtype)


def attn_net_forward(x, w1, b1, w2, b2, *, tile_n=1024):
    """x: (N, L).  Returns (A, x) with A: (N, n_classes), matching the nn.Module.

    Pass x already in bfloat16 to halve the dominant HBM stream; MXU accumulation and
    the tanh epilogue stay in float32 either way.  On v7x with bf16 x, tile_n=2048 is
    a good setting (still well inside the 48 MiB scoped-VMEM budget set below).
    """
    N, L = x.shape
    D = w1.shape[1]
    C = w2.shape[1]

    # Tile selection (no full-array padding: Pallas masks the ragged last block):
    #  - lane-aligned (multiple of 128) so the transposed (C, tile) output block is
    #    legal even when N is ragged;
    #  - for N > 128, cap the tile at ceil(N/2) rounded up so the grid has >= 2 steps
    #    and ("parallel",) can shard across both v7x TensorCores.
    if N <= 128:
        tile_n_eff = 128
    else:
        two_way = _round_up(-(-N // 2), 128)
        tile_n_eff = max(128, min(_round_up(tile_n, 128), two_way))

    # Tiny-bag corner: never let a block exceed the array extent -- pad up to one
    # 128-row tile (cheap).  For N >= tile the ragged last block is handled by Pallas
    # masking, so large bags never pay an extra HBM copy of x.
    x_in = x
    n_eff = N
    if N < tile_n_eff:
        n_eff = tile_n_eff
        x_in = jnp.pad(x, ((0, tile_n_eff - N), (0, 0)))
    grid_n = -(-n_eff // tile_n_eff)

    # Parameter layouts: W1 resident in bf16 (native MXU dtype); the rest tiny f32 2-D.
    w1_b = w1.astype(jnp.bfloat16)
    b1_2d = b1.reshape(1, D).astype(jnp.float32)
    w2_t = jnp.transpose(w2).astype(jnp.float32)   # (C, D)
    b2_2d = b2.reshape(C, 1).astype(jnp.float32)

    x_bytes = N * L * jnp.dtype(x.dtype).itemsize
    cost = pl.CostEstimate(
        flops=2 * N * L * D + 2 * N * D * C,
        transcendentals=N * D,
        bytes_accessed=x_bytes + L * D * 2 + (N * C + D + D * C + C) * 4,
    )

    a_t = pl.pallas_call(
        attn_net_kernel,
        out_shape=jax.ShapeDtypeStruct((C, n_eff), x.dtype),
        grid_spec=pltpu.PrefetchScalarGridSpec(
            num_scalar_prefetch=0,
            grid=(grid_n,),
            in_specs=[
                pl.BlockSpec((tile_n_eff, L), lambda i: (i, 0)),   # x tile (streamed)
                pl.BlockSpec((L, D), lambda i: (0, 0)),            # W1 (resident, bf16)
                pl.BlockSpec((1, D), lambda i: (0, 0)),            # b1
                pl.BlockSpec((C, D), lambda i: (0, 0)),            # W2^T
                pl.BlockSpec((C, 1), lambda i: (0, 0)),            # b2
            ],
            # Lane-dense output: last dim of the block is tile_n (multiple of 128 lanes).
            out_specs=pl.BlockSpec((C, tile_n_eff), lambda i: (0, i)),
            # TODO(synk): single-buffer the constant-index weight operands via
            # pipeline_mode=pl.Buffered(1) if VMEM headroom ever becomes load-bearing.
        ),
        compiler_params=pltpu.CompilerParams(
            dimension_semantics=("parallel",),
            # 1024-row f32 tile double-buffered + temps ~14 MiB brushes v5e's 16 MiB
            # default scoped VMEM; raise the budget (well under every gen's physical).
            vmem_limit_bytes=48 << 20,
        ),
        cost_estimate=cost,
    )(x_in, w1_b, b1_2d, w2_t, b2_2d)

    # Drop any tiny-bag padding and restore the (N, n_classes) layout of the module.
    A = a_t[:, :N].T
    return A, x


if __name__ == "__main__":
    # Shapes consistent with the module defaults: L=1024, D=256, n_classes=1;
    # N deliberately NOT a multiple of 8/128 to exercise the ragged last block.
    N, L, D, n_classes = 300, 1024, 256, 1

    key = jax.random.PRNGKey(0)
    kx, kw1, kb1, kw2, kb2 = jax.random.split(key, 5)

    x = jax.random.normal(kx, (N, L), dtype=jnp.float32)

    # Deterministic parameter init (PyTorch Linear-style uniform bounds).
    lim1 = 1.0 / (L ** 0.5)
    lim2 = 1.0 / (D ** 0.5)
    w1 = jax.random.uniform(kw1, (L, D), jnp.float32, -lim1, lim1)
    b1 = jax.random.uniform(kb1, (D,), jnp.float32, -lim1, lim1)
    w2 = jax.random.uniform(kw2, (D, n_classes), jnp.float32, -lim2, lim2)
    b2 = jax.random.uniform(kb2, (n_classes,), jnp.float32, -lim2, lim2)

    # Plain-JAX f32 reference (kernel uses bf16 MXU operands -> ~1e-2 tolerance).
    A_ref = jnp.tanh(x @ w1 + b1) @ w2 + b2

    # Path 1: f32 x stream, default tile -> 2 grid steps (tile 256 for N=300, ragged tail).
    A1, x1 = attn_net_forward(x, w1, b1, w2, b2)
    A1 = jax.block_until_ready(A1)
    x1 = jax.block_until_ready(x1)
    assert A1.shape == (N, n_classes)
    assert x1.shape == (N, L)
    assert jnp.allclose(A1.astype(jnp.float32), A_ref, atol=3e-2, rtol=3e-2)
    assert jnp.array_equal(x1, x)

    # Path 2: explicit small tile -> 3 grid steps with a masked last block.
    A2, _ = attn_net_forward(x, w1, b1, w2, b2, tile_n=128)
    A2 = jax.block_until_ready(A2)
    assert jnp.allclose(A2.astype(jnp.float32), A_ref, atol=3e-2, rtol=3e-2)

    # Path 3: x streamed as bf16 from HBM (halves the dominant DMA term).
    A3, _ = attn_net_forward(x.astype(jnp.bfloat16), w1, b1, w2, b2)
    A3 = jax.block_until_ready(A3)
    assert A3.dtype == jnp.bfloat16
    assert jnp.allclose(A3.astype(jnp.float32), A_ref, atol=6e-2, rtol=6e-2)

    # Path 4: tiny bag (single 128-row tile, padded corner case).
    Ns = 96
    A4, _ = attn_net_forward(x[:Ns], w1, b1, w2, b2)
    A4 = jax.block_until_ready(A4)
    assert A4.shape == (Ns, n_classes)
    assert jnp.allclose(A4.astype(jnp.float32), A_ref[:Ns], atol=3e-2, rtol=3e-2)

    print("KERNEL_OK")
</pallas_src>

<mosaic_0001>
module attributes {stable_mosaic.version = 11 : i64} {
  func.func @attn_net_kernel(%arg0: i32, %arg1: memref<256x1024xf32, #tpu.memory_space<vmem>>, %arg2: memref<1024x256xbf16, #tpu.memory_space<vmem>>, %arg3: memref<1x256xf32, #tpu.memory_space<vmem>>, %arg4: memref<1x256xf32, #tpu.memory_space<vmem>>, %arg5: memref<1x1xf32, #tpu.memory_space<vmem>>, %arg6: memref<1x256xf32, #tpu.memory_space<vmem>>) attributes {dimension_semantics = [#tpu.dimension_semantics<parallel>], iteration_bounds = array<i64: 2>, scalar_prefetch = 0 : i64, scratch_operands = 0 : i64, tpu.core_type = #tpu.core_type<tc>, window_params = [{transform_indices = @transform_0, window_bounds = array<i64: 256, 1024>}, {pipeline_mode = #tpu.pipeline_mode<synchronous>, transform_indices = @transform_1, window_bounds = array<i64: 1024, 256>}, {pipeline_mode = #tpu.pipeline_mode<synchronous>, transform_indices = @transform_2, window_bounds = array<i64: 1, 256>}, {pipeline_mode = #tpu.pipeline_mode<synchronous>, transform_indices = @transform_3, window_bounds = array<i64: 1, 256>}, {pipeline_mode = #tpu.pipeline_mode<synchronous>, transform_indices = @transform_4, window_bounds = array<i64: 1, 1>}, {transform_indices = @transform_5, window_bounds = array<i64: 1, 256>}]} {
    %c0 = arith.constant 0 : index
    %c0_0 = arith.constant 0 : index
    %0 = vector.load %arg1[%c0, %c0_0] : memref<256x1024xf32, #tpu.memory_space<vmem>>, vector<256x1024xf32>
    %1 = arith.truncf %0 : vector<256x1024xf32> to vector<256x1024xbf16>
    %c0_1 = arith.constant 0 : index
    %c0_2 = arith.constant 0 : index
    %2 = vector.load %arg2[%c0_1, %c0_2] : memref<1024x256xbf16, #tpu.memory_space<vmem>>, vector<1024x256xbf16>
    %cst = arith.constant dense<0.000000e+00> : vector<256x256xf32>
    %3 = tpu.matmul %1, %2, %cst {dimension_numbers = #tpu.dot_dimension_numbers<[1], [0], [0], [1], [0, 0, 1, 1], [], []>} : vector<256x1024xbf16>, vector<1024x256xbf16>, vector<256x256xf32> -> vector<256x256xf32>
    %c0_3 = arith.constant 0 : index
    %c0_4 = arith.constant 0 : index
    %4 = vector.load %arg3[%c0_3, %c0_4] : memref<1x256xf32, #tpu.memory_space<vmem>>, vector<1x256xf32>
    %5 = vector.broadcast %4 : vector<1x256xf32> to vector<256x256xf32>
    %6 = arith.addf %3, %5 : vector<256x256xf32>
    %7 = math.tanh %6 : vector<256x256xf32>
    %c0_5 = arith.constant 0 : index
    %c0_6 = arith.constant 0 : index
    %8 = vector.load %arg4[%c0_5, %c0_6] : memref<1x256xf32, #tpu.memory_space<vmem>>, vector<1x256xf32>
    %9 = vector.broadcast %8 : vector<1x256xf32> to vector<256x256xf32>
    %10 = arith.mulf %7, %9 : vector<256x256xf32>
    %11 = vector.extract_strided_slice %10 {offsets = [0, 0], sizes = [256, 128], strides = [1, 1]} : vector<256x256xf32> to vector<256x128xf32>
    %12 = vector.extract_strided_slice %10 {offsets = [0, 128], sizes = [256, 128], strides = [1, 1]} : vector<256x256xf32> to vector<256x128xf32>
    %13 = arith.addf %11, %12 : vector<256x128xf32>
    %cst_7 = arith.constant dense<0.000000e+00> : vector<256xf32>
    %14 = vector.multi_reduction <add>, %13, %cst_7 [1] : vector<256x128xf32> to vector<256xf32>
    %15 = vector.shape_cast %14 : vector<256xf32> to vector<1x256xf32>
    %c0_8 = arith.constant 0 : index
    %c0_9 = arith.constant 0 : index
    %16 = vector.load %arg5[%c0_8, %c0_9] : memref<1x1xf32, #tpu.memory_space<vmem>>, vector<1x1xf32>
    %17 = vector.broadcast %16 : vector<1x1xf32> to vector<1x256xf32>
    %18 = arith.addf %15, %17 : vector<1x256xf32>
    %c0_10 = arith.constant 0 : index
    %c0_11 = arith.constant 0 : index
    %19 = vector.load %arg6[%c0_10, %c0_11] : memref<1x256xf32, #tpu.memory_space<vmem>>, vector<1x256xf32>
    tpu.vector_store %arg6[%c0_10, %c0_11], %18 {strides = array<i32>} : memref<1x256xf32, #tpu.memory_space<vmem>>, vector<1x256xf32>,
    return
  }
  func.func @transform_0(%arg0: i32) -> (i32, i32) {
    %c0_i32 = arith.constant 0 : i32
    %c0_i32_0 = arith.constant 0 : i32
    return %arg0, %c0_i32 : i32, i32
  }
  func.func @transform_1(%arg0: i32) -> (i32, i32) {
    %c0_i32 = arith.constant 0 : i32
    %c0_i32_0 = arith.constant 0 : i32
    %c0_i32_1 = arith.constant 0 : i32
    return %c0_i32, %c0_i32_0 : i32, i32
  }
  func.func @transform_2(%arg0: i32) -> (i32, i32) {
    %c0_i32 = arith.constant 0 : i32
    %c0_i32_0 = arith.constant 0 : i32
    %c0_i32_1 = arith.constant 0 : i32
    return %c0_i32, %c0_i32_0 : i32, i32
  }
  func.func @transform_3(%arg0: i32) -> (i32, i32) {
    %c0_i32 = arith.constant 0 : i32
    %c0_i32_0 = arith.constant 0 : i32
    %c0_i32_1 = arith.constant 0 : i32
    return %c0_i32, %c0_i32_0 : i32, i32
  }
  func.func @transform_4(%arg0: i32) -> (i32, i32) {
    %c0_i32 = arith.constant 0 : i32
    %c0_i32_0 = arith.constant 0 : i32
    %c0_i32_1 = arith.constant 0 : i32
    return %c0_i32, %c0_i32_0 : i32, i32
  }
  func.func @transform_5(%arg0: i32) -> (i32, i32) {
    %c0_i32 = arith.constant 0 : i32
    %c0_i32_0 = arith.constant 0 : i32
    return %c0_i32, %arg0 : i32, i32
  }
}

</mosaic_0001>

<llo_original>
// kernel: tpu_custom_call.1
$region0: #{tpu_custom_call.1}
  #allocation0 [shape = 'u32[]', space=smem, size = 0x4, offset = 0x4, fixed_abs, tag = 'smem constant byte address 0x4 - core index']
  #allocation1 [shape = 'u32[144,128]{1,0:T(1,128)}', space=vmem, size = 0x12000, scoped, tag = 'internal scratch']
  #allocation2 [shape = 'f32[1,1]{1,0:T(1,128)S(1)}', space=vmem, size = 0x200, scoped, tag = 'scoped memory for tpu_custom_call.1']
  %s0 = inlined_call_operand.hbm [shape: f32[300,1024], index: 0, kind: input, shape index: {}]
  %s1 = inlined_call_operand.hbm [shape: bf16[1024,256], index: 1, kind: input, shape index: {}]
  %s2 = inlined_call_operand.hbm [shape: f32[1,256], index: 2, kind: input, shape index: {}]
  %s3 = inlined_call_operand.hbm [shape: f32[1,256], index: 3, kind: input, shape index: {}]
  %s4 = inlined_call_operand.<no memory space> [shape: f32[1,1], index: 4, kind: input, shape index: {}]
  %s5 = inlined_call_operand.hbm [shape: f32[1,300], index: 5, kind: output, shape index: {}]
  %s6 = sld [smem:[#allocation0]]
  $region69: #{tpu_custom_call.1} parent=0
    _
  %s8 = ssub.s32 1, %s6
  %s9 = scalar_select 0, %s8, %s6
  %v10 = vstv %s4
  %11 = vst [vmem:[#allocation2] sm:$0x1] %v10
  $region1: #{tpu_custom_call.1} parent=0
    #allocation3 [shape = 'u8[2097152]{0}', space=vmem, size = 0x200000, scoped, tag = 'input window, operand 0']
    #allocation4 [shape = 's32[2]{0}', space=sflag, size = 0x8, scoped, tag = 'scoped memory for tpu_custom_call.1']
    #allocation5 [shape = 's32[2]{0}', space=sflag, size = 0x8, scoped, tag = 'scoped memory for tpu_custom_call.1']
    #allocation6 [shape = 'u8[524288]{0}', space=vmem, size = 0x80000, scoped, tag = 'input window, operand 1, single buffered']
    #allocation7 [shape = 's32[1]{0}', space=sflag, size = 0x4, scoped, tag = 'scoped memory for tpu_custom_call.1']
    #allocation8 [shape = 'u8[1024]{0}', space=vmem, size = 0x400, scoped, tag = 'input window, operand 2, single buffered']
    #allocation9 [shape = 'u8[1024]{0}', space=vmem, size = 0x400, scoped, tag = 'input window, operand 3, single buffered']
    #allocation10 [shape = 's32[1]{0}', space=sflag, size = 0x4, scoped, tag = 'scoped memory for tpu_custom_call.1']
    #allocation11 [shape = 'u8[2048]{0}', space=vmem, size = 0x800, scoped, tag = 'output window, operand 0']
    %12 = vsyncpa [#allocation4], 0
    %s13 = scalar_lea.sflag [#allocation4], 1
    %14 = vsyncpa %s13, 0
    %15 = vsyncpa [#allocation7], 0
    %16 = vsyncpa [#allocation10], 0
    %17 = vsyncpa [#allocation5], 0
    %s18 = scalar_lea.sflag [#allocation5], 1
    %19 = vsyncpa %s18, 0
    loop: start=0, step=1, limit=4
    $region2: #{tpu_custom_call.1} parent=1 // loop_pre_header
      _
    $region3: #{tpu_custom_call.1} parent=1 // loop_header
      %s21 = sphi 0, %s25
      %p22 = scmp.ge.s32.totalorder %s21, 4
      %s31 = sphi 0, %s33
      %s34 = sphi 0, %s31
      %s35 = sphi 0, %s34
      %s51 = sphi 0, %s35
      %s55 = sphi 0, %s55
      %s57 = sphi 0, %s55
      %s58 = sphi 0, %s57
      %s72 = sphi 0, %s58
      %s76 = sphi 0, %s76
      %s78 = sphi 0, %s76
      %s79 = sphi 0, %s78
      %s93 = sphi 0, %s79
      %s97 = sphi 0, %s97
      %s99 = sphi 0, %s97
      %s100 = sphi 0, %s99
      %s114 = sphi 0, %s100
      %s118 = sphi 0, %s118
      %s120 = sphi 0, %s118
      %s121 = sphi 0, %s120
      %s135 = sphi 0, %s121
      %s141 = sphi 0, %s143
      %s144 = sphi 0, %s141
      %s145 = sphi 0, %s144
      %s161 = sphi 0, %s145
    $region4: #{tpu_custom_call.1} parent=1 // loop_header_branch
      %24 = sbr.rel (%p22) target = $region8
    $region5: #{tpu_custom_call.1} parent=1 // loop_body
      %s26 = ssub.s32 %s21, 1
      %s27 = ssub.s32 %s21, 2
      %s28 = sadd.s32 %s21, 1
      %s29 = ssub.s32 %s21, %s28
      %p30 = scmp.eq.s32.totalorder %s29, 0
      %s32 = sadd.s32 %s31, 1
      %s33 = scalar_select %p30, %s31, %s32
      %p36 = pneg %p30
      %p37 = scmp.eq.s32.totalorder %s21, 1
      %p38 = por %p36, %p37
      %p39 = scmp.ne.s32.totalorder %s31, %s34
      %p40 = scmp.eq.s32.totalorder %s21, 0
      %p41 = por %p39, %p40
      %p42 = scmp.ne.s32.totalorder %s31, %s34
      %p43 = scmp.eq.s32.totalorder %s26, 1
      %p44 = por %p42, %p43
      %p45 = scmp.ne.s32.totalorder %s34, %s35
      %p46 = scmp.eq.s32.totalorder %s26, 0
      %p47 = por %p45, %p46
      %p48 = scmp.ne.s32.totalorder %s34, %s35
      %p49 = scmp.eq.s32.totalorder %s27, 1
      %p50 = por %p48, %p49
      %p52 = scmp.ne.s32.totalorder %s35, %s51
      %p53 = scmp.eq.s32.totalorder %s27, 0
      %p54 = por %p52, %p53
      %s56 = sadd.s32 %s55, 1
      %p59 = scmp.eq.s32.totalorder %s21, 1
      %p60 = scmp.ne.s32.totalorder %s55, %s57
      %p61 = scmp.eq.s32.totalorder %s21, 0
      %p62 = por %p60, %p61
      %p63 = scmp.ne.s32.totalorder %s55, %s57
      %p64 = scmp.eq.s32.totalorder %s26, 1
      %p65 = por %p63, %p64
      %p66 = scmp.ne.s32.totalorder %s57, %s58
      %p67 = scmp.eq.s32.totalorder %s26, 0
      %p68 = por %p66, %p67
      %p69 = scmp.ne.s32.totalorder %s57, %s58
      %p70 = scmp.eq.s32.totalorder %s27, 1
      %p71 = por %p69, %p70
      %p73 = scmp.ne.s32.totalorder %s58, %s72
      %p74 = scmp.eq.s32.totalorder %s27, 0
      %p75 = por %p73, %p74
      %s77 = sadd.s32 %s76, 1
      %p80 = scmp.eq.s32.totalorder %s21, 1
      %p81 = scmp.ne.s32.totalorder %s76, %s78
      %p82 = scmp.eq.s32.totalorder %s21, 0
      %p83 = por %p81, %p82
      %p84 = scmp.ne.s32.totalorder %s76, %s78
      %p85 = scmp.eq.s32.totalorder %s26, 1
      %p86 = por %p84, %p85
      %p87 = scmp.ne.s32.totalorder %s78, %s79
      %p88 = scmp.eq.s32.totalorder %s26, 0
      %p89 = por %p87, %p88
      %p90 = scmp.ne.s32.totalorder %s78, %s79
      %p91 = scmp.eq.s32.totalorder %s27, 1
      %p92 = por %p90, %p91
      %p94 = scmp.ne.s32.totalorder %s79, %s93
      %p95 = scmp.eq.s32.totalorder %s27, 0
      %p96 = por %p94, %p95
      %s98 = sadd.s32 %s97, 1
      %p101 = scmp.eq.s32.totalorder %s21, 1
      %p102 = scmp.ne.s32.totalorder %s97, %s99
      %p103 = scmp.eq.s32.totalorder %s21, 0
      %p104 = por %p102, %p103
      %p105 = scmp.ne.s32.totalorder %s97, %s99
      %p106 = scmp.eq.s32.totalorder %s26, 1
      %p107 = por %p105, %p106
      %p108 = scmp.ne.s32.totalorder %s99, %s100
      %p109 = scmp.eq.s32.totalorder %s26, 0
      %p110 = por %p108, %p109
      %p111 = scmp.ne.s32.totalorder %s99, %s100
      %p112 = scmp.eq.s32.totalorder %s27, 1
      %p113 = por %p111, %p112
      %p115 = scmp.ne.s32.totalorder %s100, %s114
      %p116 = scmp.eq.s32.totalorder %s27, 0
      %p117 = por %p115, %p116
      %s119 = sadd.s32 %s118, 1
      %p122 = scmp.eq.s32.totalorder %s21, 1
      %p123 = scmp.ne.s32.totalorder %s118, %s120
      %p124 = scmp.eq.s32.totalorder %s21, 0
      %p125 = por %p123, %p124
      %p126 = scmp.ne.s32.totalorder %s118, %s120
      %p127 = scmp.eq.s32.totalorder %s26, 1
      %p128 = por %p126, %p127
      %p129 = scmp.ne.s32.totalorder %s120, %s121
      %p130 = scmp.eq.s32.totalorder %s26, 0
      %p131 = por %p129, %p130
      %p132 = scmp.ne.s32.totalorder %s120, %s121
      %p133 = scmp.eq.s32.totalorder %s27, 1
      %p134 = por %p132, %p133
      %p136 = scmp.ne.s32.totalorder %s121, %s135
      %p137 = scmp.eq.s32.totalorder %s27, 0
      %p138 = por %p136, %p137
      %s139 = ssub.s32 %s21, %s28
      %p140 = scmp.eq.s32.totalorder %s139, 0
      %s142 = sadd.s32 %s141, 1
      %s143 = scalar_select %p140, %s141, %s142
      %p146 = pneg %p140
      %p147 = scmp.eq.s32.totalorder %s21, 1
      %p148 = por %p146, %p147
      %p149 = scmp.ne.s32.totalorder %s141, %s144
      %p150 = scmp.eq.s32.totalorder %s21, 0
      %p151 = por %p149, %p150
      %p152 = scmp.ne.s32.totalorder %s141, %s144
      %p153 = scmp.eq.s32.totalorder %s26, 1
      %p154 = por %p152, %p153
      %p155 = scmp.ne.s32.totalorder %s144, %s145
      %p156 = scmp.eq.s32.totalorder %s26, 0
      %p157 = por %p155, %p156
      %p158 = scmp.ne.s32.totalorder %s144, %s145
      %p159 = scmp.eq.s32.totalorder %s27, 1
      %p160 = por %p158, %p159
      %p162 = scmp.ne.s32.totalorder %s145, %s161
      %p163 = scmp.eq.s32.totalorder %s27, 0
      %p164 = por %p162, %p163
      %p165 = scmp.le.s32.totalorder 1, %s21
      %p166 = scmp.lt.s32.totalorder %s21, 3
      %p167 = pnand %p165, %p166
      %p168 = pneg %p167
      // Predicated region
      $region9: #{tpu_custom_call.1} parent=5 // pred_check
        _
      $region10: #{tpu_custom_call.1} parent=5 // pred_check_branch
        %170 = sbr.rel (%p167) target = $region12
      $region11: #{tpu_custom_call.1} parent=5 // pred_region
        %s171 = ssub.s32 %s21, 1
        // Predicated region
        $region13: #{tpu_custom_call.1} parent=11 // pred_check
          %p172 = pneg %p68
        $region14: #{tpu_custom_call.1} parent=11 // pred_check_branch
          %174 = sbr.rel (%p172) target = $region16
        $region15: #{tpu_custom_call.1} parent=11 // pred_region
          %s176 = ssub.s32 16384, 16384
          %177 = vsyncadd [#allocation7], %s176
          %s178 = sshll.u32 [#allocation6], 4
          %s179 = int_to_ptr.vmem [resolvable:$true] %s178
          %184 = dma.hbm_to_vmem [thread:$0]  %s1, 16384, %s179, [#allocation7], 128, 128, 8
        $region16: #{tpu_custom_call.1} parent=11 // pred_fallthru
          _
        // Predicated region
        $region17: #{tpu_custom_call.1} parent=11 // pred_check
          %p185 = pneg %p89
        $region18: #{tpu_custom_call.1} parent=11 // pred_check_branch
          %187 = sbr.rel (%p185) target = $region20
        $region19: #{tpu_custom_call.1} parent=11 // pred_region
          %s189 = ssub.s32 32, 32
          %190 = vsyncadd [#allocation7], %s189
          %s192 = sshll.u32 [#allocation8], 4
          %s193 = int_to_ptr.vmem [resolvable:$true] %s192
          %195 = dma.hbm_to_vmem [thread:$0]  %s2, 32, %s193, [#allocation7]
        $region20: #{tpu_custom_call.1} parent=11 // pred_fallthru
          _
        // Predicated region
        $region21: #{tpu_custom_call.1} parent=11 // pred_check
          %p196 = pneg %p110
        $region22: #{tpu_custom_call.1} parent=11 // pred_check_branch
          %198 = sbr.rel (%p196) target = $region24
        $region23: #{tpu_custom_call.1} parent=11 // pred_region
          %s200 = ssub.s32 32, 32
          %201 = vsyncadd [#allocation10], %s200
          %s203 = sshll.u32 [#allocation9], 4
          %s204 = int_to_ptr.vmem [resolvable:$true] %s203
          %206 = dma.hbm_to_vmem [thread:$0]  %s3, 32, %s204, [#allocation10]
        $region24: #{tpu_custom_call.1} parent=11 // pred_fallthru
          _
        // Predicated region
        $region25: #{tpu_custom_call.1} parent=11 // pred_check
          %p207 = pneg %p131
        $region26: #{tpu_custom_call.1} parent=11 // pred_check_branch
          %209 = sbr.rel (%p207) target = $region28
        $region27: #{tpu_custom_call.1} parent=11 // pred_region
          _
        $region28: #{tpu_custom_call.1} parent=11 // pred_fallthru
          _
      $region12: #{tpu_custom_call.1} parent=5 // pred_fallthru
        _
      %p210 = scmp.lt.s32.totalorder %s21, 2
      // Predicated region
      $region29: #{tpu_custom_call.1} parent=5 // pred_check
        %p211 = pneg %p210
      $region30: #{tpu_custom_call.1} parent=5 // pred_check_branch
        %213 = sbr.rel (%p211) target = $region32
      $region31: #{tpu_custom_call.1} parent=5 // pred_region
        // Predicated region
        $region33: #{tpu_custom_call.1} parent=31 // pred_check
          %p214 = pneg %p41
        $region34: #{tpu_custom_call.1} parent=31 // pred_check_branch
          %216 = sbr.rel (%p214) target = $region36
        $region35: #{tpu_custom_call.1} parent=31 // pred_region
          %s217 = sand.u32 %s31, 1
          %s218 = scalar_lea.sflag [#allocation4], %s217
          %s219 = sand.u32 %s31, 1
          %s220 = smul.addr %s219, 2048
          %s221 = scalar_lea.vmem [#allocation3], %s220
          %s222 = smul.u32 32, %s21
          %s223 = ssub.s32 38, %s222
          %p224 = scmp.lt.s32.totalorder %s223, 32
          %s225 = scalar_select %p224, %s223, 32
          %s226 = smul.u32 128, %s225
          %s227 = smul.u32 %s226, 8
          %s229 = ssub.s32 32768, %s227
          %230 = vsyncadd %s218, %s229
          %p231 = scmp.ne.s32.totalorder 0, %s227
          %s232 = smul.addr %s222, 8
          %s233 = smul.addr %s232, 128
          %s234 = scalar_lea.hbm %s0, %s233
          %s235 = smul.u32 64, %s225
          %s236 = sshll.u32 %s221, 4
          %s237 = int_to_ptr.vmem [resolvable:$true] %s236
          %s238 = sshll.u32 %s235, 4
          %242 = dma.hbm_to_vmem [thread:$0]  (%p231), %s234, %s238, %s237, %s218, 1024, 1024, 64
        $region36: #{tpu_custom_call.1} parent=31 // pred_fallthru
          _
      $region32: #{tpu_custom_call.1} parent=5 // pred_fallthru
        _
      %p243 = scmp.le.s32.totalorder 1, %s21
      %p244 = scmp.lt.s32.totalorder %s21, 3
      %p245 = pnand %p243, %p244
      %p246 = pneg %p245
      // Predicated region
      $region37: #{tpu_custom_call.1} parent=5 // pred_check
        _
      $region38: #{tpu_custom_call.1} parent=5 // pred_check_branch
        %248 = sbr.rel (%p245) target = $region40
      $region39: #{tpu_custom_call.1} parent=5 // pred_region
        %s249 = ssub.s32 %s21, 1
        %s250 = sand.u32 %s34, 1
        %s251 = scalar_lea.sflag [#allocation4], %s250
        %s252 = sand.u32 %s34, 1
        %s253 = smul.addr %s252, 2048
        %s254 = scalar_lea.vmem [#allocation3], %s253
        // Predicated region
        $region41: #{tpu_custom_call.1} parent=39 // pred_check
          %p255 = pneg %p47
        $region42: #{tpu_custom_call.1} parent=39 // pred_check_branch
          %257 = sbr.rel (%p255) target = $region44
        $region43: #{tpu_custom_call.1} parent=39 // pred_region
          %258 = dma.done %s251, 32768
        $region44: #{tpu_custom_call.1} parent=39 // pred_fallthru
          _
        // Predicated region
        $region45: #{tpu_custom_call.1} parent=39 // pred_check
          %p259 = pneg %p68
        $region46: #{tpu_custom_call.1} parent=39 // pred_check_branch
          %261 = sbr.rel (%p259) target = $region48
        $region47: #{tpu_custom_call.1} parent=39 // pred_region
          %262 = dma.done [#allocation7], 16384
        $region48: #{tpu_custom_call.1} parent=39 // pred_fallthru
          _
        // Predicated region
        $region49: #{tpu_custom_call.1} parent=39 // pred_check
          %p263 = pneg %p89
        $region50: #{tpu_custom_call.1} parent=39 // pred_check_branch
          %265 = sbr.rel (%p263) target = $region52
        $region51: #{tpu_custom_call.1} parent=39 // pred_region
          %266 = dma.done [#allocation7], 32
        $region52: #{tpu_custom_call.1} parent=39 // pred_fallthru
          _
        // Predicated region
        $region53: #{tpu_custom_call.1} parent=39 // pred_check
          %p267 = pneg %p110
        $region54: #{tpu_custom_call.1} parent=39 // pred_check_branch
          %269 = sbr.rel (%p267) target = $region56
        $region55: #{tpu_custom_call.1} parent=39 // pred_region
          %270 = dma.done [#allocation10], 32
        $region56: #{tpu_custom_call.1} parent=39 // pred_fallthru
          _
        %s271 = sand.u32 %s34, 1
        %s272 = scalar_lea.sflag [#allocation4], %s271
        %s273 = sand.u32 %s34, 1
        %s274 = smul.addr %s273, 2048
        %s275 = scalar_lea.vmem [#allocation3], %s274
        %p276 = pneg %p47
        %p277 = pneg %p44
        %p278 = pneg %p68
        %p279 = pneg %p65
        %p280 = pneg %p89
        %p281 = pneg %p86
        %p282 = pneg %p110
        %p283 = pneg %p107
        %p284 = pneg %p131
        %p285 = pneg %p128
        %p286 = pneg %p157
        %p287 = pneg %p154
        %s288 = sand.u32 %s144, 1
        %s289 = scalar_lea.sflag [#allocation5], %s288
        %s290 = sand.u32 %s144, 1
        %s291 = smul.addr %s290, 2
        %s292 = scalar_lea.vmem [#allocation11], %s291
        %s293 = smul.u32 32, %s26
        %s294 = ssub.s32 38, %s293
        %p295 = scmp.lt.s32.totalorder %s294, 32
        %s296 = scalar_select %p295, %s294, 32
        %s297 = smul.u32 128, %s296
        %s298 = smul.u32 %s297, 8
        %s299 = smul.u32 2, %s26
        %s300 = ssub.s32 3, %s299
        %p301 = scmp.lt.s32.totalorder %s300, 2
        %s302 = scalar_select %p301, %s300, 2
        %s303 = smul.u32 16, %s302
        %v304 = vld [vmem:[%s254] sm:$0xff]
        %v305 = vld [vmem:[%s254 + $0x8] sm:$0xff]
        %v306 = vld [vmem:[%s254 + $0x10] sm:$0xff]
        %v307 = vld [vmem:[%s254 + $0x18] sm:$0xff]
        %v308 = vld [vmem:[%s254 + $0x20] sm:$0xff]
        %v309 = vld [vmem:[%s254 + $0x28] sm:$0xff]
        %v310 = vld [vmem:[%s254 + $0x30] sm:$0xff]
        %v311 = vld [vmem:[%s254 + $0x38] sm:$0xff]
        %v312 = vld [vmem:[%s254 + $0x40] sm:$0xff]
        %v313 = vld [vmem:[%s254 + $0x48] sm:$0xff]
        %v314 = vld [vmem:[%s254 + $0x50] sm:$0xff]
        %v315 = vld [vmem:[%s254 + $0x58] sm:$0xff]
        %v316 = vld [vmem:[%s254 + $0x60] sm:$0xff]
        %v317 = vld [vmem:[%s254 + $0x68] sm:$0xff]
        %v318 = vld [vmem:[%s254 + $0x70] sm:$0xff]
        %v319 = vld [vmem:[%s254 + $0x78] sm:$0xff]
        %v320 = vld [vmem:[%s254 + $0x80] sm:$0xff]
        %v321 = vld [vmem:[%s254 + $0x88] sm:$0xff]
        %v322 = vld [vmem:[%s254 + $0x90] sm:$0xff]
        %v323 = vld [vmem:[%s254 + $0x98] sm:$0xff]
        %v324 = vld [vmem:[%s254 + $0xa0] sm:$0xff]
        %v325 = vld [vmem:[%s254 + $0xa8] sm:$0xff]
        %v326 = vld [vmem:[%s254 + $0xb0] sm:$0xff]
        %v327 = vld [vmem:[%s254 + $0xb8] sm:$0xff]
        %v328 = vld [vmem:[%s254 + $0xc0] sm:$0xff]
        %v329 = vld [vmem:[%s254 + $0xc8] sm:$0xff]
        %v330 = vld [vmem:[%s254 + $0xd0] sm:$0xff]
        %v331 = vld [vmem:[%s254 + $0xd8] sm:$0xff]
        %v332 = vld [vmem:[%s254 + $0xe0] sm:$0xff]
        %v333 = vld [vmem:[%s254 + $0xe8] sm:$0xff]
        %v334 = vld [vmem:[%s254 + $0xf0] sm:$0xff]
        %v335 = vld [vmem:[%s254 + $0xf8] sm:$0xff]
        %v336 = vld [vmem:[%s254 + $0x100] sm:$0xff]
        %v337 = vld [vmem:[%s254 + $0x108] sm:$0xff]
        %v338 = vld [vmem:[%s254 + $0x110] sm:$0xff]
        %v339 = vld [vmem:[%s254 + $0x118] sm:$0xff]
        %v340 = vld [vmem:[%s254 + $0x120] sm:$0xff]
        %v341 = vld [vmem:[%s254 + $0x128] sm:$0xff]
        %v342 = vld [vmem:[%s254 + $0x130] sm:$0xff]
        %v343 = vld [vmem:[%s254 + $0x138] sm:$0xff]
        %v344 = vld [vmem:[%s254 + $0x140] sm:$0xff]
        %v345 = vld [vmem:[%s254 + $0x148] sm:$0xff]
        %v346 = vld [vmem:[%s254 + $0x150] sm:$0xff]
        %v347 = vld [vmem:[%s254 + $0x158] sm:$0xff]
        %v348 = vld [vmem:[%s254 + $0x160] sm:$0xff]
        %v349 = vld [vmem:[%s254 + $0x168] sm:$0xff]
        %v350 = vld [vmem:[%s254 + $0x170] sm:$0xff]
        %v351 = vld [vmem:[%s254 + $0x178] sm:$0xff]
        %v352 = vld [vmem:[%s254 + $0x180] sm:$0xff]
        %v353 = vld [vmem:[%s254 + $0x188] sm:$0xff]
        %v354 = vld [vmem:[%s254 + $0x190] sm:$0xff]
        %v355 = vld [vmem:[%s254 + $0x198] sm:$0xff]
        %v356 = vld [vmem:[%s254 + $0x1a0] sm:$0xff]
        %v357 = vld [vmem:[%s254 + $0x1a8] sm:$0xff]
        %v358 = vld [vmem:[%s254 + $0x1b0] sm:$0xff]
        %v359 = vld [vmem:[%s254 + $0x1b8] sm:$0xff]
        %v360 = vld [vmem:[%s254 + $0x1c0] sm:$0xff]
        %v361 = vld [vmem:[%s254 + $0x1c8] sm:$0xff]
        %v362 = vld [vmem:[%s254 + $0x1d0] sm:$0xff]
        %v363 = vld [vmem:[%s254 + $0x1d8] sm:$0xff]
        %v364 = vld [vmem:[%s254 + $0x1e0] sm:$0xff]
        %v365 = vld [vmem:[%s254 + $0x1e8] sm:$0xff]
        %v366 = vld [vmem:[%s254 + $0x1f0] sm:$0xff]
        %v367 = vld [vmem:[%s254 + $0x1f8] sm:$0xff]
        %v368 = vld [vmem:[%s254 + $0x200] sm:$0xff]
        %v369 = vld [vmem:[%s254 + $0x208] sm:$0xff]
        %v370 = vld [vmem:[%s254 + $0x210] sm:$0xff]
        %v371 = vld [vmem:[%s254 + $0x218] sm:$0xff]
        %v372 = vld [vmem:[%s254 + $0x220] sm:$0xff]
        %v373 = vld [vmem:[%s254 + $0x228] sm:$0xff]
        %v374 = vld [vmem:[%s254 + $0x230] sm:$0xff]
        %v375 = vld [vmem:[%s254 + $0x238] sm:$0xff]
        %v376 = vld [vmem:[%s254 + $0x240] sm:$0xff]
        %v377 = vld [vmem:[%s254 + $0x248] sm:$0xff]
        %v378 = vld [vmem:[%s254 + $0x250] sm:$0xff]
        %v379 = vld [vmem:[%s254 + $0x258] sm:$0xff]
        %v380 = vld [vmem:[%s254 + $0x260] sm:$0xff]
        %v381 = vld [vmem:[%s254 + $0x268] sm:$0xff]
        %v382 = vld [vmem:[%s254 + $0x270] sm:$0xff]
        %v383 = vld [vmem:[%s254 + $0x278] sm:$0xff]
        %v384 = vld [vmem:[%s254 + $0x280] sm:$0xff]
        %v385 = vld [vmem:[%s254 + $0x288] sm:$0xff]
        %v386 = vld [vmem:[%s254 + $0x290] sm:$0xff]
        %v387 = vld [vmem:[%s254 + $0x298] sm:$0xff]
        %v388 = vld [vmem:[%s254 + $0x2a0] sm:$0xff]
        %v389 = vld [vmem:[%s254 + $0x2a8] sm:$0xff]
        %v390 = vld [vmem:[%s254 + $0x2b0] sm:$0xff]
        %v391 = vld [vmem:[%s254 + $0x2b8] sm:$0xff]
        %v392 = vld [vmem:[%s254 + $0x2c0] sm:$0xff]
        %v393 = vld [vmem:[%s254 + $0x2c8] sm:$0xff]
        %v394 = vld [vmem:[%s254 + $0x2d0] sm:$0xff]
        %v395 = vld [vmem:[%s254 + $0x2d8] sm:$0xff]
        %v396 = vld [vmem:[%s254 + $0x2e0] sm:$0xff]
        %v397 = vld [vmem:[%s254 + $0x2e8] sm:$0xff]
        %v398 = vld [vmem:[%s254 + $0x2f0] sm:$0xff]
        %v399 = vld [vmem:[%s254 + $0x2f8] sm:$0xff]
        %v400 = vld [vmem:[%s254 + $0x300] sm:$0xff]
        %v401 = vld [vmem:[%s254 + $0x308] sm:$0xff]
        %v402 = vld [vmem:[%s254 + $0x310] sm:$0xff]
        %v403 = vld [vmem:[%s254 + $0x318] sm:$0xff]
        %v404 = vld [vmem:[%s254 + $0x320] sm:$0xff]
        %v405 = vld [vmem:[%s254 + $0x328] sm:$0xff]
        %v406 = vld [vmem:[%s254 + $0x330] sm:$0xff]
        %v407 = vld [vmem:[%s254 + $0x338] sm:$0xff]
        %v408 = vld [vmem:[%s254 + $0x340] sm:$0xff]
        %v409 = vld [vmem:[%s254 + $0x348] sm:$0xff]
        %v410 = vld [vmem:[%s254 + $0x350] sm:$0xff]
        %v411 = vld [vmem:[%s254 + $0x358] sm:$0xff]
        %v412 = vld [vmem:[%s254 + $0x360] sm:$0xff]
        %v413 = vld [vmem:[%s254 + $0x368] sm:$0xff]
        %v414 = vld [vmem:[%s254 + $0x370] sm:$0xff]
        %v415 = vld [vmem:[%s254 + $0x378] sm:$0xff]
        %v416 = vld [vmem:[%s254 + $0x380] sm:$0xff]
        %v417 = vld [vmem:[%s254 + $0x388] sm:$0xff]
        %v418 = vld [vmem:[%s254 + $0x390] sm:$0xff]
        %v419 = vld [vmem:[%s254 + $0x398] sm:$0xff]
        %v420 = vld [vmem:[%s254 + $0x3a0] sm:$0xff]
        %v421 = vld [vmem:[%s254 + $0x3a8] sm:$0xff]
        %v422 = vld [vmem:[%s254 + $0x3b0] sm:$0xff]
        %v423 = vld [vmem:[%s254 + $0x3b8] sm:$0xff]
        %v424 = vld [vmem:[%s254 + $0x3c0] sm:$0xff]
        %v425 = vld [vmem:[%s254 + $0x3c8] sm:$0xff]
        %v426 = vld [vmem:[%s254 + $0x3d0] sm:$0xff]
        %v427 = vld [vmem:[%s254 + $0x3d8] sm:$0xff]
        %v428 = vld [vmem:[%s254 + $0x3e0] sm:$0xff]
        %v429 = vld [vmem:[%s254 + $0x3e8] sm:$0xff]
        %v430 = vld [vmem:[%s254 + $0x3f0] sm:$0xff]
        %v431 = vld [vmem:[%s254 + $0x3f8] sm:$0xff]
        %v432 = vld [vmem:[%s254 + $0x400] sm:$0xff]
        %v433 = vld [vmem:[%s254 + $0x408] sm:$0xff]
        %v434 = vld [vmem:[%s254 + $0x410] sm:$0xff]
        %v435 = vld [vmem:[%s254 + $0x418] sm:$0xff]
        %v436 = vld [vmem:[%s254 + $0x420] sm:$0xff]
        %v437 = vld [vmem:[%s254 + $0x428] sm:$0xff]
        %v438 = vld [vmem:[%s254 + $0x430] sm:$0xff]
        %v439 = vld [vmem:[%s254 + $0x438] sm:$0xff]
        %v440 = vld [vmem:[%s254 + $0x440] sm:$0xff]
        %v441 = vld [vmem:[%s254 + $0x448] sm:$0xff]
        %v442 = vld [vmem:[%s254 + $0x450] sm:$0xff]
        %v443 = vld [vmem:[%s254 + $0x458] sm:$0xff]
        %v444 = vld [vmem:[%s254 + $0x460] sm:$0xff]
        %v445 = vld [vmem:[%s254 + $0x468] sm:$0xff]
        %v446 = vld [vmem:[%s254 + $0x470] sm:$0xff]
        %v447 = vld [vmem:[%s254 + $0x478] sm:$0xff]
        %v448 = vld [vmem:[%s254 + $0x480] sm:$0xff]
        %v449 = vld [vmem:[%s254 + $0x488] sm:$0xff]
        %v450 = vld [vmem:[%s254 + $0x490] sm:$0xff]
        %v451 = vld [vmem:[%s254 + $0x498] sm:$0xff]
        %v452 = vld [vmem:[%s254 + $0x4a0] sm:$0xff]
        %v453 = vld [vmem:[%s254 + $0x4a8] sm:$0xff]
        %v454 = vld [vmem:[%s254 + $0x4b0] sm:$0xff]
        %v455 = vld [vmem:[%s254 + $0x4b8] sm:$0xff]
        %v456 = vld [vmem:[%s254 + $0x4c0] sm:$0xff]
        %v457 = vld [vmem:[%s254 + $0x4c8] sm:$0xff]
        %v458 = vld [vmem:[%s254 + $0x4d0] sm:$0xff]
        %v459 = vld [vmem:[%s254 + $0x4d8] sm:$0xff]
        %v460 = vld [vmem:[%s254 + $0x4e0] sm:$0xff]
        %v461 = vld [vmem:[%s254 + $0x4e8] sm:$0xff]
        %v462 = vld [vmem:[%s254 + $0x4f0] sm:$0xff]
        %v463 = vld [vmem:[%s254 + $0x4f8] sm:$0xff]
        %v464 = vld [vmem:[%s254 + $0x500] sm:$0xff]
        %v465 = vld [vmem:[%s254 + $0x508] sm:$0xff]
        %v466 = vld [vmem:[%s254 + $0x510] sm:$0xff]
        %v467 = vld [vmem:[%s254 + $0x518] sm:$0xff]
        %v468 = vld [vmem:[%s254 + $0x520] sm:$0xff]
        %v469 = vld [vmem:[%s254 + $0x528] sm:$0xff]
        %v470 = vld [vmem:[%s254 + $0x530] sm:$0xff]
        %v471 = vld [vmem:[%s254 + $0x538] sm:$0xff]
        %v472 = vld [vmem:[%s254 + $0x540] sm:$0xff]
        %v473 = vld [vmem:[%s254 + $0x548] sm:$0xff]
        %v474 = vld [vmem:[%s254 + $0x550] sm:$0xff]
        %v475 = vld [vmem:[%s254 + $0x558] sm:$0xff]
        %v476 = vld [vmem:[%s254 + $0x560] sm:$0xff]
        %v477 = vld [vmem:[%s254 + $0x568] sm:$0xff]
        %v478 = vld [vmem:[%s254 + $0x570] sm:$0xff]
        %v479 = vld [vmem:[%s254 + $0x578] sm:$0xff]
        %v480 = vld [vmem:[%s254 + $0x580] sm:$0xff]
        %v481 = vld [vmem:[%s254 + $0x588] sm:$0xff]
        %v482 = vld [vmem:[%s254 + $0x590] sm:$0xff]
        %v483 = vld [vmem:[%s254 + $0x598] sm:$0xff]
        %v484 = vld [vmem:[%s254 + $0x5a0] sm:$0xff]
        %v485 = vld [vmem:[%s254 + $0x5a8] sm:$0xff]
        %v486 = vld [vmem:[%s254 + $0x5b0] sm:$0xff]
        %v487 = vld [vmem:[%s254 + $0x5b8] sm:$0xff]
        %v488 = vld [vmem:[%s254 + $0x5c0] sm:$0xff]
        %v489 = vld [vmem:[%s254 + $0x5c8] sm:$0xff]
        %v490 = vld [vmem:[%s254 + $0x5d0] sm:$0xff]
        %v491 = vld [vmem:[%s254 + $0x5d8] sm:$0xff]
        %v492 = vld [vmem:[%s254 + $0x5e0] sm:$0xff]
        %v493 = vld [vmem:[%s254 + $0x5e8] sm:$0xff]
        %v494 = vld [vmem:[%s254 + $0x5f0] sm:$0xff]
        %v495 = vld [vmem:[%s254 + $0x5f8] sm:$0xff]
        %v496 = vld [vmem:[%s254 + $0x600] sm:$0xff]
        %v497 = vld [vmem:[%s254 + $0x608] sm:$0xff]
        %v498 = vld [vmem:[%s254 + $0x610] sm:$0xff]
        %v499 = vld [vmem:[%s254 + $0x618] sm:$0xff]
        %v500 = vld [vmem:[%s254 + $0x620] sm:$0xff]
        %v501 = vld [vmem:[%s254 + $0x628] sm:$0xff]
        %v502 = vld [vmem:[%s254 + $0x630] sm:$0xff]
        %v503 = vld [vmem:[%s254 + $0x638] sm:$0xff]
        %v504 = vld [vmem:[%s254 + $0x640] sm:$0xff]
        %v505 = vld [vmem:[%s254 + $0x648] sm:$0xff]
        %v506 = vld [vmem:[%s254 + $0x650] sm:$0xff]
        %v507 = vld [vmem:[%s254 + $0x658] sm:$0xff]
        %v508 = vld [vmem:[%s254 + $0x660] sm:$0xff]
        %v509 = vld [vmem:[%s254 + $0x668] sm:$0xff]
        %v510 = vld [vmem:[%s254 + $0x670] sm:$0xff]
        %v511 = vld [vmem:[%s254 + $0x678] sm:$0xff]
        %v512 = vld [vmem:[%s254 + $0x680] sm:$0xff]
        %v513 = vld [vmem:[%s254 + $0x688] sm:$0xff]
        %v514 = vld [vmem:[%s254 + $0x690] sm:$0xff]
        %v515 = vld [vmem:[%s254 + $0x698] sm:$0xff]
        %v516 = vld [vmem:[%s254 + $0x6a0] sm:$0xff]
        %v517 = vld [vmem:[%s254 + $0x6a8] sm:$0xff]
        %v518 = vld [vmem:[%s254 + $0x6b0] sm:$0xff]
        %v519 = vld [vmem:[%s254 + $0x6b8] sm:$0xff]
        %v520 = vld [vmem:[%s254 + $0x6c0] sm:$0xff]
        %v521 = vld [vmem:[%s254 + $0x6c8] sm:$0xff]
        %v522 = vld [vmem:[%s254 + $0x6d0] sm:$0xff]
        %v523 = vld [vmem:[%s254 + $0x6d8] sm:$0xff]
        %v524 = vld [vmem:[%s254 + $0x6e0] sm:$0xff]
        %v525 = vld [vmem:[%s254 + $0x6e8] sm:$0xff]
        %v526 = vld [vmem:[%s254 + $0x6f0] sm:$0xff]
        %v527 = vld [vmem:[%s254 + $0x6f8] sm:$0xff]
        %v528 = vld [vmem:[%s254 + $0x700] sm:$0xff]
        %v529 = vld [vmem:[%s254 + $0x708] sm:$0xff]
        %v530 = vld [vmem:[%s254 + $0x710] sm:$0xff]
        %v531 = vld [vmem:[%s254 + $0x718] sm:$0xff]
        %v532 = vld [vmem:[%s254 + $0x720] sm:$0xff]
        %v533 = vld [vmem:[%s254 + $0x728] sm:$0xff]
        %v534 = vld [vmem:[%s254 + $0x730] sm:$0xff]
        %v535 = vld [vmem:[%s254 + $0x738] sm:$0xff]
        %v536 = vld [vmem:[%s254 + $0x740] sm:$0xff]
        %v537 = vld [vmem:[%s254 + $0x748] sm:$0xff]
        %v538 = vld [vmem:[%s254 + $0x750] sm:$0xff]
        %v539 = vld [vmem:[%s254 + $0x758] sm:$0xff]
        %v540 = vld [vmem:[%s254 + $0x760] sm:$0xff]
        %v541 = vld [vmem:[%s254 + $0x768] sm:$0xff]
        %v542 = vld [vmem:[%s254 + $0x770] sm:$0xff]
        %v543 = vld [vmem:[%s254 + $0x778] sm:$0xff]
        %v544 = vld [vmem:[%s254 + $0x780] sm:$0xff]
        %v545 = vld [vmem:[%s254 + $0x788] sm:$0xff]
        %v546 = vld [vmem:[%s254 + $0x790] sm:$0xff]
        %v547 = vld [vmem:[%s254 + $0x798] sm:$0xff]
        %v548 = vld [vmem:[%s254 + $0x7a0] sm:$0xff]
        %v549 = vld [vmem:[%s254 + $0x7a8] sm:$0xff]
        %v550 = vld [vmem:[%s254 + $0x7b0] sm:$0xff]
        %v551 = vld [vmem:[%s254 + $0x7b8] sm:$0xff]
        %v552 = vld [vmem:[%s254 + $0x7c0] sm:$0xff]
        %v553 = vld [vmem:[%s254 + $0x7c8] sm:$0xff]
        %v554 = vld [vmem:[%s254 + $0x7d0] sm:$0xff]
        %v555 = vld [vmem:[%s254 + $0x7d8] sm:$0xff]
        %v556 = vld [vmem:[%s254 + $0x7e0] sm:$0xff]
        %v557 = vld [vmem:[%s254 + $0x7e8] sm:$0xff]
        %v558 = vld [vmem:[%s254 + $0x7f0] sm:$0xff]
        %v559 = vld [vmem:[%s254 + $0x7f8] sm:$0xff]
        %v560 = vpack.c.bf16 %v312, %v304
        %v561 = vpack.c.bf16 %v313, %v305
        %v562 = vpack.c.bf16 %v314, %v306
        %v563 = vpack.c.bf16 %v315, %v307
        %v564 = vpack.c.bf16 %v316, %v308
        %v565 = vpack.c.bf16 %v317, %v309
        %v566 = vpack.c.bf16 %v318, %v310
        %v567 = vpack.c.bf16 %v319, %v311
        %v568 = vpack.c.bf16 %v328, %v320
        %v569 = vpack.c.bf16 %v329, %v321
        %v570 = vpack.c.bf16 %v330, %v322
        %v571 = vpack.c.bf16 %v331, %v323
        %v572 = vpack.c.bf16 %v332, %v324
        %v573 = vpack.c.bf16 %v333, %v325
        %v574 = vpack.c.bf16 %v334, %v326
        %v575 = vpack.c.bf16 %v335, %v327
        %v576 = vpack.c.bf16 %v344, %v336
        %v577 = vpack.c.bf16 %v345, %v337
        %v578 = vpack.c.bf16 %v346, %v338
        %v579 = vpack.c.bf16 %v347, %v339
        %v580 = vpack.c.bf16 %v348, %v340
        %v581 = vpack.c.bf16 %v349, %v341
        %v582 = vpack.c.bf16 %v350, %v342
        %v583 = vpack.c.bf16 %v351, %v343
        %v584 = vpack.c.bf16 %v360, %v352
        %v585 = vpack.c.bf16 %v361, %v353
        %v586 = vpack.c.bf16 %v362, %v354
        %v587 = vpack.c.bf16 %v363, %v355
        %v588 = vpack.c.bf16 %v364, %v356
        %v589 = vpack.c.bf16 %v365, %v357
        %v590 = vpack.c.bf16 %v366, %v358
        %v591 = vpack.c.bf16 %v367, %v359
        %v592 = vpack.c.bf16 %v376, %v368
        %v593 = vpack.c.bf16 %v377, %v369
        %v594 = vpack.c.bf16 %v378, %v370
        %v595 = vpack.c.bf16 %v379, %v371
        %v596 = vpack.c.bf16 %v380, %v372
        %v597 = vpack.c.bf16 %v381, %v373
        %v598 = vpack.c.bf16 %v382, %v374
        %v599 = vpack.c.bf16 %v383, %v375
        %v600 = vpack.c.bf16 %v392, %v384
        %v601 = vpack.c.bf16 %v393, %v385
        %v602 = vpack.c.bf16 %v394, %v386
        %v603 = vpack.c.bf16 %v395, %v387
        %v604 = vpack.c.bf16 %v396, %v388
        %v605 = vpack.c.bf16 %v397, %v389
        %v606 = vpack.c.bf16 %v398, %v390
        %v607 = vpack.c.bf16 %v399, %v391
        %v608 = vpack.c.bf16 %v408, %v400
        %v609 = vpack.c.bf16 %v409, %v401
        %v610 = vpack.c.bf16 %v410, %v402
        %v611 = vpack.c.bf16 %v411, %v403
        %v612 = vpack.c.bf16 %v412, %v404
        %v613 = vpack.c.bf16 %v413, %v405
        %v614 = vpack.c.bf16 %v414, %v406
        %v615 = vpack.c.bf16 %v415, %v407
        %v616 = vpack.c.bf16 %v424, %v416
        %v617 = vpack.c.bf16 %v425, %v417
        %v618 = vpack.c.bf16 %v426, %v418
        %v619 = vpack.c.bf16 %v427, %v419
        %v620 = vpack.c.bf16 %v428, %v420
        %v621 = vpack.c.bf16 %v429, %v421
        %v622 = vpack.c.bf16 %v430, %v422
        %v623 = vpack.c.bf16 %v431, %v423
        %v624 = vpack.c.bf16 %v440, %v432
        %v625 = vpack.c.bf16 %v441, %v433
        %v626 = vpack.c.bf16 %v442, %v434
        %v627 = vpack.c.bf16 %v443, %v435
        %v628 = vpack.c.bf16 %v444, %v436
        %v629 = vpack.c.bf16 %v445, %v437
        %v630 = vpack.c.bf16 %v446, %v438
        %v631 = vpack.c.bf16 %v447, %v439
        %v632 = vpack.c.bf16 %v456, %v448
        %v633 = vpack.c.bf16 %v457, %v449
        %v634 = vpack.c.bf16 %v458, %v450
        %v635 = vpack.c.bf16 %v459, %v451
        %v636 = vpack.c.bf16 %v460, %v452
        %v637 = vpack.c.bf16 %v461, %v453
        %v638 = vpack.c.bf16 %v462, %v454
        %v639 = vpack.c.bf16 %v463, %v455
        %v640 = vpack.c.bf16 %v472, %v464
        %v641 = vpack.c.bf16 %v473, %v465
        %v642 = vpack.c.bf16 %v474, %v466
        %v643 = vpack.c.bf16 %v475, %v467
        %v644 = vpack.c.bf16 %v476, %v468
        %v645 = vpack.c.bf16 %v477, %v469
        %v646 = vpack.c.bf16 %v478, %v470
        %v647 = vpack.c.bf16 %v479, %v471
        %v648 = vpack.c.bf16 %v488, %v480
        %v649 = vpack.c.bf16 %v489, %v481
        %v650 = vpack.c.bf16 %v490, %v482
        %v651 = vpack.c.bf16 %v491, %v483
        %v652 = vpack.c.bf16 %v492, %v484
        %v653 = vpack.c.bf16 %v493, %v485
        %v654 = vpack.c.bf16 %v494, %v486
        %v655 = vpack.c.bf16 %v495, %v487
        %v656 = vpack.c.bf16 %v504, %v496
        %v657 = vpack.c.bf16 %v505, %v497
        %v658 = vpack.c.bf16 %v506, %v498
        %v659 = vpack.c.bf16 %v507, %v499
        %v660 = vpack.c.bf16 %v508, %v500
        %v661 = vpack.c.bf16 %v509, %v501
        %v662 = vpack.c.bf16 %v510, %v502
        %v663 = vpack.c.bf16 %v511, %v503
        %v664 = vpack.c.bf16 %v520, %v512
        %v665 = vpack.c.bf16 %v521, %v513
        %v666 = vpack.c.bf16 %v522, %v514
        %v667 = vpack.c.bf16 %v523, %v515
        %v668 = vpack.c.bf16 %v524, %v516
        %v669 = vpack.c.bf16 %v525, %v517
        %v670 = vpack.c.bf16 %v526, %v518
        %v671 = vpack.c.bf16 %v527, %v519
        %v672 = vpack.c.bf16 %v536, %v528
        %v673 = vpack.c.bf16 %v537, %v529
        %v674 = vpack.c.bf16 %v538, %v530
        %v675 = vpack.c.bf16 %v539, %v531
        %v676 = vpack.c.bf16 %v540, %v532
        %v677 = vpack.c.bf16 %v541, %v533
        %v678 = vpack.c.bf16 %v542, %v534
        %v679 = vpack.c.bf16 %v543, %v535
        %v680 = vpack.c.bf16 %v552, %v544
        %v681 = vpack.c.bf16 %v553, %v545
        %v682 = vpack.c.bf16 %v554, %v546
        %v683 = vpack.c.bf16 %v555, %v547
        %v684 = vpack.c.bf16 %v556, %v548
        %v685 = vpack.c.bf16 %v557, %v549
        %v686 = vpack.c.bf16 %v558, %v550
        %v687 = vpack.c.bf16 %v559, %v551
        %v688 = vld [vmem:[#allocation6] sm:$0xff]
        %v689 = vld [vmem:[#allocation6 + $0x8] sm:$0xff]
        %v690 = vld [vmem:[#allocation6 + $0x10] sm:$0xff]
        %v691 = vld [vmem:[#allocation6 + $0x18] sm:$0xff]
        %v692 = vld [vmem:[#allocation6 + $0x20] sm:$0xff]
        %v693 = vld [vmem:[#allocation6 + $0x28] sm:$0xff]
        %v694 = vld [vmem:[#allocation6 + $0x30] sm:$0xff]
        %v695 = vld [vmem:[#allocation6 + $0x38] sm:$0xff]
        %v696 = vld [vmem:[#allocation6 + $0x40] sm:$0xff]
        %v697 = vld [vmem:[#allocation6 + $0x48] sm:$0xff]
        %v698 = vld [vmem:[#allocation6 + $0x50] sm:$0xff]
        %v699 = vld [vmem:[#allocation6 + $0x58] sm:$0xff]
        %v700 = vld [vmem:[#allocation6 + $0x60] sm:$0xff]
        %v701 = vld [vmem:[#allocation6 + $0x68] sm:$0xff]
        %v702 = vld [vmem:[#allocation6 + $0x70] sm:$0xff]
        %v703 = vld [vmem:[#allocation6 + $0x78] sm:$0xff]
        %v704 = vld [vmem:[#allocation6 + $0x80] sm:$0xff]
        %v705 = vld [vmem:[#allocation6 + $0x88] sm:$0xff]
        %v706 = vld [vmem:[#allocation6 + $0x90] sm:$0xff]
        %v707 = vld [vmem:[#allocation6 + $0x98] sm:$0xff]
        %v708 = vld [vmem:[#allocation6 + $0xa0] sm:$0xff]
        %v709 = vld [vmem:[#allocation6 + $0xa8] sm:$0xff]
        %v710 = vld [vmem:[#allocation6 + $0xb0] sm:$0xff]
        %v711 = vld [vmem:[#allocation6 + $0xb8] sm:$0xff]
        %v712 = vld [vmem:[#allocation6 + $0xc0] sm:$0xff]
        %v713 = vld [vmem:[#allocation6 + $0xc8] sm:$0xff]
        %v714 = vld [vmem:[#allocation6 + $0xd0] sm:$0xff]
        %v715 = vld [vmem:[#allocation6 + $0xd8] sm:$0xff]
        %v716 = vld [vmem:[#allocation6 + $0xe0] sm:$0xff]
        %v717 = vld [vmem:[#allocation6 + $0xe8] sm:$0xff]
        %v718 = vld [vmem:[#allocation6 + $0xf0] sm:$0xff]
        %v719 = vld [vmem:[#allocation6 + $0xf8] sm:$0xff]
        %v720 = vld [vmem:[#allocation6 + $0x100] sm:$0xff]
        %v721 = vld [vmem:[#allocation6 + $0x108] sm:$0xff]
        %v722 = vld [vmem:[#allocation6 + $0x110] sm:$0xff]
        %v723 = vld [vmem:[#allocation6 + $0x118] sm:$0xff]
        %v724 = vld [vmem:[#allocation6 + $0x120] sm:$0xff]
        %v725 = vld [vmem:[#allocation6 + $0x128] sm:$0xff]
        %v726 = vld [vmem:[#allocation6 + $0x130] sm:$0xff]
        %v727 = vld [vmem:[#allocation6 + $0x138] sm:$0xff]
        %v728 = vld [vmem:[#allocation6 + $0x140] sm:$0xff]
        %v729 = vld [vmem:[#allocation6 + $0x148] sm:$0xff]
        %v730 = vld [vmem:[#allocation6 + $0x150] sm:$0xff]
        %v731 = vld [vmem:[#allocation6 + $0x158] sm:$0xff]
        %v732 = vld [vmem:[#allocation6 + $0x160] sm:$0xff]
        %v733 = vld [vmem:[#allocation6 + $0x168] sm:$0xff]
        %v734 = vld [vmem:[#allocation6 + $0x170] sm:$0xff]
        %v735 = vld [vmem:[#allocation6 + $0x178] sm:$0xff]
        %v736 = vld [vmem:[#allocation6 + $0x180] sm:$0xff]
        %v737 = vld [vmem:[#allocation6 + $0x188] sm:$0xff]
        %v738 = vld [vmem:[#allocation6 + $0x190] sm:$0xff]
        %v739 = vld [vmem:[#allocation6 + $0x198] sm:$0xff]
        %v740 = vld [vmem:[#allocation6 + $0x1a0] sm:$0xff]
        %v741 = vld [vmem:[#allocation6 + $0x1a8] sm:$0xff]
        %v742 = vld [vmem:[#allocation6 + $0x1b0] sm:$0xff]
        %v743 = vld [vmem:[#allocation6 + $0x1b8] sm:$0xff]
        %v744 = vld [vmem:[#allocation6 + $0x1c0] sm:$0xff]
        %v745 = vld [vmem:[#allocation6 + $0x1c8] sm:$0xff]
        %v746 = vld [vmem:[#allocation6 + $0x1d0] sm:$0xff]
        %v747 = vld [vmem:[#allocation6 + $0x1d8] sm:$0xff]
        %v748 = vld [vmem:[#allocation6 + $0x1e0] sm:$0xff]
        %v749 = vld [vmem:[#allocation6 + $0x1e8] sm:$0xff]
        %v750 = vld [vmem:[#allocation6 + $0x1f0] sm:$0xff]
        %v751 = vld [vmem:[#allocation6 + $0x1f8] sm:$0xff]
        %v752 = vld [vmem:[#allocation6 + $0x200] sm:$0xff]
        %v753 = vld [vmem:[#allocation6 + $0x208] sm:$0xff]
        %v754 = vld [vmem:[#allocation6 + $0x210] sm:$0xff]
        %v755 = vld [vmem:[#allocation6 + $0x218] sm:$0xff]
        %v756 = vld [vmem:[#allocation6 + $0x220] sm:$0xff]
        %v757 = vld [vmem:[#allocation6 + $0x228] sm:$0xff]
        %v758 = vld [vmem:[#allocation6 + $0x230] sm:$0xff]
        %v759 = vld [vmem:[#allocation6 + $0x238] sm:$0xff]
        %v760 = vld [vmem:[#allocation6 + $0x240] sm:$0xff]
        %v761 = vld [vmem:[#allocation6 + $0x248] sm:$0xff]
        %v762 = vld [vmem:[#allocation6 + $0x250] sm:$0xff]
        %v763 = vld [vmem:[#allocation6 + $0x258] sm:$0xff]
        %v764 = vld [vmem:[#allocation6 + $0x260] sm:$0xff]
        %v765 = vld [vmem:[#allocation6 + $0x268] sm:$0xff]
        %v766 = vld [vmem:[#allocation6 + $0x270] sm:$0xff]
        %v767 = vld [vmem:[#allocation6 + $0x278] sm:$0xff]
        %v768 = vld [vmem:[#allocation6 + $0x280] sm:$0xff]
        %v769 = vld [vmem:[#allocation6 + $0x288] sm:$0xff]
        %v770 = vld [vmem:[#allocation6 + $0x290] sm:$0xff]
        %v771 = vld [vmem:[#allocation6 + $0x298] sm:$0xff]
        %v772 = vld [vmem:[#allocation6 + $0x2a0] sm:$0xff]
        %v773 = vld [vmem:[#allocation6 + $0x2a8] sm:$0xff]
        %v774 = vld [vmem:[#allocation6 + $0x2b0] sm:$0xff]
        %v775 = vld [vmem:[#allocation6 + $0x2b8] sm:$0xff]
        %v776 = vld [vmem:[#allocation6 + $0x2c0] sm:$0xff]
        %v777 = vld [vmem:[#allocation6 + $0x2c8] sm:$0xff]
        %v778 = vld [vmem:[#allocation6 + $0x2d0] sm:$0xff]
        %v779 = vld [vmem:[#allocation6 + $0x2d8] sm:$0xff]
        %v780 = vld [vmem:[#allocation6 + $0x2e0] sm:$0xff]
        %v781 = vld [vmem:[#allocation6 + $0x2e8] sm:$0xff]
        %v782 = vld [vmem:[#allocation6 + $0x2f0] sm:$0xff]
        %v783 = vld [vmem:[#allocation6 + $0x2f8] sm:$0xff]
        %v784 = vld [vmem:[#allocation6 + $0x300] sm:$0xff]
        %v785 = vld [vmem:[#allocation6 + $0x308] sm:$0xff]
        %v786 = vld [vmem:[#allocation6 + $0x310] sm:$0xff]
        %v787 = vld [vmem:[#allocation6 + $0x318] sm:$0xff]
        %v788 = vld [vmem:[#allocation6 + $0x320] sm:$0xff]
        %v789 = vld [vmem:[#allocation6 + $0x328] sm:$0xff]
        %v790 = vld [vmem:[#allocation6 + $0x330] sm:$0xff]
        %v791 = vld [vmem:[#allocation6 + $0x338] sm:$0xff]
        %v792 = vld [vmem:[#allocation6 + $0x340] sm:$0xff]
        %v793 = vld [vmem:[#allocation6 + $0x348] sm:$0xff]
        %v794 = vld [vmem:[#allocation6 + $0x350] sm:$0xff]
        %v795 = vld [vmem:[#allocation6 + $0x358] sm:$0xff]
        %v796 = vld [vmem:[#allocation6 + $0x360] sm:$0xff]
        %v797 = vld [vmem:[#allocation6 + $0x368] sm:$0xff]
        %v798 = vld [vmem:[#allocation6 + $0x370] sm:$0xff]
        %v799 = vld [vmem:[#allocation6 + $0x378] sm:$0xff]
        %v800 = vld [vmem:[#allocation6 + $0x380] sm:$0xff]
        %v801 = vld [vmem:[#allocation6 + $0x388] sm:$0xff]
        %v802 = vld [vmem:[#allocation6 + $0x390] sm:$0xff]
        %v803 = vld [vmem:[#allocation6 + $0x398] sm:$0xff]
        %v804 = vld [vmem:[#allocation6 + $0x3a0] sm:$0xff]
        %v805 = vld [vmem:[#allocation6 + $0x3a8] sm:$0xff]
        %v806 = vld [vmem:[#allocation6 + $0x3b0] sm:$0xff]
        %v807 = vld [vmem:[#allocation6 + $0x3b8] sm:$0xff]
        %v808 = vld [vmem:[#allocation6 + $0x3c0] sm:$0xff]
        %v809 = vld [vmem:[#allocation6 + $0x3c8] sm:$0xff]
        %v810 = vld [vmem:[#allocation6 + $0x3d0] sm:$0xff]
        %v811 = vld [vmem:[#allocation6 + $0x3d8] sm:$0xff]
        %v812 = vld [vmem:[#allocation6 + $0x3e0] sm:$0xff]
        %v813 = vld [vmem:[#allocation6 + $0x3e8] sm:$0xff]
        %v814 = vld [vmem:[#allocation6 + $0x3f0] sm:$0xff]
        %v815 = vld [vmem:[#allocation6 + $0x3f8] sm:$0xff]
        %v816 = vld [vmem:[#allocation8] sm:$0x3]
        %v818 = vlaneseq
        %v819 = vshrl.u32 %v818, 7
        %v820 = vsub.s32 0, %v819
        %v821 = vrot.slane %v816, %v820
        %v822 = vlaneseq
        %v823 = vshrl.u32 %v822, 7
        %v824 = vsub.s32 1, %v823
        %v825 = vrot.slane %v816, %v824
        %v956 = vunpack.c.l.b16 %v688
        %v957 = vunpack.c.h.b16 %v688
        %v958 = vunpack.c.l.b16 %v689
        %v959 = vunpack.c.h.b16 %v689
        %v960 = vunpack.c.l.b16 %v690
        %v961 = vunpack.c.h.b16 %v690
        %v962 = vunpack.c.l.b16 %v691
        %v963 = vunpack.c.h.b16 %v691
        %v964 = vunpack.c.l.b16 %v692
        %v965 = vunpack.c.h.b16 %v692
        %v966 = vunpack.c.l.b16 %v693
        %v967 = vunpack.c.h.b16 %v693
        %v968 = vunpack.c.l.b16 %v694
        %v969 = vunpack.c.h.b16 %v694
        %v970 = vunpack.c.l.b16 %v695
        %v971 = vunpack.c.h.b16 %v695
        %v972 = vunpack.c.l.b16 %v696
        %v973 = vunpack.c.h.b16 %v696
        %v974 = vunpack.c.l.b16 %v697
        %v975 = vunpack.c.h.b16 %v697
        %v976 = vunpack.c.l.b16 %v698
        %v977 = vunpack.c.h.b16 %v698
        %v978 = vunpack.c.l.b16 %v699
        %v979 = vunpack.c.h.b16 %v699
        %v980 = vunpack.c.l.b16 %v700
        %v981 = vunpack.c.h.b16 %v700
        %v982 = vunpack.c.l.b16 %v701
        %v983 = vunpack.c.h.b16 %v701
        %v984 = vunpack.c.l.b16 %v702
        %v985 = vunpack.c.h.b16 %v702
        %v986 = vunpack.c.l.b16 %v703
        %v987 = vunpack.c.h.b16 %v703
        %v988 = vunpack.c.l.b16 %v704
        %v989 = vunpack.c.h.b16 %v704
        %v990 = vunpack.c.l.b16 %v705
        %v991 = vunpack.c.h.b16 %v705
        %v992 = vunpack.c.l.b16 %v706
        %v993 = vunpack.c.h.b16 %v706
        %v994 = vunpack.c.l.b16 %v707
        %v995 = vunpack.c.h.b16 %v707
        %v996 = vunpack.c.l.b16 %v708
        %v997 = vunpack.c.h.b16 %v708
        %v998 = vunpack.c.l.b16 %v709
        %v999 = vunpack.c.h.b16 %v709
        %v1000 = vunpack.c.l.b16 %v710
        %v1001 = vunpack.c.h.b16 %v710
        %v1002 = vunpack.c.l.b16 %v711
        %v1003 = vunpack.c.h.b16 %v711
        %v1004 = vunpack.c.l.b16 %v712
        %v1005 = vunpack.c.h.b16 %v712
        %v1006 = vunpack.c.l.b16 %v713
        %v1007 = vunpack.c.h.b16 %v713
        %v1008 = vunpack.c.l.b16 %v714
        %v1009 = vunpack.c.h.b16 %v714
        %v1010 = vunpack.c.l.b16 %v715
        %v1011 = vunpack.c.h.b16 %v715
        %v1012 = vunpack.c.l.b16 %v716
        %v1013 = vunpack.c.h.b16 %v716
        %v1014 = vunpack.c.l.b16 %v717
        %v1015 = vunpack.c.h.b16 %v717
        %v1016 = vunpack.c.l.b16 %v718
        %v1017 = vunpack.c.h.b16 %v718
        %v1018 = vunpack.c.l.b16 %v719
        %v1019 = vunpack.c.h.b16 %v719
        %v1020 = vunpack.c.l.b16 %v720
        %v1021 = vunpack.c.h.b16 %v720
        %v1022 = vunpack.c.l.b16 %v721
        %v1023 = vunpack.c.h.b16 %v721
        %v1024 = vunpack.c.l.b16 %v722
        %v1025 = vunpack.c.h.b16 %v722
        %v1026 = vunpack.c.l.b16 %v723
        %v1027 = vunpack.c.h.b16 %v723
        %v1028 = vunpack.c.l.b16 %v724
        %v1029 = vunpack.c.h.b16 %v724
        %v1030 = vunpack.c.l.b16 %v725
        %v1031 = vunpack.c.h.b16 %v725
        %v1032 = vunpack.c.l.b16 %v726
        %v1033 = vunpack.c.h.b16 %v726
        %v1034 = vunpack.c.l.b16 %v727
        %v1035 = vunpack.c.h.b16 %v727
        %v1036 = vunpack.c.l.b16 %v728
        %v1037 = vunpack.c.h.b16 %v728
        %v1038 = vunpack.c.l.b16 %v729
        %v1039 = vunpack.c.h.b16 %v729
        %v1040 = vunpack.c.l.b16 %v730
        %v1041 = vunpack.c.h.b16 %v730
        %v1042 = vunpack.c.l.b16 %v731
        %v1043 = vunpack.c.h.b16 %v731
        %v1044 = vunpack.c.l.b16 %v732
        %v1045 = vunpack.c.h.b16 %v732
        %v1046 = vunpack.c.l.b16 %v733
        %v1047 = vunpack.c.h.b16 %v733
        %v1048 = vunpack.c.l.b16 %v734
        %v1049 = vunpack.c.h.b16 %v734
        %v1050 = vunpack.c.l.b16 %v735
        %v1051 = vunpack.c.h.b16 %v735
        %v1052 = vunpack.c.l.b16 %v736
        %v1053 = vunpack.c.h.b16 %v736
        %v1054 = vunpack.c.l.b16 %v737
        %v1055 = vunpack.c.h.b16 %v737
        %v1056 = vunpack.c.l.b16 %v738
        %v1057 = vunpack.c.h.b16 %v738
        %v1058 = vunpack.c.l.b16 %v739
        %v1059 = vunpack.c.h.b16 %v739
        %v1060 = vunpack.c.l.b16 %v740
        %v1061 = vunpack.c.h.b16 %v740
        %v1062 = vunpack.c.l.b16 %v741
        %v1063 = vunpack.c.h.b16 %v741
        %v1064 = vunpack.c.l.b16 %v742
        %v1065 = vunpack.c.h.b16 %v742
        %v1066 = vunpack.c.l.b16 %v743
        %v1067 = vunpack.c.h.b16 %v743
        %v1068 = vunpack.c.l.b16 %v744
        %v1069 = vunpack.c.h.b16 %v744
        %v1070 = vunpack.c.l.b16 %v745
        %v1071 = vunpack.c.h.b16 %v745
        %v1072 = vunpack.c.l.b16 %v746
        %v1073 = vunpack.c.h.b16 %v746
        %v1074 = vunpack.c.l.b16 %v747
        %v1075 = vunpack.c.h.b16 %v747
        %v1076 = vunpack.c.l.b16 %v748
        %v1077 = vunpack.c.h.b16 %v748
        %v1078 = vunpack.c.l.b16 %v749
        %v1079 = vunpack.c.h.b16 %v749
        %v1080 = vunpack.c.l.b16 %v750
        %v1081 = vunpack.c.h.b16 %v750
        %v1082 = vunpack.c.l.b16 %v751
        %v1083 = vunpack.c.h.b16 %v751
        %v1084 = vunpack.c.l.b16 %v752
        %v1085 = vunpack.c.h.b16 %v752
        %v1086 = vunpack.c.l.b16 %v753
        %v1087 = vunpack.c.h.b16 %v753
        %v1088 = vunpack.c.l.b16 %v754
        %v1089 = vunpack.c.h.b16 %v754
        %v1090 = vunpack.c.l.b16 %v755
        %v1091 = vunpack.c.h.b16 %v755
        %v1092 = vunpack.c.l.b16 %v756
        %v1093 = vunpack.c.h.b16 %v756
        %v1094 = vunpack.c.l.b16 %v757
        %v1095 = vunpack.c.h.b16 %v757
        %v1096 = vunpack.c.l.b16 %v758
        %v1097 = vunpack.c.h.b16 %v758
        %v1098 = vunpack.c.l.b16 %v759
        %v1099 = vunpack.c.h.b16 %v759
        %v1100 = vunpack.c.l.b16 %v760
        %v1101 = vunpack.c.h.b16 %v760
        %v1102 = vunpack.c.l.b16 %v761
        %v1103 = vunpack.c.h.b16 %v761
        %v1104 = vunpack.c.l.b16 %v762
        %v1105 = vunpack.c.h.b16 %v762
        %v1106 = vunpack.c.l.b16 %v763
        %v1107 = vunpack.c.h.b16 %v763
        %v1108 = vunpack.c.l.b16 %v764
        %v1109 = vunpack.c.h.b16 %v764
        %v1110 = vunpack.c.l.b16 %v765
        %v1111 = vunpack.c.h.b16 %v765
        %v1112 = vunpack.c.l.b16 %v766
        %v1113 = vunpack.c.h.b16 %v766
        %v1114 = vunpack.c.l.b16 %v767
        %v1115 = vunpack.c.h.b16 %v767
        %v1116 = vunpack.c.l.b16 %v768
        %v1117 = vunpack.c.h.b16 %v768
        %v1118 = vunpack.c.l.b16 %v769
        %v1119 = vunpack.c.h.b16 %v769
        %v1120 = vunpack.c.l.b16 %v770
        %v1121 = vunpack.c.h.b16 %v770
        %v1122 = vunpack.c.l.b16 %v771
        %v1123 = vunpack.c.h.b16 %v771
        %v1124 = vunpack.c.l.b16 %v772
        %v1125 = vunpack.c.h.b16 %v772
        %v1126 = vunpack.c.l.b16 %v773
        %v1127 = vunpack.c.h.b16 %v773
        %v1128 = vunpack.c.l.b16 %v774
        %v1129 = vunpack.c.h.b16 %v774
        %v1130 = vunpack.c.l.b16 %v775
        %v1131 = vunpack.c.h.b16 %v775
        %v1132 = vunpack.c.l.b16 %v776
        %v1133 = vunpack.c.h.b16 %v776
        %v1134 = vunpack.c.l.b16 %v777
        %v1135 = vunpack.c.h.b16 %v777
        %v1136 = vunpack.c.l.b16 %v778
        %v1137 = vunpack.c.h.b16 %v778
        %v1138 = vunpack.c.l.b16 %v779
        %v1139 = vunpack.c.h.b16 %v779
        %v1140 = vunpack.c.l.b16 %v780
        %v1141 = vunpack.c.h.b16 %v780
        %v1142 = vunpack.c.l.b16 %v781
        %v1143 = vunpack.c.h.b16 %v781
        %v1144 = vunpack.c.l.b16 %v782
        %v1145 = vunpack.c.h.b16 %v782
        %v1146 = vunpack.c.l.b16 %v783
        %v1147 = vunpack.c.h.b16 %v783
        %v1148 = vunpack.c.l.b16 %v784
        %v1149 = vunpack.c.h.b16 %v784
        %v1150 = vunpack.c.l.b16 %v785
        %v1151 = vunpack.c.h.b16 %v785
        %v1152 = vunpack.c.l.b16 %v786
        %v1153 = vunpack.c.h.b16 %v786
        %v1154 = vunpack.c.l.b16 %v787
        %v1155 = vunpack.c.h.b16 %v787
        %v1156 = vunpack.c.l.b16 %v788
        %v1157 = vunpack.c.h.b16 %v788
        %v1158 = vunpack.c.l.b16 %v789
        %v1159 = vunpack.c.h.b16 %v789
        %v1160 = vunpack.c.l.b16 %v790
        %v1161 = vunpack.c.h.b16 %v790
        %v1162 = vunpack.c.l.b16 %v791
        %v1163 = vunpack.c.h.b16 %v791
        %v1164 = vunpack.c.l.b16 %v792
        %v1165 = vunpack.c.h.b16 %v792
        %v1166 = vunpack.c.l.b16 %v793
        %v1167 = vunpack.c.h.b16 %v793
        %v1168 = vunpack.c.l.b16 %v794
        %v1169 = vunpack.c.h.b16 %v794
        %v1170 = vunpack.c.l.b16 %v795
        %v1171 = vunpack.c.h.b16 %v795
        %v1172 = vunpack.c.l.b16 %v796
        %v1173 = vunpack.c.h.b16 %v796
        %v1174 = vunpack.c.l.b16 %v797
        %v1175 = vunpack.c.h.b16 %v797
        %v1176 = vunpack.c.l.b16 %v798
        %v1177 = vunpack.c.h.b16 %v798
        %v1178 = vunpack.c.l.b16 %v799
        %v1179 = vunpack.c.h.b16 %v799
        %v1180 = vunpack.c.l.b16 %v800
        %v1181 = vunpack.c.h.b16 %v800
        %v1182 = vunpack.c.l.b16 %v801
        %v1183 = vunpack.c.h.b16 %v801
        %v1184 = vunpack.c.l.b16 %v802
        %v1185 = vunpack.c.h.b16 %v802
        %v1186 = vunpack.c.l.b16 %v803
        %v1187 = vunpack.c.h.b16 %v803
        %v1188 = vunpack.c.l.b16 %v804
        %v1189 = vunpack.c.h.b16 %v804
        %v1190 = vunpack.c.l.b16 %v805
        %v1191 = vunpack.c.h.b16 %v805
        %v1192 = vunpack.c.l.b16 %v806
        %v1193 = vunpack.c.h.b16 %v806
        %v1194 = vunpack.c.l.b16 %v807
        %v1195 = vunpack.c.h.b16 %v807
        %v1196 = vunpack.c.l.b16 %v808
        %v1197 = vunpack.c.h.b16 %v808
        %v1198 = vunpack.c.l.b16 %v809
        %v1199 = vunpack.c.h.b16 %v809
        %v1200 = vunpack.c.l.b16 %v810
        %v1201 = vunpack.c.h.b16 %v810
        %v1202 = vunpack.c.l.b16 %v811
        %v1203 = vunpack.c.h.b16 %v811
        %v1204 = vunpack.c.l.b16 %v812
        %v1205 = vunpack.c.h.b16 %v812
        %v1206 = vunpack.c.l.b16 %v813
        %v1207 = vunpack.c.h.b16 %v813
        %v1208 = vunpack.c.l.b16 %v814
        %v1209 = vunpack.c.h.b16 %v814
        %v1210 = vunpack.c.l.b16 %v815
        %v1211 = vunpack.c.h.b16 %v815
        %v1212 = vpack.c.b16 %v958, %v956
        %v1213 = vpack.c.b16 %v959, %v957
        %v1214 = vpack.c.b16 %v962, %v960
        %v1215 = vpack.c.b16 %v963, %v961
        %v1216 = vpack.c.b16 %v966, %v964
        %v1217 = vpack.c.b16 %v967, %v965
        %v1218 = vpack.c.b16 %v970, %v968
        %v1219 = vpack.c.b16 %v971, %v969
        %v1220 = vpack.c.b16 %v974, %v972
        %v1221 = vpack.c.b16 %v975, %v973
        %v1222 = vpack.c.b16 %v978, %v976
        %v1223 = vpack.c.b16 %v979, %v977
        %v1224 = vpack.c.b16 %v982, %v980
        %v1225 = vpack.c.b16 %v983, %v981
        %v1226 = vpack.c.b16 %v986, %v984
        %v1227 = vpack.c.b16 %v987, %v985
        %v1228 = vpack.c.b16 %v990, %v988
        %v1229 = vpack.c.b16 %v991, %v989
        %v1230 = vpack.c.b16 %v994, %v992
        %v1231 = vpack.c.b16 %v995, %v993
        %v1232 = vpack.c.b16 %v998, %v996
        %v1233 = vpack.c.b16 %v999, %v997
        %v1234 = vpack.c.b16 %v1002, %v1000
        %v1235 = vpack.c.b16 %v1003, %v1001
        %v1236 = vpack.c.b16 %v1006, %v1004
        %v1237 = vpack.c.b16 %v1007, %v1005
        %v1238 = vpack.c.b16 %v1010, %v1008
        %v1239 = vpack.c.b16 %v1011, %v1009
        %v1240 = vpack.c.b16 %v1014, %v1012
        %v1241 = vpack.c.b16 %v1015, %v1013
        %v1242 = vpack.c.b16 %v1018, %v1016
        %v1243 = vpack.c.b16 %v1019, %v1017
        %v1244 = vpack.c.b16 %v1022, %v1020
        %v1245 = vpack.c.b16 %v1023, %v1021
        %v1246 = vpack.c.b16 %v1026, %v1024
        %v1247 = vpack.c.b16 %v1027, %v1025
        %v1248 = vpack.c.b16 %v1030, %v1028
        %v1249 = vpack.c.b16 %v1031, %v1029
        %v1250 = vpack.c.b16 %v1034, %v1032
        %v1251 = vpack.c.b16 %v1035, %v1033
        %v1252 = vpack.c.b16 %v1038, %v1036
        %v1253 = vpack.c.b16 %v1039, %v1037
        %v1254 = vpack.c.b16 %v1042, %v1040
        %v1255 = vpack.c.b16 %v1043, %v1041
        %v1256 = vpack.c.b16 %v1046, %v1044
        %v1257 = vpack.c.b16 %v1047, %v1045
        %v1258 = vpack.c.b16 %v1050, %v1048
        %v1259 = vpack.c.b16 %v1051, %v1049
        %v1260 = vpack.c.b16 %v1054, %v1052
        %v1261 = vpack.c.b16 %v1055, %v1053
        %v1262 = vpack.c.b16 %v1058, %v1056
        %v1263 = vpack.c.b16 %v1059, %v1057
        %v1264 = vpack.c.b16 %v1062, %v1060
        %v1265 = vpack.c.b16 %v1063, %v1061
        %v1266 = vpack.c.b16 %v1066, %v1064
        %v1267 = vpack.c.b16 %v1067, %v1065
        %v1268 = vpack.c.b16 %v1070, %v1068
        %v1269 = vpack.c.b16 %v1071, %v1069
        %v1270 = vpack.c.b16 %v1074, %v1072
        %v1271 = vpack.c.b16 %v1075, %v1073
        %v1272 = vpack.c.b16 %v1078, %v1076
        %v1273 = vpack.c.b16 %v1079, %v1077
        %v1274 = vpack.c.b16 %v1082, %v1080
        %v1275 = vpack.c.b16 %v1083, %v1081
        %v1276 = vpack.c.b16 %v1086, %v1084
        %v1277 = vpack.c.b16 %v1087, %v1085
        %v1278 = vpack.c.b16 %v1090, %v1088
        %v1279 = vpack.c.b16 %v1091, %v1089
        %v1280 = vpack.c.b16 %v1094, %v1092
        %v1281 = vpack.c.b16 %v1095, %v1093
        %v1282 = vpack.c.b16 %v1098, %v1096
        %v1283 = vpack.c.b16 %v1099, %v1097
        %v1284 = vpack.c.b16 %v1102, %v1100
        %v1285 = vpack.c.b16 %v1103, %v1101
        %v1286 = vpack.c.b16 %v1106, %v1104
        %v1287 = vpack.c.b16 %v1107, %v1105
        %v1288 = vpack.c.b16 %v1110, %v1108
        %v1289 = vpack.c.b16 %v1111, %v1109
        %v1290 = vpack.c.b16 %v1114, %v1112
        %v1291 = vpack.c.b16 %v1115, %v1113
        %v1292 = vpack.c.b16 %v1118, %v1116
        %v1293 = vpack.c.b16 %v1119, %v1117
        %v1294 = vpack.c.b16 %v1122, %v1120
        %v1295 = vpack.c.b16 %v1123, %v1121
        %v1296 = vpack.c.b16 %v1126, %v1124
        %v1297 = vpack.c.b16 %v1127, %v1125
        %v1298 = vpack.c.b16 %v1130, %v1128
        %v1299 = vpack.c.b16 %v1131, %v1129
        %v1300 = vpack.c.b16 %v1134, %v1132
        %v1301 = vpack.c.b16 %v1135, %v1133
        %v1302 = vpack.c.b16 %v1138, %v1136
        %v1303 = vpack.c.b16 %v1139, %v1137
        %v1304 = vpack.c.b16 %v1142, %v1140
        %v1305 = vpack.c.b16 %v1143, %v1141
        %v1306 = vpack.c.b16 %v1146, %v1144
        %v1307 = vpack.c.b16 %v1147, %v1145
        %v1308 = vpack.c.b16 %v1150, %v1148
        %v1309 = vpack.c.b16 %v1151, %v1149
        %v1310 = vpack.c.b16 %v1154, %v1152
        %v1311 = vpack.c.b16 %v1155, %v1153
        %v1312 = vpack.c.b16 %v1158, %v1156
        %v1313 = vpack.c.b16 %v1159, %v1157
        %v1314 = vpack.c.b16 %v1162, %v1160
        %v1315 = vpack.c.b16 %v1163, %v1161
        %v1316 = vpack.c.b16 %v1166, %v1164
        %v1317 = vpack.c.b16 %v1167, %v1165
        %v1318 = vpack.c.b16 %v1170, %v1168
        %v1319 = vpack.c.b16 %v1171, %v1169
        %v1320 = vpack.c.b16 %v1174, %v1172
        %v1321 = vpack.c.b16 %v1175, %v1173
        %v1322 = vpack.c.b16 %v1178, %v1176
        %v1323 = vpack.c.b16 %v1179, %v1177
        %v1324 = vpack.c.b16 %v1182, %v1180
        %v1325 = vpack.c.b16 %v1183, %v1181
        %v1326 = vpack.c.b16 %v1186, %v1184
        %v1327 = vpack.c.b16 %v1187, %v1185
        %v1328 = vpack.c.b16 %v1190, %v1188
        %v1329 = vpack.c.b16 %v1191, %v1189
        %v1330 = vpack.c.b16 %v1194, %v1192
        %v1331 = vpack.c.b16 %v1195, %v1193
        %v1332 = vpack.c.b16 %v1198, %v1196
        %v1333 = vpack.c.b16 %v1199, %v1197
        %v1334 = vpack.c.b16 %v1202, %v1200
        %v1335 = vpack.c.b16 %v1203, %v1201
        %v1336 = vpack.c.b16 %v1206, %v1204
        %v1337 = vpack.c.b16 %v1207, %v1205
        %v1338 = vpack.c.b16 %v1210, %v1208
        %v1339 = vpack.c.b16 %v1211, %v1209
        %1468 = vmatprep.subr.bf16.mxu0 %v1213
        %1469 = vmatpush1.bf16.msra.mxu0 %v1212
        %1470 = vmatprep.subr.bf16.mxu0 %v1215
        %1471 = vmatpush1.bf16.msra.mxu0 %v1214
        %1472 = vmatprep.subr.bf16.mxu0 %v1217
        %1473 = vmatpush1.bf16.msra.mxu0 %v1216
        %1474 = vmatprep.subr.bf16.mxu0 %v1219
        %1475 = vmatpush1.bf16.msra.mxu0 %v1218
        %1476 = vmatprep.subr.bf16.mxu0 %v1221
        %1477 = vmatpush1.bf16.msra.mxu0 %v1220
        %1478 = vmatprep.subr.bf16.mxu0 %v1223
        %1479 = vmatpush1.bf16.msra.mxu0 %v1222
        %1480 = vmatprep.subr.bf16.mxu0 %v1225
        %1481 = vmatpush1.bf16.msra.mxu0 %v1224
        %1482 = vmatprep.subr.bf16.mxu0 %v1227
        %1483 = vmatpush1.bf16.msra.mxu0 %v1226
        %1484 = vmatprep.subr.bf16.mxu0 %v1229
        %1485 = vmatpush1.bf16.msra.mxu0 %v1228
        %1486 = vmatprep.subr.bf16.mxu0 %v1231
        %1487 = vmatpush1.bf16.msra.mxu0 %v1230
        %1488 = vmatprep.subr.bf16.mxu0 %v1233
        %1489 = vmatpush1.bf16.msra.mxu0 %v1232
        %1490 = vmatprep.subr.bf16.mxu0 %v1235
        %1491 = vmatpush1.bf16.msra.mxu0 %v1234
        %1492 = vmatprep.subr.bf16.mxu0 %v1237
        %1493 = vmatpush1.bf16.msra.mxu0 %v1236
        %1494 = vmatprep.subr.bf16.mxu0 %v1239
        %1495 = vmatpush1.bf16.msra.mxu0 %v1238
        %1496 = vmatprep.subr.bf16.mxu0 %v1241
        %1497 = vmatpush1.bf16.msra.mxu0 %v1240
        %1498 = vmatprep.subr.bf16.mxu0 %v1243
        %1499 = vmatpush1.bf16.msra.mxu0 %v1242
        %1500 = vmatprep.mubr.bf16.mxu0 %v561
        %1501 = vmatmul.mubr.bf16.gmra.mrb[0].mxu0 %v560
        %v1502 = vpop.f32.mrb[0].mxu0
        %v1503 = vadd.f32 %v821, %v1502
        %v1504 = vpop.f32.mrb[0].mxu0
        %v1505 = vadd.f32 %v825, %v1504
        %v1506 = vpop.f32.mrb[0].mxu0
        %v1507 = vadd.f32 %v821, %v1506
        %v1508 = vpop.f32.mrb[0].mxu0
        %v1509 = vadd.f32 %v825, %v1508
        %1510 = vmatprep.mubr.bf16.mxu0 %v569
        %1511 = vmatmul.mubr.bf16.gmra.mrb[0].mxu0 %v568
        %v1512 = vpop.f32.mrb[0].mxu0
        %v1513 = vadd.f32 %v821, %v1512
        %v1514 = vpop.f32.mrb[0].mxu0
        %v1515 = vadd.f32 %v825, %v1514
        %v1516 = vpop.f32.mrb[0].mxu0
        %v1517 = vadd.f32 %v821, %v1516
        %v1518 = vpop.f32.mrb[0].mxu0
        %v1519 = vadd.f32 %v825, %v1518
        %1520 = vmatprep.mubr.bf16.mxu0 %v577
        %1521 = vmatmul.mubr.bf16.gmra.mrb[0].mxu0 %v576
        %v1522 = vpop.f32.mrb[0].mxu0
        %v1523 = vadd.f32 %v821, %v1522
        %v1524 = vpop.f32.mrb[0].mxu0
        %v1525 = vadd.f32 %v825, %v1524
        %v1526 = vpop.f32.mrb[0].mxu0
        %v1527 = vadd.f32 %v821, %v1526
        %v1528 = vpop.f32.mrb[0].mxu0
        %v1529 = vadd.f32 %v825, %v1528
        %1530 = vmatprep.mubr.bf16.mxu0 %v585
        %1531 = vmatmul.mubr.bf16.gmra.mrb[0].mxu0 %v584
        %v1532 = vpop.f32.mrb[0].mxu0
        %v1533 = vadd.f32 %v821, %v1532
        %v1534 = vpop.f32.mrb[0].mxu0
        %v1535 = vadd.f32 %v825, %v1534
        %v1536 = vpop.f32.mrb[0].mxu0
        %v1537 = vadd.f32 %v821, %v1536
        %v1538 = vpop.f32.mrb[0].mxu0
        %v1539 = vadd.f32 %v825, %v1538
        %1540 = vmatprep.mubr.bf16.mxu0 %v593
        %1541 = vmatmul.mubr.bf16.gmra.mrb[0].mxu0 %v592
        %v1542 = vpop.f32.mrb[0].mxu0
        %v1543 = vadd.f32 %v821, %v1542
        %v1544 = vpop.f32.mrb[0].mxu0
        %v1545 = vadd.f32 %v825, %v1544
        %v1546 = vpop.f32.mrb[0].mxu0
        %v1547 = vadd.f32 %v821, %v1546
        %v1548 = vpop.f32.mrb[0].mxu0
        %v1549 = vadd.f32 %v825, %v1548
        %1550 = vmatprep.mubr.bf16.mxu0 %v601
        %1551 = vmatmul.mubr.bf16.gmra.mrb[0].mxu0 %v600
        %v1552 = vpop.f32.mrb[0].mxu0
        %v1553 = vadd.f32 %v821, %v1552
        %v1554 = vpop.f32.mrb[0].mxu0
        %v1555 = vadd.f32 %v825, %v1554
        %v1556 = vpop.f32.mrb[0].mxu0
        %v1557 = vadd.f32 %v821, %v1556
        %v1558 = vpop.f32.mrb[0].mxu0
        %v1559 = vadd.f32 %v825, %v1558
        %1560 = vmatprep.mubr.bf16.mxu0 %v609
        %1561 = vmatmul.mubr.bf16.gmra.mrb[0].mxu0 %v608
        %v1562 = vpop.f32.mrb[0].mxu0
        %v1563 = vadd.f32 %v821, %v1562
        %v1564 = vpop.f32.mrb[0].mxu0
        %v1565 = vadd.f32 %v825, %v1564
        %v1566 = vpop.f32.mrb[0].mxu0
        %v1567 = vadd.f32 %v821, %v1566
        %v1568 = vpop.f32.mrb[0].mxu0
        %v1569 = vadd.f32 %v825, %v1568
        %1570 = vmatprep.mubr.bf16.mxu0 %v617
        %1571 = vmatmul.mubr.bf16.gmra.mrb[0].mxu0 %v616
        %v1572 = vpop.f32.mrb[0].mxu0
        %v1573 = vadd.f32 %v821, %v1572
        %v1574 = vpop.f32.mrb[0].mxu0
        %v1575 = vadd.f32 %v825, %v1574
        %v1576 = vpop.f32.mrb[0].mxu0
        %v1577 = vadd.f32 %v821, %v1576
        %v1578 = vpop.f32.mrb[0].mxu0
        %v1579 = vadd.f32 %v825, %v1578
        %1580 = vmatprep.mubr.bf16.mxu0 %v625
        %1581 = vmatmul.mubr.bf16.gmra.mrb[0].mxu0 %v624
        %v1582 = vpop.f32.mrb[0].mxu0
        %v1583 = vadd.f32 %v821, %v1582
        %v1584 = vpop.f32.mrb[0].mxu0
        %v1585 = vadd.f32 %v825, %v1584
        %v1586 = vpop.f32.mrb[0].mxu0
        %v1587 = vadd.f32 %v821, %v1586
        %v1588 = vpop.f32.mrb[0].mxu0
        %v1589 = vadd.f32 %v825, %v1588
        %1590 = vmatprep.mubr.bf16.mxu0 %v633
        %1591 = vmatmul.mubr.bf16.gmra.mrb[0].mxu0 %v632
        %v1592 = vpop.f32.mrb[0].mxu0
        %v1593 = vadd.f32 %v821, %v1592
        %v1594 = vpop.f32.mrb[0].mxu0
        %v1595 = vadd.f32 %v825, %v1594
        %v1596 = vpop.f32.mrb[0].mxu0
        %v1597 = vadd.f32 %v821, %v1596
        %v1598 = vpop.f32.mrb[0].mxu0
        %v1599 = vadd.f32 %v825, %v1598
        %1600 = vmatprep.mubr.bf16.mxu0 %v641
        %1601 = vmatmul.mubr.bf16.gmra.mrb[0].mxu0 %v640
        %v1602 = vpop.f32.mrb[0].mxu0
        %v1603 = vadd.f32 %v821, %v1602
        %v1604 = vpop.f32.mrb[0].mxu0
        %v1605 = vadd.f32 %v825, %v1604
        %v1606 = vpop.f32.mrb[0].mxu0
        %v1607 = vadd.f32 %v821, %v1606
        %v1608 = vpop.f32.mrb[0].mxu0
        %v1609 = vadd.f32 %v825, %v1608
        %1610 = vmatprep.mubr.bf16.mxu0 %v649
        %1611 = vmatmul.mubr.bf16.gmra.mrb[0].mxu0 %v648
        %v1612 = vpop.f32.mrb[0].mxu0
        %v1613 = vadd.f32 %v821, %v1612
        %v1614 = vpop.f32.mrb[0].mxu0
        %v1615 = vadd.f32 %v825, %v1614
        %v1616 = vpop.f32.mrb[0].mxu0
        %v1617 = vadd.f32 %v821, %v1616
        %v1618 = vpop.f32.mrb[0].mxu0
        %v1619 = vadd.f32 %v825, %v1618
        %1620 = vmatprep.mubr.bf16.mxu0 %v657
        %1621 = vmatmul.mubr.bf16.gmra.mrb[0].mxu0 %v656
        %v1622 = vpop.f32.mrb[0].mxu0
        %v1623 = vadd.f32 %v821, %v1622
        %v1624 = vpop.f32.mrb[0].mxu0
        %v1625 = vadd.f32 %v825, %v1624
        %v1626 = vpop.f32.mrb[0].mxu0
        %v1627 = vadd.f32 %v821, %v1626
        %v1628 = vpop.f32.mrb[0].mxu0
        %v1629 = vadd.f32 %v825, %v1628
        %1630 = vmatprep.mubr.bf16.mxu0 %v665
        %1631 = vmatmul.mubr.bf16.gmra.mrb[0].mxu0 %v664
        %v1632 = vpop.f32.mrb[0].mxu0
        %v1633 = vadd.f32 %v821, %v1632
        %v1634 = vpop.f32.mrb[0].mxu0
        %v1635 = vadd.f32 %v825, %v1634
        %v1636 = vpop.f32.mrb[0].mxu0
        %v1637 = vadd.f32 %v821, %v1636
        %v1638 = vpop.f32.mrb[0].mxu0
        %v1639 = vadd.f32 %v825, %v1638
        %1640 = vmatprep.mubr.bf16.mxu0 %v673
        %1641 = vmatmul.mubr.bf16.gmra.mrb[0].mxu0 %v672
        %v1642 = vpop.f32.mrb[0].mxu0
        %v1643 = vadd.f32 %v821, %v1642
        %v1644 = vpop.f32.mrb[0].mxu0
        %v1645 = vadd.f32 %v825, %v1644
        %v1646 = vpop.f32.mrb[0].mxu0
        %v1647 = vadd.f32 %v821, %v1646
        %v1648 = vpop.f32.mrb[0].mxu0
        %v1649 = vadd.f32 %v825, %v1648
        %1650 = vmatprep.mubr.bf16.mxu0 %v681
        %1651 = vmatmul.mubr.bf16.gmra.mrb[0].mxu0 %v680
        %v1652 = vpop.f32.mrb[0].mxu0
        %v1653 = vadd.f32 %v821, %v1652
        %v1654 = vpop.f32.mrb[0].mxu0
        %v1655 = vadd.f32 %v825, %v1654
        %v1656 = vpop.f32.mrb[0].mxu0
        %v1657 = vadd.f32 %v821, %v1656
        %v1658 = vpop.f32.mrb[0].mxu0
        %v1659 = vadd.f32 %v825, %v1658
        %1660 = vdwg.mxu0
        %1661 = vmatprep.subr.bf16.mxu0 %v1245
        %1662 = vmatpush1.bf16.msra.mxu0 %v1244
        %1663 = vmatprep.subr.bf16.mxu0 %v1247
        %1664 = vmatpush1.bf16.msra.mxu0 %v1246
        %1665 = vmatprep.subr.bf16.mxu0 %v1249
        %1666 = vmatpush1.bf16.msra.mxu0 %v1248
        %1667 = vmatprep.subr.bf16.mxu0 %v1251
        %1668 = vmatpush1.bf16.msra.mxu0 %v1250
        %1669 = vmatprep.subr.bf16.mxu0 %v1253
        %1670 = vmatpush1.bf16.msra.mxu0 %v1252
        %1671 = vmatprep.subr.bf16.mxu0 %v1255
        %1672 = vmatpush1.bf16.msra.mxu0 %v1254
        %1673 = vmatprep.subr.bf16.mxu0 %v1257
        %1674 = vmatpush1.bf16.msra.mxu0 %v1256
        %1675 = vmatprep.subr.bf16.mxu0 %v1259
        %1676 = vmatpush1.bf16.msra.mxu0 %v1258
        %1677 = vmatprep.subr.bf16.mxu0 %v1261
        %1678 = vmatpush1.bf16.msra.mxu0 %v1260
        %1679 = vmatprep.subr.bf16.mxu0 %v1263
        %1680 = vmatpush1.bf16.msra.mxu0 %v1262
        %1681 = vmatprep.subr.bf16.mxu0 %v1265
        %1682 = vmatpush1.bf16.msra.mxu0 %v1264
        %1683 = vmatprep.subr.bf16.mxu0 %v1267
        %1684 = vmatpush1.bf16.msra.mxu0 %v1266
        %1685 = vmatprep.subr.bf16.mxu0 %v1269
        %1686 = vmatpush1.bf16.msra.mxu0 %v1268
        %1687 = vmatprep.subr.bf16.mxu0 %v1271
        %1688 = vmatpush1.bf16.msra.mxu0 %v1270
        %1689 = vmatprep.subr.bf16.mxu0 %v1273
        %1690 = vmatpush1.bf16.msra.mxu0 %v1272
        %1691 = vmatprep.subr.bf16.mxu0 %v1275
        %1692 = vmatpush1.bf16.msra.mxu0 %v1274
        %1693 = vmatprep.mubr.bf16.mxu0 %v563
        %1694 = vmatmul.mubr.bf16.gmra.mrb[0].mxu0 %v562
        %v1695 = vpop.f32.mrb[0].mxu0
        %v1696 = vadd.f32 %v1503, %v1695
        %v1697 = vpop.f32.mrb[0].mxu0
        %v1698 = vadd.f32 %v1505, %v1697
        %v1699 = vpop.f32.mrb[0].mxu0
        %v1700 = vadd.f32 %v1507, %v1699
        %v1701 = vpop.f32.mrb[0].mxu0
        %v1702 = vadd.f32 %v1509, %v1701
        %1703 = vmatprep.mubr.bf16.mxu0 %v571
        %1704 = vmatmul.mubr.bf16.gmra.mrb[0].mxu0 %v570
        %v1705 = vpop.f32.mrb[0].mxu0
        %v1706 = vadd.f32 %v1513, %v1705
        %v1707 = vpop.f32.mrb[0].mxu0
        %v1708 = vadd.f32 %v1515, %v1707
        %v1709 = vpop.f32.mrb[0].mxu0
        %v1710 = vadd.f32 %v1517, %v1709
        %v1711 = vpop.f32.mrb[0].mxu0
        %v1712 = vadd.f32 %v1519, %v1711
        %1713 = vmatprep.mubr.bf16.mxu0 %v579
        %1714 = vmatmul.mubr.bf16.gmra.mrb[0].mxu0 %v578
        %v1715 = vpop.f32.mrb[0].mxu0
        %v1716 = vadd.f32 %v1523, %v1715
        %v1717 = vpop.f32.mrb[0].mxu0
        %v1718 = vadd.f32 %v1525, %v1717
        %v1719 = vpop.f32.mrb[0].mxu0
        %v1720 = vadd.f32 %v1527, %v1719
        %v1721 = vpop.f32.mrb[0].mxu0
        %v1722 = vadd.f32 %v1529, %v1721
        %1723 = vmatprep.mubr.bf16.mxu0 %v587
        %1724 = vmatmul.mubr.bf16.gmra.mrb[0].mxu0 %v586
        %v1725 = vpop.f32.mrb[0].mxu0
        %v1726 = vadd.f32 %v1533, %v1725
        %v1727 = vpop.f32.mrb[0].mxu0
        %v1728 = vadd.f32 %v1535, %v1727
        %v1729 = vpop.f32.mrb[0].mxu0
        %v1730 = vadd.f32 %v1537, %v1729
        %v1731 = vpop.f32.mrb[0].mxu0
        %v1732 = vadd.f32 %v1539, %v1731
        %1733 = vmatprep.mubr.bf16.mxu0 %v595
        %1734 = vmatmul.mubr.bf16.gmra.mrb[0].mxu0 %v594
        %v1735 = vpop.f32.mrb[0].mxu0
        %v1736 = vadd.f32 %v1543, %v1735
        %v1737 = vpop.f32.mrb[0].mxu0
        %v1738 = vadd.f32 %v1545, %v1737
        %v1739 = vpop.f32.mrb[0].mxu0
        %v1740 = vadd.f32 %v1547, %v1739
        %v1741 = vpop.f32.mrb[0].mxu0
        %v1742 = vadd.f32 %v1549, %v1741
        %1743 = vmatprep.mubr.bf16.mxu0 %v603
        %1744 = vmatmul.mubr.bf16.gmra.mrb[0].mxu0 %v602
        %v1745 = vpop.f32.mrb[0].mxu0
        %v1746 = vadd.f32 %v1553, %v1745
        %v1747 = vpop.f32.mrb[0].mxu0
        %v1748 = vadd.f32 %v1555, %v1747
        %v1749 = vpop.f32.mrb[0].mxu0
        %v1750 = vadd.f32 %v1557, %v1749
        %v1751 = vpop.f32.mrb[0].mxu0
        %v1752 = vadd.f32 %v1559, %v1751
        %1753 = vmatprep.mubr.bf16.mxu0 %v611
        %1754 = vmatmul.mubr.bf16.gmra.mrb[0].mxu0 %v610
        %v1755 = vpop.f32.mrb[0].mxu0
        %v1756 = vadd.f32 %v1563, %v1755
        %v1757 = vpop.f32.mrb[0].mxu0
        %v1758 = vadd.f32 %v1565, %v1757
        %v1759 = vpop.f32.mrb[0].mxu0
        %v1760 = vadd.f32 %v1567, %v1759
        %v1761 = vpop.f32.mrb[0].mxu0
        %v1762 = vadd.f32 %v1569, %v1761
        %1763 = vmatprep.mubr.bf16.mxu0 %v619
        %1764 = vmatmul.mubr.bf16.gmra.mrb[0].mxu0 %v618
        %v1765 = vpop.f32.mrb[0].mxu0
        %v1766 = vadd.f32 %v1573, %v1765
        %v1767 = vpop.f32.mrb[0].mxu0
        %v1768 = vadd.f32 %v1575, %v1767
        %v1769 = vpop.f32.mrb[0].mxu0
        %v1770 = vadd.f32 %v1577, %v1769
        %v1771 = vpop.f32.mrb[0].mxu0
        %v1772 = vadd.f32 %v1579, %v1771
        %1773 = vmatprep.mubr.bf16.mxu0 %v627
        %1774 = vmatmul.mubr.bf16.gmra.mrb[0].mxu0 %v626
        %v1775 = vpop.f32.mrb[0].mxu0
        %v1776 = vadd.f32 %v1583, %v1775
        %v1777 = vpop.f32.mrb[0].mxu0
        %v1778 = vadd.f32 %v1585, %v1777
        %v1779 = vpop.f32.mrb[0].mxu0
        %v1780 = vadd.f32 %v1587, %v1779
        %v1781 = vpop.f32.mrb[0].mxu0
        %v1782 = vadd.f32 %v1589, %v1781
        %1783 = vmatprep.mubr.bf16.mxu0 %v635
        %1784 = vmatmul.mubr.bf16.gmra.mrb[0].mxu0 %v634
        %v1785 = vpop.f32.mrb[0].mxu0
        %v1786 = vadd.f32 %v1593, %v1785
        %v1787 = vpop.f32.mrb[0].mxu0
        %v1788 = vadd.f32 %v1595, %v1787
        %v1789 = vpop.f32.mrb[0].mxu0
        %v1790 = vadd.f32 %v1597, %v1789
        %v1791 = vpop.f32.mrb[0].mxu0
        %v1792 = vadd.f32 %v1599, %v1791
        %1793 = vmatprep.mubr.bf16.mxu0 %v643
        %1794 = vmatmul.mubr.bf16.gmra.mrb[0].mxu0 %v642
        %v1795 = vpop.f32.mrb[0].mxu0
        %v1796 = vadd.f32 %v1603, %v1795
        %v1797 = vpop.f32.mrb[0].mxu0
        %v1798 = vadd.f32 %v1605, %v1797
        %v1799 = vpop.f32.mrb[0].mxu0
        %v1800 = vadd.f32 %v1607, %v1799
        %v1801 = vpop.f32.mrb[0].mxu0
        %v1802 = vadd.f32 %v1609, %v1801
        %1803 = vmatprep.mubr.bf16.mxu0 %v651
        %1804 = vmatmul.mubr.bf16.gmra.mrb[0].mxu0 %v650
        %v1805 = vpop.f32.mrb[0].mxu0
        %v1806 = vadd.f32 %v1613, %v1805
        %v1807 = vpop.f32.mrb[0].mxu0
        %v1808 = vadd.f32 %v1615, %v1807
        %v1809 = vpop.f32.mrb[0].mxu0
        %v1810 = vadd.f32 %v1617, %v1809
        %v1811 = vpop.f32.mrb[0].mxu0
        %v1812 = vadd.f32 %v1619, %v1811
        %1813 = vmatprep.mubr.bf16.mxu0 %v659
        %1814 = vmatmul.mubr.bf16.gmra.mrb[0].mxu0 %v658
        %v1815 = vpop.f32.mrb[0].mxu0
        %v1816 = vadd.f32 %v1623, %v1815
        %v1817 = vpop.f32.mrb[0].mxu0
        %v1818 = vadd.f32 %v1625, %v1817
        %v1819 = vpop.f32.mrb[0].mxu0
        %v1820 = vadd.f32 %v1627, %v1819
        %v1821 = vpop.f32.mrb[0].mxu0
        %v1822 = vadd.f32 %v1629, %v1821
        %1823 = vmatprep.mubr.bf16.mxu0 %v667
        %1824 = vmatmul.mubr.bf16.gmra.mrb[0].mxu0 %v666
        %v1825 = vpop.f32.mrb[0].mxu0
        %v1826 = vadd.f32 %v1633, %v1825
        %v1827 = vpop.f32.mrb[0].mxu0
        %v1828 = vadd.f32 %v1635, %v1827
        %v1829 = vpop.f32.mrb[0].mxu0
        %v1830 = vadd.f32 %v1637, %v1829
        %v1831 = vpop.f32.mrb[0].mxu0
        %v1832 = vadd.f32 %v1639, %v1831
        %1833 = vmatprep.mubr.bf16.mxu0 %v675
        %1834 = vmatmul.mubr.bf16.gmra.mrb[0].mxu0 %v674
        %v1835 = vpop.f32.mrb[0].mxu0
        %v1836 = vadd.f32 %v1643, %v1835
        %v1837 = vpop.f32.mrb[0].mxu0
        %v1838 = vadd.f32 %v1645, %v1837
        %v1839 = vpop.f32.mrb[0].mxu0
        %v1840 = vadd.f32 %v1647, %v1839
        %v1841 = vpop.f32.mrb[0].mxu0
        %v1842 = vadd.f32 %v1649, %v1841
        %1843 = vmatprep.mubr.bf16.mxu0 %v683
        %1844 = vmatmul.mubr.bf16.gmra.mrb[0].mxu0 %v682
        %v1845 = vpop.f32.mrb[0].mxu0
        %v1846 = vadd.f32 %v1653, %v1845
        %v1847 = vpop.f32.mrb[0].mxu0
        %v1848 = vadd.f32 %v1655, %v1847
        %v1849 = vpop.f32.mrb[0].mxu0
        %v1850 = vadd.f32 %v1657, %v1849
        %v1851 = vpop.f32.mrb[0].mxu0
        %v1852 = vadd.f32 %v1659, %v1851
        %1853 = vdwg.mxu0
        %1854 = vmatprep.subr.bf16.mxu0 %v1277
        %1855 = vmatpush1.bf16.msra.mxu0 %v1276
        %1856 = vmatprep.subr.bf16.mxu0 %v1279
        %1857 = vmatpush1.bf16.msra.mxu0 %v1278
        %1858 = vmatprep.subr.bf16.mxu0 %v1281
        %1859 = vmatpush1.bf16.msra.mxu0 %v1280
        %1860 = vmatprep.subr.bf16.mxu0 %v1283
        %1861 = vmatpush1.bf16.msra.mxu0 %v1282
        %1862 = vmatprep.subr.bf16.mxu0 %v1285
        %1863 = vmatpush1.bf16.msra.mxu0 %v1284
        %1864 = vmatprep.subr.bf16.mxu0 %v1287
        %1865 = vmatpush1.bf16.msra.mxu0 %v1286
        %1866 = vmatprep.subr.bf16.mxu0 %v1289
        %1867 = vmatpush1.bf16.msra.mxu0 %v1288
        %1868 = vmatprep.subr.bf16.mxu0 %v1291
        %1869 = vmatpush1.bf16.msra.mxu0 %v1290
        %1870 = vmatprep.subr.bf16.mxu0 %v1293
        %1871 = vmatpush1.bf16.msra.mxu0 %v1292
        %1872 = vmatprep.subr.bf16.mxu0 %v1295
        %1873 = vmatpush1.bf16.msra.mxu0 %v1294
        %1874 = vmatprep.subr.bf16.mxu0 %v1297
        %1875 = vmatpush1.bf16.msra.mxu0 %v1296
        %1876 = vmatprep.subr.bf16.mxu0 %v1299
        %1877 = vmatpush1.bf16.msra.mxu0 %v1298
        %1878 = vmatprep.subr.bf16.mxu0 %v1301
        %1879 = vmatpush1.bf16.msra.mxu0 %v1300
        %1880 = vmatprep.subr.bf16.mxu0 %v1303
        %1881 = vmatpush1.bf16.msra.mxu0 %v1302
        %1882 = vmatprep.subr.bf16.mxu0 %v1305
        %1883 = vmatpush1.bf16.msra.mxu0 %v1304
        %1884 = vmatprep.subr.bf16.mxu0 %v1307
        %1885 = vmatpush1.bf16.msra.mxu0 %v1306
        %1886 = vmatprep.mubr.bf16.mxu0 %v565
        %1887 = vmatmul.mubr.bf16.gmra.mrb[0].mxu0 %v564
        %v1888 = vpop.f32.mrb[0].mxu0
        %v1889 = vadd.f32 %v1696, %v1888
        %v1890 = vpop.f32.mrb[0].mxu0
        %v1891 = vadd.f32 %v1698, %v1890
        %v1892 = vpop.f32.mrb[0].mxu0
        %v1893 = vadd.f32 %v1700, %v1892
        %v1894 = vpop.f32.mrb[0].mxu0
        %v1895 = vadd.f32 %v1702, %v1894
        %1896 = vmatprep.mubr.bf16.mxu0 %v573
        %1897 = vmatmul.mubr.bf16.gmra.mrb[0].mxu0 %v572
        %v1898 = vpop.f32.mrb[0].mxu0
        %v1899 = vadd.f32 %v1706, %v1898
        %v1900 = vpop.f32.mrb[0].mxu0
        %v1901 = vadd.f32 %v1708, %v1900
        %v1902 = vpop.f32.mrb[0].mxu0
        %v1903 = vadd.f32 %v1710, %v1902
        %v1904 = vpop.f32.mrb[0].mxu0
        %v1905 = vadd.f32 %v1712, %v1904
        %1906 = vmatprep.mubr.bf16.mxu0 %v581
        %1907 = vmatmul.mubr.bf16.gmra.mrb[0].mxu0 %v580
        %v1908 = vpop.f32.mrb[0].mxu0
        %v1909 = vadd.f32 %v1716, %v1908
        %v1910 = vpop.f32.mrb[0].mxu0
        %v1911 = vadd.f32 %v1718, %v1910
        %v1912 = vpop.f32.mrb[0].mxu0
        %v1913 = vadd.f32 %v1720, %v1912
        %v1914 = vpop.f32.mrb[0].mxu0
        %v1915 = vadd.f32 %v1722, %v1914
        %1916 = vmatprep.mubr.bf16.mxu0 %v589
        %1917 = vmatmul.mubr.bf16.gmra.mrb[0].mxu0 %v588
        %v1918 = vpop.f32.mrb[0].mxu0
        %v1919 = vadd.f32 %v1726, %v1918
        %v1920 = vpop.f32.mrb[0].mxu0
        %v1921 = vadd.f32 %v1728, %v1920
        %v1922 = vpop.f32.mrb[0].mxu0
        %v1923 = vadd.f32 %v1730, %v1922
        %v1924 = vpop.f32.mrb[0].mxu0
        %v1925 = vadd.f32 %v1732, %v1924
        %1926 = vmatprep.mubr.bf16.mxu0 %v597
        %1927 = vmatmul.mubr.bf16.gmra.mrb[0].mxu0 %v596
        %v1928 = vpop.f32.mrb[0].mxu0
        %v1929 = vadd.f32 %v1736, %v1928
        %v1930 = vpop.f32.mrb[0].mxu0
        %v1931 = vadd.f32 %v1738, %v1930
        %v1932 = vpop.f32.mrb[0].mxu0
        %v1933 = vadd.f32 %v1740, %v1932
        %v1934 = vpop.f32.mrb[0].mxu0
        %v1935 = vadd.f32 %v1742, %v1934
        %1936 = vmatprep.mubr.bf16.mxu0 %v605
        %1937 = vmatmul.mubr.bf16.gmra.mrb[0].mxu0 %v604
        %v1938 = vpop.f32.mrb[0].mxu0
        %v1939 = vadd.f32 %v1746, %v1938
        %v1940 = vpop.f32.mrb[0].mxu0
        %v1941 = vadd.f32 %v1748, %v1940
        %v1942 = vpop.f32.mrb[0].mxu0
        %v1943 = vadd.f32 %v1750, %v1942
        %v1944 = vpop.f32.mrb[0].mxu0
        %v1945 = vadd.f32 %v1752, %v1944
        %1946 = vmatprep.mubr.bf16.mxu0 %v613
        %1947 = vmatmul.mubr.bf16.gmra.mrb[0].mxu0 %v612
        %v1948 = vpop.f32.mrb[0].mxu0
        %v1949 = vadd.f32 %v1756, %v1948
        %v1950 = vpop.f32.mrb[0].mxu0
        %v1951 = vadd.f32 %v1758, %v1950
        %v1952 = vpop.f32.mrb[0].mxu0
        %v1953 = vadd.f32 %v1760, %v1952
        %v1954 = vpop.f32.mrb[0].mxu0
        %v1955 = vadd.f32 %v1762, %v1954
        %1956 = vmatprep.mubr.bf16.mxu0 %v621
        %1957 = vmatmul.mubr.bf16.gmra.mrb[0].mxu0 %v620
        %v1958 = vpop.f32.mrb[0].mxu0
        %v1959 = vadd.f32 %v1766, %v1958
        %v1960 = vpop.f32.mrb[0].mxu0
        %v1961 = vadd.f32 %v1768, %v1960
        %v1962 = vpop.f32.mrb[0].mxu0
        %v1963 = vadd.f32 %v1770, %v1962
        %v1964 = vpop.f32.mrb[0].mxu0
        %v1965 = vadd.f32 %v1772, %v1964
        %1966 = vmatprep.mubr.bf16.mxu0 %v629
        %1967 = vmatmul.mubr.bf16.gmra.mrb[0].mxu0 %v628
        %v1968 = vpop.f32.mrb[0].mxu0
        %v1969 = vadd.f32 %v1776, %v1968
        %v1970 = vpop.f32.mrb[0].mxu0
        %v1971 = vadd.f32 %v1778, %v1970
        %v1972 = vpop.f32.mrb[0].mxu0
        %v1973 = vadd.f32 %v1780, %v1972
        %v1974 = vpop.f32.mrb[0].mxu0
        %v1975 = vadd.f32 %v1782, %v1974
        %1976 = vmatprep.mubr.bf16.mxu0 %v637
        %1977 = vmatmul.mubr.bf16.gmra.mrb[0].mxu0 %v636
        %v1978 = vpop.f32.mrb[0].mxu0
        %v1979 = vadd.f32 %v1786, %v1978
        %v1980 = vpop.f32.mrb[0].mxu0
        %v1981 = vadd.f32 %v1788, %v1980
        %v1982 = vpop.f32.mrb[0].mxu0
        %v1983 = vadd.f32 %v1790, %v1982
        %v1984 = vpop.f32.mrb[0].mxu0
        %v1985 = vadd.f32 %v1792, %v1984
        %1986 = vmatprep.mubr.bf16.mxu0 %v645
        %1987 = vmatmul.mubr.bf16.gmra.mrb[0].mxu0 %v644
        %v1988 = vpop.f32.mrb[0].mxu0
        %v1989 = vadd.f32 %v1796, %v1988
        %v1990 = vpop.f32.mrb[0].mxu0
        %v1991 = vadd.f32 %v1798, %v1990
        %v1992 = vpop.f32.mrb[0].mxu0
        %v1993 = vadd.f32 %v1800, %v1992
        %v1994 = vpop.f32.mrb[0].mxu0
        %v1995 = vadd.f32 %v1802, %v1994
        %1996 = vmatprep.mubr.bf16.mxu0 %v653
        %1997 = vmatmul.mubr.bf16.gmra.mrb[0].mxu0 %v652
        %v1998 = vpop.f32.mrb[0].mxu0
        %v1999 = vadd.f32 %v1806, %v1998
        %v2000 = vpop.f32.mrb[0].mxu0
        %v2001 = vadd.f32 %v1808, %v2000
        %v2002 = vpop.f32.mrb[0].mxu0
        %v2003 = vadd.f32 %v1810, %v2002
        %v2004 = vpop.f32.mrb[0].mxu0
        %v2005 = vadd.f32 %v1812, %v2004
        %2006 = vmatprep.mubr.bf16.mxu0 %v661
        %2007 = vmatmul.mubr.bf16.gmra.mrb[0].mxu0 %v660
        %v2008 = vpop.f32.mrb[0].mxu0
        %v2009 = vadd.f32 %v1816, %v2008
        %v2010 = vpop.f32.mrb[0].mxu0
        %v2011 = vadd.f32 %v1818, %v2010
        %v2012 = vpop.f32.mrb[0].mxu0
        %v2013 = vadd.f32 %v1820, %v2012
        %v2014 = vpop.f32.mrb[0].mxu0
        %v2015 = vadd.f32 %v1822, %v2014
        %2016 = vmatprep.mubr.bf16.mxu0 %v669
        %2017 = vmatmul.mubr.bf16.gmra.mrb[0].mxu0 %v668
        %v2018 = vpop.f32.mrb[0].mxu0
        %v2019 = vadd.f32 %v1826, %v2018
        %v2020 = vpop.f32.mrb[0].mxu0
        %v2021 = vadd.f32 %v1828, %v2020
        %v2022 = vpop.f32.mrb[0].mxu0
        %v2023 = vadd.f32 %v1830, %v2022
        %v2024 = vpop.f32.mrb[0].mxu0
        %v2025 = vadd.f32 %v1832, %v2024
        %2026 = vmatprep.mubr.bf16.mxu0 %v677
        %2027 = vmatmul.mubr.bf16.gmra.mrb[0].mxu0 %v676
        %v2028 = vpop.f32.mrb[0].mxu0
        %v2029 = vadd.f32 %v1836, %v2028
        %v2030 = vpop.f32.mrb[0].mxu0
        %v2031 = vadd.f32 %v1838, %v2030
        %v2032 = vpop.f32.mrb[0].mxu0
        %v2033 = vadd.f32 %v1840, %v2032
        %v2034 = vpop.f32.mrb[0].mxu0
        %v2035 = vadd.f32 %v1842, %v2034
        %2036 = vmatprep.mubr.bf16.mxu0 %v685
        %2037 = vmatmul.mubr.bf16.gmra.mrb[0].mxu0 %v684
        %v2038 = vpop.f32.mrb[0].mxu0
        %v2039 = vadd.f32 %v1846, %v2038
        %v2040 = vpop.f32.mrb[0].mxu0
        %v2041 = vadd.f32 %v1848, %v2040
        %v2042 = vpop.f32.mrb[0].mxu0
        %v2043 = vadd.f32 %v1850, %v2042
        %v2044 = vpop.f32.mrb[0].mxu0
        %v2045 = vadd.f32 %v1852, %v2044
        %2046 = vdwg.mxu0
        %2047 = vmatprep.subr.bf16.mxu0 %v1309
        %2048 = vmatpush1.bf16.msra.mxu0 %v1308
        %2049 = vmatprep.subr.bf16.mxu0 %v1311
        %2050 = vmatpush1.bf16.msra.mxu0 %v1310
        %2051 = vmatprep.subr.bf16.mxu0 %v1313
        %2052 = vmatpush1.bf16.msra.mxu0 %v1312
        %2053 = vmatprep.subr.bf16.mxu0 %v1315
        %2054 = vmatpush1.bf16.msra.mxu0 %v1314
        %2055 = vmatprep.subr.bf16.mxu0 %v1317
        %2056 = vmatpush1.bf16.msra.mxu0 %v1316
        %2057 = vmatprep.subr.bf16.mxu0 %v1319
        %2058 = vmatpush1.bf16.msra.mxu0 %v1318
        %2059 = vmatprep.subr.bf16.mxu0 %v1321
        %2060 = vmatpush1.bf16.msra.mxu0 %v1320
        %2061 = vmatprep.subr.bf16.mxu0 %v1323
        %2062 = vmatpush1.bf16.msra.mxu0 %v1322
        %2063 = vmatprep.subr.bf16.mxu0 %v1325
        %2064 = vmatpush1.bf16.msra.mxu0 %v1324
        %2065 = vmatprep.subr.bf16.mxu0 %v1327
        %2066 = vmatpush1.bf16.msra.mxu0 %v1326
        %2067 = vmatprep.subr.bf16.mxu0 %v1329
        %2068 = vmatpush1.bf16.msra.mxu0 %v1328
        %2069 = vmatprep.subr.bf16.mxu0 %v1331
        %2070 = vmatpush1.bf16.msra.mxu0 %v1330
        %2071 = vmatprep.subr.bf16.mxu0 %v1333
        %2072 = vmatpush1.bf16.msra.mxu0 %v1332
        %2073 = vmatprep.subr.bf16.mxu0 %v1335
        %2074 = vmatpush1.bf16.msra.mxu0 %v1334
        %2075 = vmatprep.subr.bf16.mxu0 %v1337
        %2076 = vmatpush1.bf16.msra.mxu0 %v1336
        %2077 = vmatprep.subr.bf16.mxu0 %v1339
        %2078 = vmatpush1.bf16.msra.mxu0 %v1338
        %2079 = vmatprep.mubr.bf16.mxu0 %v567
        %2080 = vmatmul.mubr.bf16.gmra.mrb[0].mxu0 %v566
        %v2081 = vpop.f32.mrb[0].mxu0
        %v2082 = vadd.f32 %v1889, %v2081
        %v2083 = vpop.f32.mrb[0].mxu0
        %v2084 = vadd.f32 %v1891, %v2083
        %v2085 = vpop.f32.mrb[0].mxu0
        %v2086 = vadd.f32 %v1893, %v2085
        %v2087 = vpop.f32.mrb[0].mxu0
        %v2088 = vadd.f32 %v1895, %v2087
        %2089 = vmatprep.mubr.bf16.mxu0 %v575
        %2090 = vmatmul.mubr.bf16.gmra.mrb[0].mxu0 %v574
        %v2091 = vpop.f32.mrb[0].mxu0
        %v2092 = vadd.f32 %v1899, %v2091
        %v2093 = vpop.f32.mrb[0].mxu0
        %v2094 = vadd.f32 %v1901, %v2093
        %v2095 = vpop.f32.mrb[0].mxu0
        %v2096 = vadd.f32 %v1903, %v2095
        %v2097 = vpop.f32.mrb[0].mxu0
        %v2098 = vadd.f32 %v1905, %v2097
        %2099 = vmatprep.mubr.bf16.mxu0 %v583
        %2100 = vmatmul.mubr.bf16.gmra.mrb[0].mxu0 %v582
        %v2101 = vpop.f32.mrb[0].mxu0
        %v2102 = vadd.f32 %v1909, %v2101
        %v2103 = vpop.f32.mrb[0].mxu0
        %v2104 = vadd.f32 %v1911, %v2103
        %v2105 = vpop.f32.mrb[0].mxu0
        %v2106 = vadd.f32 %v1913, %v2105
        %v2107 = vpop.f32.mrb[0].mxu0
        %v2108 = vadd.f32 %v1915, %v2107
        %2109 = vmatprep.mubr.bf16.mxu0 %v591
        %2110 = vmatmul.mubr.bf16.gmra.mrb[0].mxu0 %v590
        %v2111 = vpop.f32.mrb[0].mxu0
        %v2112 = vadd.f32 %v1919, %v2111
        %v2113 = vpop.f32.mrb[0].mxu0
        %v2114 = vadd.f32 %v1921, %v2113
        %v2115 = vpop.f32.mrb[0].mxu0
        %v2116 = vadd.f32 %v1923, %v2115
        %v2117 = vpop.f32.mrb[0].mxu0
        %v2118 = vadd.f32 %v1925, %v2117
        %2119 = vmatprep.mubr.bf16.mxu0 %v599
        %2120 = vmatmul.mubr.bf16.gmra.mrb[0].mxu0 %v598
        %v2121 = vpop.f32.mrb[0].mxu0
        %v2122 = vadd.f32 %v1929, %v2121
        %v2123 = vpop.f32.mrb[0].mxu0
        %v2124 = vadd.f32 %v1931, %v2123
        %v2125 = vpop.f32.mrb[0].mxu0
        %v2126 = vadd.f32 %v1933, %v2125
        %v2127 = vpop.f32.mrb[0].mxu0
        %v2128 = vadd.f32 %v1935, %v2127
        %2129 = vmatprep.mubr.bf16.mxu0 %v607
        %2130 = vmatmul.mubr.bf16.gmra.mrb[0].mxu0 %v606
        %v2131 = vpop.f32.mrb[0].mxu0
        %v2132 = vadd.f32 %v1939, %v2131
        %v2133 = vpop.f32.mrb[0].mxu0
        %v2134 = vadd.f32 %v1941, %v2133
        %v2135 = vpop.f32.mrb[0].mxu0
        %v2136 = vadd.f32 %v1943, %v2135
        %v2137 = vpop.f32.mrb[0].mxu0
        %v2138 = vadd.f32 %v1945, %v2137
        %2139 = vmatprep.mubr.bf16.mxu0 %v615
        %2140 = vmatmul.mubr.bf16.gmra.mrb[0].mxu0 %v614
        %v2141 = vpop.f32.mrb[0].mxu0
        %v2142 = vadd.f32 %v1949, %v2141
        %v2143 = vpop.f32.mrb[0].mxu0
        %v2144 = vadd.f32 %v1951, %v2143
        %v2145 = vpop.f32.mrb[0].mxu0
        %v2146 = vadd.f32 %v1953, %v2145
        %v2147 = vpop.f32.mrb[0].mxu0
        %v2148 = vadd.f32 %v1955, %v2147
        %2149 = vmatprep.mubr.bf16.mxu0 %v623
        %2150 = vmatmul.mubr.bf16.gmra.mrb[0].mxu0 %v622
        %v2151 = vpop.f32.mrb[0].mxu0
        %v2152 = vadd.f32 %v1959, %v2151
        %v2153 = vpop.f32.mrb[0].mxu0
        %v2154 = vadd.f32 %v1961, %v2153
        %v2155 = vpop.f32.mrb[0].mxu0
        %v2156 = vadd.f32 %v1963, %v2155
        %v2157 = vpop.f32.mrb[0].mxu0
        %v2158 = vadd.f32 %v1965, %v2157
        %2159 = vmatprep.mubr.bf16.mxu0 %v631
        %2160 = vmatmul.mubr.bf16.gmra.mrb[0].mxu0 %v630
        %v2161 = vpop.f32.mrb[0].mxu0
        %v2162 = vadd.f32 %v1969, %v2161
        %v2163 = vpop.f32.mrb[0].mxu0
        %v2164 = vadd.f32 %v1971, %v2163
        %v2165 = vpop.f32.mrb[0].mxu0
        %v2166 = vadd.f32 %v1973, %v2165
        %v2167 = vpop.f32.mrb[0].mxu0
        %v2168 = vadd.f32 %v1975, %v2167
        %2169 = vmatprep.mubr.bf16.mxu0 %v639
        %2170 = vmatmul.mubr.bf16.gmra.mrb[0].mxu0 %v638
        %v2171 = vpop.f32.mrb[0].mxu0
        %v2172 = vadd.f32 %v1979, %v2171
        %v2173 = vpop.f32.mrb[0].mxu0
        %v2174 = vadd.f32 %v1981, %v2173
        %v2175 = vpop.f32.mrb[0].mxu0
        %v2176 = vadd.f32 %v1983, %v2175
        %v2177 = vpop.f32.mrb[0].mxu0
        %v2178 = vadd.f32 %v1985, %v2177
        %2179 = vmatprep.mubr.bf16.mxu0 %v647
        %2180 = vmatmul.mubr.bf16.gmra.mrb[0].mxu0 %v646
        %v2181 = vpop.f32.mrb[0].mxu0
        %v2182 = vadd.f32 %v1989, %v2181
        %v2183 = vpop.f32.mrb[0].mxu0
        %v2184 = vadd.f32 %v1991, %v2183
        %v2185 = vpop.f32.mrb[0].mxu0
        %v2186 = vadd.f32 %v1993, %v2185
        %v2187 = vpop.f32.mrb[0].mxu0
        %v2188 = vadd.f32 %v1995, %v2187
        %2189 = vmatprep.mubr.bf16.mxu0 %v655
        %2190 = vmatmul.mubr.bf16.gmra.mrb[0].mxu0 %v654
        %v2191 = vpop.f32.mrb[0].mxu0
        %v2192 = vadd.f32 %v1999, %v2191
        %v2193 = vpop.f32.mrb[0].mxu0
        %v2194 = vadd.f32 %v2001, %v2193
        %v2195 = vpop.f32.mrb[0].mxu0
        %v2196 = vadd.f32 %v2003, %v2195
        %v2197 = vpop.f32.mrb[0].mxu0
        %v2198 = vadd.f32 %v2005, %v2197
        %2199 = vmatprep.mubr.bf16.mxu0 %v663
        %2200 = vmatmul.mubr.bf16.gmra.mrb[0].mxu0 %v662
        %v2201 = vpop.f32.mrb[0].mxu0
        %v2202 = vadd.f32 %v2009, %v2201
        %v2203 = vpop.f32.mrb[0].mxu0
        %v2204 = vadd.f32 %v2011, %v2203
        %v2205 = vpop.f32.mrb[0].mxu0
        %v2206 = vadd.f32 %v2013, %v2205
        %v2207 = vpop.f32.mrb[0].mxu0
        %v2208 = vadd.f32 %v2015, %v2207
        %2209 = vmatprep.mubr.bf16.mxu0 %v671
        %2210 = vmatmul.mubr.bf16.gmra.mrb[0].mxu0 %v670
        %v2211 = vpop.f32.mrb[0].mxu0
        %v2212 = vadd.f32 %v2019, %v2211
        %v2213 = vpop.f32.mrb[0].mxu0
        %v2214 = vadd.f32 %v2021, %v2213
        %v2215 = vpop.f32.mrb[0].mxu0
        %v2216 = vadd.f32 %v2023, %v2215
        %v2217 = vpop.f32.mrb[0].mxu0
        %v2218 = vadd.f32 %v2025, %v2217
        %2219 = vmatprep.mubr.bf16.mxu0 %v679
        %2220 = vmatmul.mubr.bf16.gmra.mrb[0].mxu0 %v678
        %v2221 = vpop.f32.mrb[0].mxu0
        %v2222 = vadd.f32 %v2029, %v2221
        %v2223 = vpop.f32.mrb[0].mxu0
        %v2224 = vadd.f32 %v2031, %v2223
        %v2225 = vpop.f32.mrb[0].mxu0
        %v2226 = vadd.f32 %v2033, %v2225
        %v2227 = vpop.f32.mrb[0].mxu0
        %v2228 = vadd.f32 %v2035, %v2227
        %2229 = vmatprep.mubr.bf16.mxu0 %v687
        %2230 = vmatmul.mubr.bf16.gmra.mrb[0].mxu0 %v686
        %v2231 = vpop.f32.mrb[0].mxu0
        %v2232 = vadd.f32 %v2039, %v2231
        %v2233 = vpop.f32.mrb[0].mxu0
        %v2234 = vadd.f32 %v2041, %v2233
        %v2235 = vpop.f32.mrb[0].mxu0
        %v2236 = vadd.f32 %v2043, %v2235
        %v2237 = vpop.f32.mrb[0].mxu0
        %v2238 = vadd.f32 %v2045, %v2237
        %2239 = vdwg.mxu0
        %v2240 = vtanh.pop %v2082
        %v2241 = vtanh.pop %v2084
        %v2242 = vtanh.pop %v2086
        %v2243 = vtanh.pop %v2088
        %v2244 = vtanh.pop %v2092
        %v2245 = vtanh.pop %v2094
        %v2246 = vtanh.pop %v2096
        %v2247 = vtanh.pop %v2098
        %v2248 = vtanh.pop %v2102
        %v2249 = vtanh.pop %v2104
        %v2250 = vtanh.pop %v2106
        %v2251 = vtanh.pop %v2108
        %v2252 = vtanh.pop %v2112
        %v2253 = vtanh.pop %v2114
        %v2254 = vtanh.pop %v2116
        %v2255 = vtanh.pop %v2118
        %v2256 = vtanh.pop %v2122
        %v2257 = vtanh.pop %v2124
        %v2258 = vtanh.pop %v2126
        %v2259 = vtanh.pop %v2128
        %v2260 = vtanh.pop %v2132
        %v2261 = vtanh.pop %v2134
        %v2262 = vtanh.pop %v2136
        %v2263 = vtanh.pop %v2138
        %v2264 = vtanh.pop %v2142
        %v2265 = vtanh.pop %v2144
        %v2266 = vtanh.pop %v2146
        %v2267 = vtanh.pop %v2148
        %v2268 = vtanh.pop %v2152
        %v2269 = vtanh.pop %v2154
        %v2270 = vtanh.pop %v2156
        %v2271 = vtanh.pop %v2158
        %v2272 = vtanh.pop %v2162
        %v2273 = vtanh.pop %v2164
        %v2274 = vtanh.pop %v2166
        %v2275 = vtanh.pop %v2168
        %v2276 = vtanh.pop %v2172
        %v2277 = vtanh.pop %v2174
        %v2278 = vtanh.pop %v2176
        %v2279 = vtanh.pop %v2178
        %v2280 = vtanh.pop %v2182
        %v2281 = vtanh.pop %v2184
        %v2282 = vtanh.pop %v2186
        %v2283 = vtanh.pop %v2188
        %v2284 = vtanh.pop %v2192
        %v2285 = vtanh.pop %v2194
        %v2286 = vtanh.pop %v2196
        %v2287 = vtanh.pop %v2198
        %v2288 = vtanh.pop %v2202
        %v2289 = vtanh.pop %v2204
        %v2290 = vtanh.pop %v2206
        %v2291 = vtanh.pop %v2208
        %v2292 = vtanh.pop %v2212
        %v2293 = vtanh.pop %v2214
        %v2294 = vtanh.pop %v2216
        %v2295 = vtanh.pop %v2218
        %v2296 = vtanh.pop %v2222
        %v2297 = vtanh.pop %v2224
        %v2298 = vtanh.pop %v2226
        %v2299 = vtanh.pop %v2228
        %v2300 = vtanh.pop %v2232
        %v2301 = vtanh.pop %v2234
        %v2302 = vtanh.pop %v2236
        %v2303 = vtanh.pop %v2238
        %v2304 = vld [vmem:[#allocation9] sm:$0x3]
        %v2306 = vlaneseq
        %v2307 = vshrl.u32 %v2306, 7
        %v2308 = vsub.s32 0, %v2307
        %v2309 = vrot.slane %v2304, %v2308
        %v2310 = vlaneseq
        %v2311 = vshrl.u32 %v2310, 7
        %v2312 = vsub.s32 1, %v2311
        %v2313 = vrot.slane %v2304, %v2312
        %v2316 = vmul.f32 %v2240, %v2309
        %v2317 = vmul.f32 %v2241, %v2313
        %v2318 = vmul.f32 %v2242, %v2309
        %v2319 = vmul.f32 %v2243, %v2313
        %v2320 = vmul.f32 %v2244, %v2309
        %v2321 = vmul.f32 %v2245, %v2313
        %v2322 = vmul.f32 %v2246, %v2309
        %v2323 = vmul.f32 %v2247, %v2313
        %v2324 = vmul.f32 %v2248, %v2309
        %v2325 = vmul.f32 %v2249, %v2313
        %v2326 = vmul.f32 %v2250, %v2309
        %v2327 = vmul.f32 %v2251, %v2313
        %v2328 = vmul.f32 %v2252, %v2309
        %v2329 = vmul.f32 %v2253, %v2313
        %v2330 = vmul.f32 %v2254, %v2309
        %v2331 = vmul.f32 %v2255, %v2313
        %v2332 = vmul.f32 %v2256, %v2309
        %v2333 = vmul.f32 %v2257, %v2313
        %v2334 = vmul.f32 %v2258, %v2309
        %v2335 = vmul.f32 %v2259, %v2313
        %v2336 = vmul.f32 %v2260, %v2309
        %v2337 = vmul.f32 %v2261, %v2313
        %v2338 = vmul.f32 %v2262, %v2309
        %v2339 = vmul.f32 %v2263, %v2313
        %v2340 = vmul.f32 %v2264, %v2309
        %v2341 = vmul.f32 %v2265, %v2313
        %v2342 = vmul.f32 %v2266, %v2309
        %v2343 = vmul.f32 %v2267, %v2313
        %v2344 = vmul.f32 %v2268, %v2309
        %v2345 = vmul.f32 %v2269, %v2313
        %v2346 = vmul.f32 %v2270, %v2309
        %v2347 = vmul.f32 %v2271, %v2313
        %v2348 = vmul.f32 %v2272, %v2309
        %v2349 = vmul.f32 %v2273, %v2313
        %v2350 = vmul.f32 %v2274, %v2309
        %v2351 = vmul.f32 %v2275, %v2313
        %v2352 = vmul.f32 %v2276, %v2309
        %v2353 = vmul.f32 %v2277, %v2313
        %v2354 = vmul.f32 %v2278, %v2309
        %v2355 = vmul.f32 %v2279, %v2313
        %v2356 = vmul.f32 %v2280, %v2309
        %v2357 = vmul.f32 %v2281, %v2313
        %v2358 = vmul.f32 %v2282, %v2309
        %v2359 = vmul.f32 %v2283, %v2313
        %v2360 = vmul.f32 %v2284, %v2309
        %v2361 = vmul.f32 %v2285, %v2313
        %v2362 = vmul.f32 %v2286, %v2309
        %v2363 = vmul.f32 %v2287, %v2313
        %v2364 = vmul.f32 %v2288, %v2309
        %v2365 = vmul.f32 %v2289, %v2313
        %v2366 = vmul.f32 %v2290, %v2309
        %v2367 = vmul.f32 %v2291, %v2313
        %v2368 = vmul.f32 %v2292, %v2309
        %v2369 = vmul.f32 %v2293, %v2313
        %v2370 = vmul.f32 %v2294, %v2309
        %v2371 = vmul.f32 %v2295, %v2313
        %v2372 = vmul.f32 %v2296, %v2309
        %v2373 = vmul.f32 %v2297, %v2313
        %v2374 = vmul.f32 %v2298, %v2309
        %v2375 = vmul.f32 %v2299, %v2313
        %v2376 = vmul.f32 %v2300, %v2309
        %v2377 = vmul.f32 %v2301, %v2313
        %v2378 = vmul.f32 %v2302, %v2309
        %v2379 = vmul.f32 %v2303, %v2313
        %v2380 = vadd.f32 %v2316, %v2317
        %v2381 = vadd.f32 %v2318, %v2319
        %v2382 = vadd.f32 %v2320, %v2321
        %v2383 = vadd.f32 %v2322, %v2323
        %v2384 = vadd.f32 %v2324, %v2325
        %v2385 = vadd.f32 %v2326, %v2327
        %v2386 = vadd.f32 %v2328, %v2329
        %v2387 = vadd.f32 %v2330, %v2331
        %v2388 = vadd.f32 %v2332, %v2333
        %v2389 = vadd.f32 %v2334, %v2335
        %v2390 = vadd.f32 %v2336, %v2337
        %v2391 = vadd.f32 %v2338, %v2339
        %v2392 = vadd.f32 %v2340, %v2341
        %v2393 = vadd.f32 %v2342, %v2343
        %v2394 = vadd.f32 %v2344, %v2345
        %v2395 = vadd.f32 %v2346, %v2347
        %v2396 = vadd.f32 %v2348, %v2349
        %v2397 = vadd.f32 %v2350, %v2351
        %v2398 = vadd.f32 %v2352, %v2353
        %v2399 = vadd.f32 %v2354, %v2355
        %v2400 = vadd.f32 %v2356, %v2357
        %v2401 = vadd.f32 %v2358, %v2359
        %v2402 = vadd.f32 %v2360, %v2361
        %v2403 = vadd.f32 %v2362, %v2363
        %v2404 = vadd.f32 %v2364, %v2365
        %v2405 = vadd.f32 %v2366, %v2367
        %v2406 = vadd.f32 %v2368, %v2369
        %v2407 = vadd.f32 %v2370, %v2371
        %v2408 = vadd.f32 %v2372, %v2373
        %v2409 = vadd.f32 %v2374, %v2375
        %v2410 = vadd.f32 %v2376, %v2377
        %v2411 = vadd.f32 %v2378, %v2379
        %2412 = vadd.xlane.f32.xlu0 %v2380
        %v2413 = vpop.xlane.xlu0 %2412
        %2414 = vadd.xlane.f32.xlu0 %v2381
        %v2415 = vpop.xlane.xlu0 %2414
        %2416 = vadd.xlane.f32.xlu0 %v2382
        %v2417 = vpop.xlane.xlu0 %2416
        %2418 = vadd.xlane.f32.xlu0 %v2383
        %v2419 = vpop.xlane.xlu0 %2418
        %2420 = vadd.xlane.f32.xlu0 %v2384
        %v2421 = vpop.xlane.xlu0 %2420
        %2422 = vadd.xlane.f32.xlu0 %v2385
        %v2423 = vpop.xlane.xlu0 %2422
        %2424 = vadd.xlane.f32.xlu0 %v2386
        %v2425 = vpop.xlane.xlu0 %2424
        %2426 = vadd.xlane.f32.xlu0 %v2387
        %v2427 = vpop.xlane.xlu0 %2426
        %2428 = vadd.xlane.f32.xlu0 %v2388
        %v2429 = vpop.xlane.xlu0 %2428
        %2430 = vadd.xlane.f32.xlu0 %v2389
        %v2431 = vpop.xlane.xlu0 %2430
        %2432 = vadd.xlane.f32.xlu0 %v2390
        %v2433 = vpop.xlane.xlu0 %2432
        %2434 = vadd.xlane.f32.xlu0 %v2391
        %v2435 = vpop.xlane.xlu0 %2434
        %2436 = vadd.xlane.f32.xlu0 %v2392
        %v2437 = vpop.xlane.xlu0 %2436
        %2438 = vadd.xlane.f32.xlu0 %v2393
        %v2439 = vpop.xlane.xlu0 %2438
        %2440 = vadd.xlane.f32.xlu0 %v2394
        %v2441 = vpop.xlane.xlu0 %2440
        %2442 = vadd.xlane.f32.xlu0 %v2395
        %v2443 = vpop.xlane.xlu0 %2442
        %2444 = vadd.xlane.f32.xlu0 %v2396
        %v2445 = vpop.xlane.xlu0 %2444
        %2446 = vadd.xlane.f32.xlu0 %v2397
        %v2447 = vpop.xlane.xlu0 %2446
        %2448 = vadd.xlane.f32.xlu0 %v2398
        %v2449 = vpop.xlane.xlu0 %2448
        %2450 = vadd.xlane.f32.xlu0 %v2399
        %v2451 = vpop.xlane.xlu0 %2450
        %2452 = vadd.xlane.f32.xlu0 %v2400
        %v2453 = vpop.xlane.xlu0 %2452
        %2454 = vadd.xlane.f32.xlu0 %v2401
        %v2455 = vpop.xlane.xlu0 %2454
        %2456 = vadd.xlane.f32.xlu0 %v2402
        %v2457 = vpop.xlane.xlu0 %2456
        %2458 = vadd.xlane.f32.xlu0 %v2403
        %v2459 = vpop.xlane.xlu0 %2458
        %2460 = vadd.xlane.f32.xlu0 %v2404
        %v2461 = vpop.xlane.xlu0 %2460
        %2462 = vadd.xlane.f32.xlu0 %v2405
        %v2463 = vpop.xlane.xlu0 %2462
        %2464 = vadd.xlane.f32.xlu0 %v2406
        %v2465 = vpop.xlane.xlu0 %2464
        %2466 = vadd.xlane.f32.xlu0 %v2407
        %v2467 = vpop.xlane.xlu0 %2466
        %2468 = vadd.xlane.f32.xlu0 %v2408
        %v2469 = vpop.xlane.xlu0 %2468
        %2470 = vadd.xlane.f32.xlu0 %v2409
        %v2471 = vpop.xlane.xlu0 %2470
        %2472 = vadd.xlane.f32.xlu0 %v2410
        %v2473 = vpop.xlane.xlu0 %2472
        %2474 = vadd.xlane.f32.xlu0 %v2411
        %v2475 = vpop.xlane.xlu0 %2474
        %v2476 = vld [vmem:[#allocation2] sm:$0x1]
        %2478 = vset.pattern.permute.xlu0 0
        %2479 = vperm.xlu0 %2478, %v2476
        %v2480 = vpop.permute.xlu0 %2479
        %v2482 = vlaneseq
        %v2483 = vshrl.u32 %v2482, 7
        %v2484 = vsub.s32 0, %v2483
        %v2485 = vrot.slane %v2480, %v2484
        %v2486 = vadd.f32 %v2413, %v2485
        %v2487 = vadd.f32 %v2415, %v2485
        %v2488 = vadd.f32 %v2417, %v2485
        %v2489 = vadd.f32 %v2419, %v2485
        %v2490 = vadd.f32 %v2421, %v2485
        %v2491 = vadd.f32 %v2423, %v2485
        %v2492 = vadd.f32 %v2425, %v2485
        %v2493 = vadd.f32 %v2427, %v2485
        %v2494 = vadd.f32 %v2429, %v2485
        %v2495 = vadd.f32 %v2431, %v2485
        %v2496 = vadd.f32 %v2433, %v2485
        %v2497 = vadd.f32 %v2435, %v2485
        %v2498 = vadd.f32 %v2437, %v2485
        %v2499 = vadd.f32 %v2439, %v2485
        %v2500 = vadd.f32 %v2441, %v2485
        %v2501 = vadd.f32 %v2443, %v2485
        %v2502 = vadd.f32 %v2445, %v2485
        %v2503 = vadd.f32 %v2447, %v2485
        %v2504 = vadd.f32 %v2449, %v2485
        %v2505 = vadd.f32 %v2451, %v2485
        %v2506 = vadd.f32 %v2453, %v2485
        %v2507 = vadd.f32 %v2455, %v2485
        %v2508 = vadd.f32 %v2457, %v2485
        %v2509 = vadd.f32 %v2459, %v2485
        %v2510 = vadd.f32 %v2461, %v2485
        %v2511 = vadd.f32 %v2463, %v2485
        %v2512 = vadd.f32 %v2465, %v2485
        %v2513 = vadd.f32 %v2467, %v2485
        %v2514 = vadd.f32 %v2469, %v2485
        %v2515 = vadd.f32 %v2471, %v2485
        %v2516 = vadd.f32 %v2473, %v2485
        %v2517 = vadd.f32 %v2475, %v2485
        %v2550 = vlaneseq
        %v2551 = vshrl.u32 %v2550, 7
        %v2552 = vsub.s32 0, %v2551
        %v2553 = vrot.slane %v2486, %v2552
        %v2554 = vlaneseq
        %v2555 = vshrl.u32 %v2554, 7
        %v2556 = vsub.s32 1, %v2555
        %v2557 = vrot.slane %v2486, %v2556
        %v2558 = vlaneseq
        %v2559 = vshrl.u32 %v2558, 7
        %v2560 = vsub.s32 2, %v2559
        %v2561 = vrot.slane %v2486, %v2560
        %v2562 = vlaneseq
        %v2563 = vshrl.u32 %v2562, 7
        %v2564 = vsub.s32 3, %v2563
        %v2565 = vrot.slane %v2486, %v2564
        %v2566 = vlaneseq
        %v2567 = vshrl.u32 %v2566, 7
        %v2568 = vsub.s32 4, %v2567
        %v2569 = vrot.slane %v2486, %v2568
        %v2570 = vlaneseq
        %v2571 = vshrl.u32 %v2570, 7
        %v2572 = vsub.s32 5, %v2571
        %v2573 = vrot.slane %v2486, %v2572
        %v2574 = vlaneseq
        %v2575 = vshrl.u32 %v2574, 7
        %v2576 = vsub.s32 6, %v2575
        %v2577 = vrot.slane %v2486, %v2576
        %v2578 = vlaneseq
        %v2579 = vshrl.u32 %v2578, 7
        %v2580 = vsub.s32 7, %v2579
        %v2581 = vrot.slane %v2486, %v2580
        %v2582 = vlaneseq
        %v2583 = vshrl.u32 %v2582, 7
        %v2584 = vsub.s32 0, %v2583
        %v2585 = vrot.slane %v2487, %v2584
        %v2586 = vlaneseq
        %v2587 = vshrl.u32 %v2586, 7
        %v2588 = vsub.s32 1, %v2587
        %v2589 = vrot.slane %v2487, %v2588
        %v2590 = vlaneseq
        %v2591 = vshrl.u32 %v2590, 7
        %v2592 = vsub.s32 2, %v2591
        %v2593 = vrot.slane %v2487, %v2592
        %v2594 = vlaneseq
        %v2595 = vshrl.u32 %v2594, 7
        %v2596 = vsub.s32 3, %v2595
        %v2597 = vrot.slane %v2487, %v2596
        %v2598 = vlaneseq
        %v2599 = vshrl.u32 %v2598, 7
        %v2600 = vsub.s32 4, %v2599
        %v2601 = vrot.slane %v2487, %v2600
        %v2602 = vlaneseq
        %v2603 = vshrl.u32 %v2602, 7
        %v2604 = vsub.s32 5, %v2603
        %v2605 = vrot.slane %v2487, %v2604
        %v2606 = vlaneseq
        %v2607 = vshrl.u32 %v2606, 7
        %v2608 = vsub.s32 6, %v2607
        %v2609 = vrot.slane %v2487, %v2608
        %v2610 = vlaneseq
        %v2611 = vshrl.u32 %v2610, 7
        %v2612 = vsub.s32 7, %v2611
        %v2613 = vrot.slane %v2487, %v2612
        %v2614 = vlaneseq
        %v2615 = vshrl.u32 %v2614, 7
        %v2616 = vsub.s32 0, %v2615
        %v2617 = vrot.slane %v2488, %v2616
        %v2618 = vlaneseq
        %v2619 = vshrl.u32 %v2618, 7
        %v2620 = vsub.s32 1, %v2619
        %v2621 = vrot.slane %v2488, %v2620
        %v2622 = vlaneseq
        %v2623 = vshrl.u32 %v2622, 7
        %v2624 = vsub.s32 2, %v2623
        %v2625 = vrot.slane %v2488, %v2624
        %v2626 = vlaneseq
        %v2627 = vshrl.u32 %v2626, 7
        %v2628 = vsub.s32 3, %v2627
        %v2629 = vrot.slane %v2488, %v2628
        %v2630 = vlaneseq
        %v2631 = vshrl.u32 %v2630, 7
        %v2632 = vsub.s32 4, %v2631
        %v2633 = vrot.slane %v2488, %v2632
        %v2634 = vlaneseq
        %v2635 = vshrl.u32 %v2634, 7
        %v2636 = vsub.s32 5, %v2635
        %v2637 = vrot.slane %v2488, %v2636
        %v2638 = vlaneseq
        %v2639 = vshrl.u32 %v2638, 7
        %v2640 = vsub.s32 6, %v2639
        %v2641 = vrot.slane %v2488, %v2640
        %v2642 = vlaneseq
        %v2643 = vshrl.u32 %v2642, 7
        %v2644 = vsub.s32 7, %v2643
        %v2645 = vrot.slane %v2488, %v2644
        %v2646 = vlaneseq
        %v2647 = vshrl.u32 %v2646, 7
        %v2648 = vsub.s32 0, %v2647
        %v2649 = vrot.slane %v2489, %v2648
        %v2650 = vlaneseq
        %v2651 = vshrl.u32 %v2650, 7
        %v2652 = vsub.s32 1, %v2651
        %v2653 = vrot.slane %v2489, %v2652
        %v2654 = vlaneseq
        %v2655 = vshrl.u32 %v2654, 7
        %v2656 = vsub.s32 2, %v2655
        %v2657 = vrot.slane %v2489, %v2656
        %v2658 = vlaneseq
        %v2659 = vshrl.u32 %v2658, 7
        %v2660 = vsub.s32 3, %v2659
        %v2661 = vrot.slane %v2489, %v2660
        %v2662 = vlaneseq
        %v2663 = vshrl.u32 %v2662, 7
        %v2664 = vsub.s32 4, %v2663
        %v2665 = vrot.slane %v2489, %v2664
        %v2666 = vlaneseq
        %v2667 = vshrl.u32 %v2666, 7
        %v2668 = vsub.s32 5, %v2667
        %v2669 = vrot.slane %v2489, %v2668
        %v2670 = vlaneseq
        %v2671 = vshrl.u32 %v2670, 7
        %v2672 = vsub.s32 6, %v2671
        %v2673 = vrot.slane %v2489, %v2672
        %v2674 = vlaneseq
        %v2675 = vshrl.u32 %v2674, 7
        %v2676 = vsub.s32 7, %v2675
        %v2677 = vrot.slane %v2489, %v2676
        %v2678 = vlaneseq
        %v2679 = vshrl.u32 %v2678, 7
        %v2680 = vsub.s32 0, %v2679
        %v2681 = vrot.slane %v2490, %v2680
        %v2682 = vlaneseq
        %v2683 = vshrl.u32 %v2682, 7
        %v2684 = vsub.s32 1, %v2683
        %v2685 = vrot.slane %v2490, %v2684
        %v2686 = vlaneseq
        %v2687 = vshrl.u32 %v2686, 7
        %v2688 = vsub.s32 2, %v2687
        %v2689 = vrot.slane %v2490, %v2688
        %v2690 = vlaneseq
        %v2691 = vshrl.u32 %v2690, 7
        %v2692 = vsub.s32 3, %v2691
        %v2693 = vrot.slane %v2490, %v2692
        %v2694 = vlaneseq
        %v2695 = vshrl.u32 %v2694, 7
        %v2696 = vsub.s32 4, %v2695
        %v2697 = vrot.slane %v2490, %v2696
        %v2698 = vlaneseq
        %v2699 = vshrl.u32 %v2698, 7
        %v2700 = vsub.s32 5, %v2699
        %v2701 = vrot.slane %v2490, %v2700
        %v2702 = vlaneseq
        %v2703 = vshrl.u32 %v2702, 7
        %v2704 = vsub.s32 6, %v2703
        %v2705 = vrot.slane %v2490, %v2704
        %v2706 = vlaneseq
        %v2707 = vshrl.u32 %v2706, 7
        %v2708 = vsub.s32 7, %v2707
        %v2709 = vrot.slane %v2490, %v2708
        %v2710 = vlaneseq
        %v2711 = vshrl.u32 %v2710, 7
        %v2712 = vsub.s32 0, %v2711
        %v2713 = vrot.slane %v2491, %v2712
        %v2714 = vlaneseq
        %v2715 = vshrl.u32 %v2714, 7
        %v2716 = vsub.s32 1, %v2715
        %v2717 = vrot.slane %v2491, %v2716
        %v2718 = vlaneseq
        %v2719 = vshrl.u32 %v2718, 7
        %v2720 = vsub.s32 2, %v2719
        %v2721 = vrot.slane %v2491, %v2720
        %v2722 = vlaneseq
        %v2723 = vshrl.u32 %v2722, 7
        %v2724 = vsub.s32 3, %v2723
        %v2725 = vrot.slane %v2491, %v2724
        %v2726 = vlaneseq
        %v2727 = vshrl.u32 %v2726, 7
        %v2728 = vsub.s32 4, %v2727
        %v2729 = vrot.slane %v2491, %v2728
        %v2730 = vlaneseq
        %v2731 = vshrl.u32 %v2730, 7
        %v2732 = vsub.s32 5, %v2731
        %v2733 = vrot.slane %v2491, %v2732
        %v2734 = vlaneseq
        %v2735 = vshrl.u32 %v2734, 7
        %v2736 = vsub.s32 6, %v2735
        %v2737 = vrot.slane %v2491, %v2736
        %v2738 = vlaneseq
        %v2739 = vshrl.u32 %v2738, 7
        %v2740 = vsub.s32 7, %v2739
        %v2741 = vrot.slane %v2491, %v2740
        %v2742 = vlaneseq
        %v2743 = vshrl.u32 %v2742, 7
        %v2744 = vsub.s32 0, %v2743
        %v2745 = vrot.slane %v2492, %v2744
        %v2746 = vlaneseq
        %v2747 = vshrl.u32 %v2746, 7
        %v2748 = vsub.s32 1, %v2747
        %v2749 = vrot.slane %v2492, %v2748
        %v2750 = vlaneseq
        %v2751 = vshrl.u32 %v2750, 7
        %v2752 = vsub.s32 2, %v2751
        %v2753 = vrot.slane %v2492, %v2752
        %v2754 = vlaneseq
        %v2755 = vshrl.u32 %v2754, 7
        %v2756 = vsub.s32 3, %v2755
        %v2757 = vrot.slane %v2492, %v2756
        %v2758 = vlaneseq
        %v2759 = vshrl.u32 %v2758, 7
        %v2760 = vsub.s32 4, %v2759
        %v2761 = vrot.slane %v2492, %v2760
        %v2762 = vlaneseq
        %v2763 = vshrl.u32 %v2762, 7
        %v2764 = vsub.s32 5, %v2763
        %v2765 = vrot.slane %v2492, %v2764
        %v2766 = vlaneseq
        %v2767 = vshrl.u32 %v2766, 7
        %v2768 = vsub.s32 6, %v2767
        %v2769 = vrot.slane %v2492, %v2768
        %v2770 = vlaneseq
        %v2771 = vshrl.u32 %v2770, 7
        %v2772 = vsub.s32 7, %v2771
        %v2773 = vrot.slane %v2492, %v2772
        %v2774 = vlaneseq
        %v2775 = vshrl.u32 %v2774, 7
        %v2776 = vsub.s32 0, %v2775
        %v2777 = vrot.slane %v2493, %v2776
        %v2778 = vlaneseq
        %v2779 = vshrl.u32 %v2778, 7
        %v2780 = vsub.s32 1, %v2779
        %v2781 = vrot.slane %v2493, %v2780
        %v2782 = vlaneseq
        %v2783 = vshrl.u32 %v2782, 7
        %v2784 = vsub.s32 2, %v2783
        %v2785 = vrot.slane %v2493, %v2784
        %v2786 = vlaneseq
        %v2787 = vshrl.u32 %v2786, 7
        %v2788 = vsub.s32 3, %v2787
        %v2789 = vrot.slane %v2493, %v2788
        %v2790 = vlaneseq
        %v2791 = vshrl.u32 %v2790, 7
        %v2792 = vsub.s32 4, %v2791
        %v2793 = vrot.slane %v2493, %v2792
        %v2794 = vlaneseq
        %v2795 = vshrl.u32 %v2794, 7
        %v2796 = vsub.s32 5, %v2795
        %v2797 = vrot.slane %v2493, %v2796
        %v2798 = vlaneseq
        %v2799 = vshrl.u32 %v2798, 7
        %v2800 = vsub.s32 6, %v2799
        %v2801 = vrot.slane %v2493, %v2800
        %v2802 = vlaneseq
        %v2803 = vshrl.u32 %v2802, 7
        %v2804 = vsub.s32 7, %v2803
        %v2805 = vrot.slane %v2493, %v2804
        %v2806 = vlaneseq
        %v2807 = vshrl.u32 %v2806, 7
        %v2808 = vsub.s32 0, %v2807
        %v2809 = vrot.slane %v2494, %v2808
        %v2810 = vlaneseq
        %v2811 = vshrl.u32 %v2810, 7
        %v2812 = vsub.s32 1, %v2811
        %v2813 = vrot.slane %v2494, %v2812
        %v2814 = vlaneseq
        %v2815 = vshrl.u32 %v2814, 7
        %v2816 = vsub.s32 2, %v2815
        %v2817 = vrot.slane %v2494, %v2816
        %v2818 = vlaneseq
        %v2819 = vshrl.u32 %v2818, 7
        %v2820 = vsub.s32 3, %v2819
        %v2821 = vrot.slane %v2494, %v2820
        %v2822 = vlaneseq
        %v2823 = vshrl.u32 %v2822, 7
        %v2824 = vsub.s32 4, %v2823
        %v2825 = vrot.slane %v2494, %v2824
        %v2826 = vlaneseq
        %v2827 = vshrl.u32 %v2826, 7
        %v2828 = vsub.s32 5, %v2827
        %v2829 = vrot.slane %v2494, %v2828
        %v2830 = vlaneseq
        %v2831 = vshrl.u32 %v2830, 7
        %v2832 = vsub.s32 6, %v2831
        %v2833 = vrot.slane %v2494, %v2832
        %v2834 = vlaneseq
        %v2835 = vshrl.u32 %v2834, 7
        %v2836 = vsub.s32 7, %v2835
        %v2837 = vrot.slane %v2494, %v2836
        %v2838 = vlaneseq
        %v2839 = vshrl.u32 %v2838, 7
        %v2840 = vsub.s32 0, %v2839
        %v2841 = vrot.slane %v2495, %v2840
        %v2842 = vlaneseq
        %v2843 = vshrl.u32 %v2842, 7
        %v2844 = vsub.s32 1, %v2843
        %v2845 = vrot.slane %v2495, %v2844
        %v2846 = vlaneseq
        %v2847 = vshrl.u32 %v2846, 7
        %v2848 = vsub.s32 2, %v2847
        %v2849 = vrot.slane %v2495, %v2848
        %v2850 = vlaneseq
        %v2851 = vshrl.u32 %v2850, 7
        %v2852 = vsub.s32 3, %v2851
        %v2853 = vrot.slane %v2495, %v2852
        %v2854 = vlaneseq
        %v2855 = vshrl.u32 %v2854, 7
        %v2856 = vsub.s32 4, %v2855
        %v2857 = vrot.slane %v2495, %v2856
        %v2858 = vlaneseq
        %v2859 = vshrl.u32 %v2858, 7
        %v2860 = vsub.s32 5, %v2859
        %v2861 = vrot.slane %v2495, %v2860
        %v2862 = vlaneseq
        %v2863 = vshrl.u32 %v2862, 7
        %v2864 = vsub.s32 6, %v2863
        %v2865 = vrot.slane %v2495, %v2864
        %v2866 = vlaneseq
        %v2867 = vshrl.u32 %v2866, 7
        %v2868 = vsub.s32 7, %v2867
        %v2869 = vrot.slane %v2495, %v2868
        %v2870 = vlaneseq
        %v2871 = vshrl.u32 %v2870, 7
        %v2872 = vsub.s32 0, %v2871
        %v2873 = vrot.slane %v2496, %v2872
        %v2874 = vlaneseq
        %v2875 = vshrl.u32 %v2874, 7
        %v2876 = vsub.s32 1, %v2875
        %v2877 = vrot.slane %v2496, %v2876
        %v2878 = vlaneseq
        %v2879 = vshrl.u32 %v2878, 7
        %v2880 = vsub.s32 2, %v2879
        %v2881 = vrot.slane %v2496, %v2880
        %v2882 = vlaneseq
        %v2883 = vshrl.u32 %v2882, 7
        %v2884 = vsub.s32 3, %v2883
        %v2885 = vrot.slane %v2496, %v2884
        %v2886 = vlaneseq
        %v2887 = vshrl.u32 %v2886, 7
        %v2888 = vsub.s32 4, %v2887
        %v2889 = vrot.slane %v2496, %v2888
        %v2890 = vlaneseq
        %v2891 = vshrl.u32 %v2890, 7
        %v2892 = vsub.s32 5, %v2891
        %v2893 = vrot.slane %v2496, %v2892
        %v2894 = vlaneseq
        %v2895 = vshrl.u32 %v2894, 7
        %v2896 = vsub.s32 6, %v2895
        %v2897 = vrot.slane %v2496, %v2896
        %v2898 = vlaneseq
        %v2899 = vshrl.u32 %v2898, 7
        %v2900 = vsub.s32 7, %v2899
        %v2901 = vrot.slane %v2496, %v2900
        %v2902 = vlaneseq
        %v2903 = vshrl.u32 %v2902, 7
        %v2904 = vsub.s32 0, %v2903
        %v2905 = vrot.slane %v2497, %v2904
        %v2906 = vlaneseq
        %v2907 = vshrl.u32 %v2906, 7
        %v2908 = vsub.s32 1, %v2907
        %v2909 = vrot.slane %v2497, %v2908
        %v2910 = vlaneseq
        %v2911 = vshrl.u32 %v2910, 7
        %v2912 = vsub.s32 2, %v2911
        %v2913 = vrot.slane %v2497, %v2912
        %v2914 = vlaneseq
        %v2915 = vshrl.u32 %v2914, 7
        %v2916 = vsub.s32 3, %v2915
        %v2917 = vrot.slane %v2497, %v2916
        %v2918 = vlaneseq
        %v2919 = vshrl.u32 %v2918, 7
        %v2920 = vsub.s32 4, %v2919
        %v2921 = vrot.slane %v2497, %v2920
        %v2922 = vlaneseq
        %v2923 = vshrl.u32 %v2922, 7
        %v2924 = vsub.s32 5, %v2923
        %v2925 = vrot.slane %v2497, %v2924
        %v2926 = vlaneseq
        %v2927 = vshrl.u32 %v2926, 7
        %v2928 = vsub.s32 6, %v2927
        %v2929 = vrot.slane %v2497, %v2928
        %v2930 = vlaneseq
        %v2931 = vshrl.u32 %v2930, 7
        %v2932 = vsub.s32 7, %v2931
        %v2933 = vrot.slane %v2497, %v2932
        %v2934 = vlaneseq
        %v2935 = vshrl.u32 %v2934, 7
        %v2936 = vsub.s32 0, %v2935
        %v2937 = vrot.slane %v2498, %v2936
        %v2938 = vlaneseq
        %v2939 = vshrl.u32 %v2938, 7
        %v2940 = vsub.s32 1, %v2939
        %v2941 = vrot.slane %v2498, %v2940
        %v2942 = vlaneseq
        %v2943 = vshrl.u32 %v2942, 7
        %v2944 = vsub.s32 2, %v2943
        %v2945 = vrot.slane %v2498, %v2944
        %v2946 = vlaneseq
        %v2947 = vshrl.u32 %v2946, 7
        %v2948 = vsub.s32 3, %v2947
        %v2949 = vrot.slane %v2498, %v2948
        %v2950 = vlaneseq
        %v2951 = vshrl.u32 %v2950, 7
        %v2952 = vsub.s32 4, %v2951
        %v2953 = vrot.slane %v2498, %v2952
        %v2954 = vlaneseq
        %v2955 = vshrl.u32 %v2954, 7
        %v2956 = vsub.s32 5, %v2955
        %v2957 = vrot.slane %v2498, %v2956
        %v2958 = vlaneseq
        %v2959 = vshrl.u32 %v2958, 7
        %v2960 = vsub.s32 6, %v2959
        %v2961 = vrot.slane %v2498, %v2960
        %v2962 = vlaneseq
        %v2963 = vshrl.u32 %v2962, 7
        %v2964 = vsub.s32 7, %v2963
        %v2965 = vrot.slane %v2498, %v2964
        %v2966 = vlaneseq
        %v2967 = vshrl.u32 %v2966, 7
        %v2968 = vsub.s32 0, %v2967
        %v2969 = vrot.slane %v2499, %v2968
        %v2970 = vlaneseq
        %v2971 = vshrl.u32 %v2970, 7
        %v2972 = vsub.s32 1, %v2971
        %v2973 = vrot.slane %v2499, %v2972
        %v2974 = vlaneseq
        %v2975 = vshrl.u32 %v2974, 7
        %v2976 = vsub.s32 2, %v2975
        %v2977 = vrot.slane %v2499, %v2976
        %v2978 = vlaneseq
        %v2979 = vshrl.u32 %v2978, 7
        %v2980 = vsub.s32 3, %v2979
        %v2981 = vrot.slane %v2499, %v2980
        %v2982 = vlaneseq
        %v2983 = vshrl.u32 %v2982, 7
        %v2984 = vsub.s32 4, %v2983
        %v2985 = vrot.slane %v2499, %v2984
        %v2986 = vlaneseq
        %v2987 = vshrl.u32 %v2986, 7
        %v2988 = vsub.s32 5, %v2987
        %v2989 = vrot.slane %v2499, %v2988
        %v2990 = vlaneseq
        %v2991 = vshrl.u32 %v2990, 7
        %v2992 = vsub.s32 6, %v2991
        %v2993 = vrot.slane %v2499, %v2992
        %v2994 = vlaneseq
        %v2995 = vshrl.u32 %v2994, 7
        %v2996 = vsub.s32 7, %v2995
        %v2997 = vrot.slane %v2499, %v2996
        %v2998 = vlaneseq
        %v2999 = vshrl.u32 %v2998, 7
        %v3000 = vsub.s32 0, %v2999
        %v3001 = vrot.slane %v2500, %v3000
        %v3002 = vlaneseq
        %v3003 = vshrl.u32 %v3002, 7
        %v3004 = vsub.s32 1, %v3003
        %v3005 = vrot.slane %v2500, %v3004
        %v3006 = vlaneseq
        %v3007 = vshrl.u32 %v3006, 7
        %v3008 = vsub.s32 2, %v3007
        %v3009 = vrot.slane %v2500, %v3008
        %v3010 = vlaneseq
        %v3011 = vshrl.u32 %v3010, 7
        %v3012 = vsub.s32 3, %v3011
        %v3013 = vrot.slane %v2500, %v3012
        %v3014 = vlaneseq
        %v3015 = vshrl.u32 %v3014, 7
        %v3016 = vsub.s32 4, %v3015
        %v3017 = vrot.slane %v2500, %v3016
        %v3018 = vlaneseq
        %v3019 = vshrl.u32 %v3018, 7
        %v3020 = vsub.s32 5, %v3019
        %v3021 = vrot.slane %v2500, %v3020
        %v3022 = vlaneseq
        %v3023 = vshrl.u32 %v3022, 7
        %v3024 = vsub.s32 6, %v3023
        %v3025 = vrot.slane %v2500, %v3024
        %v3026 = vlaneseq
        %v3027 = vshrl.u32 %v3026, 7
        %v3028 = vsub.s32 7, %v3027
        %v3029 = vrot.slane %v2500, %v3028
        %v3030 = vlaneseq
        %v3031 = vshrl.u32 %v3030, 7
        %v3032 = vsub.s32 0, %v3031
        %v3033 = vrot.slane %v2501, %v3032
        %v3034 = vlaneseq
        %v3035 = vshrl.u32 %v3034, 7
        %v3036 = vsub.s32 1, %v3035
        %v3037 = vrot.slane %v2501, %v3036
        %v3038 = vlaneseq
        %v3039 = vshrl.u32 %v3038, 7
        %v3040 = vsub.s32 2, %v3039
        %v3041 = vrot.slane %v2501, %v3040
        %v3042 = vlaneseq
        %v3043 = vshrl.u32 %v3042, 7
        %v3044 = vsub.s32 3, %v3043
        %v3045 = vrot.slane %v2501, %v3044
        %v3046 = vlaneseq
        %v3047 = vshrl.u32 %v3046, 7
        %v3048 = vsub.s32 4, %v3047
        %v3049 = vrot.slane %v2501, %v3048
        %v3050 = vlaneseq
        %v3051 = vshrl.u32 %v3050, 7
        %v3052 = vsub.s32 5, %v3051
        %v3053 = vrot.slane %v2501, %v3052
        %v3054 = vlaneseq
        %v3055 = vshrl.u32 %v3054, 7
        %v3056 = vsub.s32 6, %v3055
        %v3057 = vrot.slane %v2501, %v3056
        %v3058 = vlaneseq
        %v3059 = vshrl.u32 %v3058, 7
        %v3060 = vsub.s32 7, %v3059
        %v3061 = vrot.slane %v2501, %v3060
        %v3062 = vlaneseq
        %v3063 = vshrl.u32 %v3062, 7
        %v3064 = vsub.s32 0, %v3063
        %v3065 = vrot.slane %v2502, %v3064
        %v3066 = vlaneseq
        %v3067 = vshrl.u32 %v3066, 7
        %v3068 = vsub.s32 1, %v3067
        %v3069 = vrot.slane %v2502, %v3068
        %v3070 = vlaneseq
        %v3071 = vshrl.u32 %v3070, 7
        %v3072 = vsub.s32 2, %v3071
        %v3073 = vrot.slane %v2502, %v3072
        %v3074 = vlaneseq
        %v3075 = vshrl.u32 %v3074, 7
        %v3076 = vsub.s32 3, %v3075
        %v3077 = vrot.slane %v2502, %v3076
        %v3078 = vlaneseq
        %v3079 = vshrl.u32 %v3078, 7
        %v3080 = vsub.s32 4, %v3079
        %v3081 = vrot.slane %v2502, %v3080
        %v3082 = vlaneseq
        %v3083 = vshrl.u32 %v3082, 7
        %v3084 = vsub.s32 5, %v3083
        %v3085 = vrot.slane %v2502, %v3084
        %v3086 = vlaneseq
        %v3087 = vshrl.u32 %v3086, 7
        %v3088 = vsub.s32 6, %v3087
        %v3089 = vrot.slane %v2502, %v3088
        %v3090 = vlaneseq
        %v3091 = vshrl.u32 %v3090, 7
        %v3092 = vsub.s32 7, %v3091
        %v3093 = vrot.slane %v2502, %v3092
        %v3094 = vlaneseq
        %v3095 = vshrl.u32 %v3094, 7
        %v3096 = vsub.s32 0, %v3095
        %v3097 = vrot.slane %v2503, %v3096
        %v3098 = vlaneseq
        %v3099 = vshrl.u32 %v3098, 7
        %v3100 = vsub.s32 1, %v3099
        %v3101 = vrot.slane %v2503, %v3100
        %v3102 = vlaneseq
        %v3103 = vshrl.u32 %v3102, 7
        %v3104 = vsub.s32 2, %v3103
        %v3105 = vrot.slane %v2503, %v3104
        %v3106 = vlaneseq
        %v3107 = vshrl.u32 %v3106, 7
        %v3108 = vsub.s32 3, %v3107
        %v3109 = vrot.slane %v2503, %v3108
        %v3110 = vlaneseq
        %v3111 = vshrl.u32 %v3110, 7
        %v3112 = vsub.s32 4, %v3111
        %v3113 = vrot.slane %v2503, %v3112
        %v3114 = vlaneseq
        %v3115 = vshrl.u32 %v3114, 7
        %v3116 = vsub.s32 5, %v3115
        %v3117 = vrot.slane %v2503, %v3116
        %v3118 = vlaneseq
        %v3119 = vshrl.u32 %v3118, 7
        %v3120 = vsub.s32 6, %v3119
        %v3121 = vrot.slane %v2503, %v3120
        %v3122 = vlaneseq
        %v3123 = vshrl.u32 %v3122, 7
        %v3124 = vsub.s32 7, %v3123
        %v3125 = vrot.slane %v2503, %v3124
        %v3126 = vlaneseq
        %v3127 = vshrl.u32 %v3126, 7
        %v3128 = vsub.s32 0, %v3127
        %v3129 = vrot.slane %v2504, %v3128
        %v3130 = vlaneseq
        %v3131 = vshrl.u32 %v3130, 7
        %v3132 = vsub.s32 1, %v3131
        %v3133 = vrot.slane %v2504, %v3132
        %v3134 = vlaneseq
        %v3135 = vshrl.u32 %v3134, 7
        %v3136 = vsub.s32 2, %v3135
        %v3137 = vrot.slane %v2504, %v3136
        %v3138 = vlaneseq
        %v3139 = vshrl.u32 %v3138, 7
        %v3140 = vsub.s32 3, %v3139
        %v3141 = vrot.slane %v2504, %v3140
        %v3142 = vlaneseq
        %v3143 = vshrl.u32 %v3142, 7
        %v3144 = vsub.s32 4, %v3143
        %v3145 = vrot.slane %v2504, %v3144
        %v3146 = vlaneseq
        %v3147 = vshrl.u32 %v3146, 7
        %v3148 = vsub.s32 5, %v3147
        %v3149 = vrot.slane %v2504, %v3148
        %v3150 = vlaneseq
        %v3151 = vshrl.u32 %v3150, 7
        %v3152 = vsub.s32 6, %v3151
        %v3153 = vrot.slane %v2504, %v3152
        %v3154 = vlaneseq
        %v3155 = vshrl.u32 %v3154, 7
        %v3156 = vsub.s32 7, %v3155
        %v3157 = vrot.slane %v2504, %v3156
        %v3158 = vlaneseq
        %v3159 = vshrl.u32 %v3158, 7
        %v3160 = vsub.s32 0, %v3159
        %v3161 = vrot.slane %v2505, %v3160
        %v3162 = vlaneseq
        %v3163 = vshrl.u32 %v3162, 7
        %v3164 = vsub.s32 1, %v3163
        %v3165 = vrot.slane %v2505, %v3164
        %v3166 = vlaneseq
        %v3167 = vshrl.u32 %v3166, 7
        %v3168 = vsub.s32 2, %v3167
        %v3169 = vrot.slane %v2505, %v3168
        %v3170 = vlaneseq
        %v3171 = vshrl.u32 %v3170, 7
        %v3172 = vsub.s32 3, %v3171
        %v3173 = vrot.slane %v2505, %v3172
        %v3174 = vlaneseq
        %v3175 = vshrl.u32 %v3174, 7
        %v3176 = vsub.s32 4, %v3175
        %v3177 = vrot.slane %v2505, %v3176
        %v3178 = vlaneseq
        %v3179 = vshrl.u32 %v3178, 7
        %v3180 = vsub.s32 5, %v3179
        %v3181 = vrot.slane %v2505, %v3180
        %v3182 = vlaneseq
        %v3183 = vshrl.u32 %v3182, 7
        %v3184 = vsub.s32 6, %v3183
        %v3185 = vrot.slane %v2505, %v3184
        %v3186 = vlaneseq
        %v3187 = vshrl.u32 %v3186, 7
        %v3188 = vsub.s32 7, %v3187
        %v3189 = vrot.slane %v2505, %v3188
        %v3190 = vlaneseq
        %v3191 = vshrl.u32 %v3190, 7
        %v3192 = vsub.s32 0, %v3191
        %v3193 = vrot.slane %v2506, %v3192
        %v3194 = vlaneseq
        %v3195 = vshrl.u32 %v3194, 7
        %v3196 = vsub.s32 1, %v3195
        %v3197 = vrot.slane %v2506, %v3196
        %v3198 = vlaneseq
        %v3199 = vshrl.u32 %v3198, 7
        %v3200 = vsub.s32 2, %v3199
        %v3201 = vrot.slane %v2506, %v3200
        %v3202 = vlaneseq
        %v3203 = vshrl.u32 %v3202, 7
        %v3204 = vsub.s32 3, %v3203
        %v3205 = vrot.slane %v2506, %v3204
        %v3206 = vlaneseq
        %v3207 = vshrl.u32 %v3206, 7
        %v3208 = vsub.s32 4, %v3207
        %v3209 = vrot.slane %v2506, %v3208
        %v3210 = vlaneseq
        %v3211 = vshrl.u32 %v3210, 7
        %v3212 = vsub.s32 5, %v3211
        %v3213 = vrot.slane %v2506, %v3212
        %v3214 = vlaneseq
        %v3215 = vshrl.u32 %v3214, 7
        %v3216 = vsub.s32 6, %v3215
        %v3217 = vrot.slane %v2506, %v3216
        %v3218 = vlaneseq
        %v3219 = vshrl.u32 %v3218, 7
        %v3220 = vsub.s32 7, %v3219
        %v3221 = vrot.slane %v2506, %v3220
        %v3222 = vlaneseq
        %v3223 = vshrl.u32 %v3222, 7
        %v3224 = vsub.s32 0, %v3223
        %v3225 = vrot.slane %v2507, %v3224
        %v3226 = vlaneseq
        %v3227 = vshrl.u32 %v3226, 7
        %v3228 = vsub.s32 1, %v3227
        %v3229 = vrot.slane %v2507, %v3228
        %v3230 = vlaneseq
        %v3231 = vshrl.u32 %v3230, 7
        %v3232 = vsub.s32 2, %v3231
        %v3233 = vrot.slane %v2507, %v3232
        %v3234 = vlaneseq
        %v3235 = vshrl.u32 %v3234, 7
        %v3236 = vsub.s32 3, %v3235
        %v3237 = vrot.slane %v2507, %v3236
        %v3238 = vlaneseq
        %v3239 = vshrl.u32 %v3238, 7
        %v3240 = vsub.s32 4, %v3239
        %v3241 = vrot.slane %v2507, %v3240
        %v3242 = vlaneseq
        %v3243 = vshrl.u32 %v3242, 7
        %v3244 = vsub.s32 5, %v3243
        %v3245 = vrot.slane %v2507, %v3244
        %v3246 = vlaneseq
        %v3247 = vshrl.u32 %v3246, 7
        %v3248 = vsub.s32 6, %v3247
        %v3249 = vrot.slane %v2507, %v3248
        %v3250 = vlaneseq
        %v3251 = vshrl.u32 %v3250, 7
        %v3252 = vsub.s32 7, %v3251
        %v3253 = vrot.slane %v2507, %v3252
        %v3254 = vlaneseq
        %v3255 = vshrl.u32 %v3254, 7
        %v3256 = vsub.s32 0, %v3255
        %v3257 = vrot.slane %v2508, %v3256
        %v3258 = vlaneseq
        %v3259 = vshrl.u32 %v3258, 7
        %v3260 = vsub.s32 1, %v3259
        %v3261 = vrot.slane %v2508, %v3260
        %v3262 = vlaneseq
        %v3263 = vshrl.u32 %v3262, 7
        %v3264 = vsub.s32 2, %v3263
        %v3265 = vrot.slane %v2508, %v3264
        %v3266 = vlaneseq
        %v3267 = vshrl.u32 %v3266, 7
        %v3268 = vsub.s32 3, %v3267
        %v3269 = vrot.slane %v2508, %v3268
        %v3270 = vlaneseq
        %v3271 = vshrl.u32 %v3270, 7
        %v3272 = vsub.s32 4, %v3271
        %v3273 = vrot.slane %v2508, %v3272
        %v3274 = vlaneseq
        %v3275 = vshrl.u32 %v3274, 7
        %v3276 = vsub.s32 5, %v3275
        %v3277 = vrot.slane %v2508, %v3276
        %v3278 = vlaneseq
        %v3279 = vshrl.u32 %v3278, 7
        %v3280 = vsub.s32 6, %v3279
        %v3281 = vrot.slane %v2508, %v3280
        %v3282 = vlaneseq
        %v3283 = vshrl.u32 %v3282, 7
        %v3284 = vsub.s32 7, %v3283
        %v3285 = vrot.slane %v2508, %v3284
        %v3286 = vlaneseq
        %v3287 = vshrl.u32 %v3286, 7
        %v3288 = vsub.s32 0, %v3287
        %v3289 = vrot.slane %v2509, %v3288
        %v3290 = vlaneseq
        %v3291 = vshrl.u32 %v3290, 7
        %v3292 = vsub.s32 1, %v3291
        %v3293 = vrot.slane %v2509, %v3292
        %v3294 = vlaneseq
        %v3295 = vshrl.u32 %v3294, 7
        %v3296 = vsub.s32 2, %v3295
        %v3297 = vrot.slane %v2509, %v3296
        %v3298 = vlaneseq
        %v3299 = vshrl.u32 %v3298, 7
        %v3300 = vsub.s32 3, %v3299
        %v3301 = vrot.slane %v2509, %v3300
        %v3302 = vlaneseq
        %v3303 = vshrl.u32 %v3302, 7
        %v3304 = vsub.s32 4, %v3303
        %v3305 = vrot.slane %v2509, %v3304
        %v3306 = vlaneseq
        %v3307 = vshrl.u32 %v3306, 7
        %v3308 = vsub.s32 5, %v3307
        %v3309 = vrot.slane %v2509, %v3308
        %v3310 = vlaneseq
        %v3311 = vshrl.u32 %v3310, 7
        %v3312 = vsub.s32 6, %v3311
        %v3313 = vrot.slane %v2509, %v3312
        %v3314 = vlaneseq
        %v3315 = vshrl.u32 %v3314, 7
        %v3316 = vsub.s32 7, %v3315
        %v3317 = vrot.slane %v2509, %v3316
        %v3318 = vlaneseq
        %v3319 = vshrl.u32 %v3318, 7
        %v3320 = vsub.s32 0, %v3319
        %v3321 = vrot.slane %v2510, %v3320
        %v3322 = vlaneseq
        %v3323 = vshrl.u32 %v3322, 7
        %v3324 = vsub.s32 1, %v3323
        %v3325 = vrot.slane %v2510, %v3324
        %v3326 = vlaneseq
        %v3327 = vshrl.u32 %v3326, 7
        %v3328 = vsub.s32 2, %v3327
        %v3329 = vrot.slane %v2510, %v3328
        %v3330 = vlaneseq
        %v3331 = vshrl.u32 %v3330, 7
        %v3332 = vsub.s32 3, %v3331
        %v3333 = vrot.slane %v2510, %v3332
        %v3334 = vlaneseq
        %v3335 = vshrl.u32 %v3334, 7
        %v3336 = vsub.s32 4, %v3335
        %v3337 = vrot.slane %v2510, %v3336
        %v3338 = vlaneseq
        %v3339 = vshrl.u32 %v3338, 7
        %v3340 = vsub.s32 5, %v3339
        %v3341 = vrot.slane %v2510, %v3340
        %v3342 = vlaneseq
        %v3343 = vshrl.u32 %v3342, 7
        %v3344 = vsub.s32 6, %v3343
        %v3345 = vrot.slane %v2510, %v3344
        %v3346 = vlaneseq
        %v3347 = vshrl.u32 %v3346, 7
        %v3348 = vsub.s32 7, %v3347
        %v3349 = vrot.slane %v2510, %v3348
        %v3350 = vlaneseq
        %v3351 = vshrl.u32 %v3350, 7
        %v3352 = vsub.s32 0, %v3351
        %v3353 = vrot.slane %v2511, %v3352
        %v3354 = vlaneseq
        %v3355 = vshrl.u32 %v3354, 7
        %v3356 = vsub.s32 1, %v3355
        %v3357 = vrot.slane %v2511, %v3356
        %v3358 = vlaneseq
        %v3359 = vshrl.u32 %v3358, 7
        %v3360 = vsub.s32 2, %v3359
        %v3361 = vrot.slane %v2511, %v3360
        %v3362 = vlaneseq
        %v3363 = vshrl.u32 %v3362, 7
        %v3364 = vsub.s32 3, %v3363
        %v3365 = vrot.slane %v2511, %v3364
        %v3366 = vlaneseq
        %v3367 = vshrl.u32 %v3366, 7
        %v3368 = vsub.s32 4, %v3367
        %v3369 = vrot.slane %v2511, %v3368
        %v3370 = vlaneseq
        %v3371 = vshrl.u32 %v3370, 7
        %v3372 = vsub.s32 5, %v3371
        %v3373 = vrot.slane %v2511, %v3372
        %v3374 = vlaneseq
        %v3375 = vshrl.u32 %v3374, 7
        %v3376 = vsub.s32 6, %v3375
        %v3377 = vrot.slane %v2511, %v3376
        %v3378 = vlaneseq
        %v3379 = vshrl.u32 %v3378, 7
        %v3380 = vsub.s32 7, %v3379
        %v3381 = vrot.slane %v2511, %v3380
        %v3382 = vlaneseq
        %v3383 = vshrl.u32 %v3382, 7
        %v3384 = vsub.s32 0, %v3383
        %v3385 = vrot.slane %v2512, %v3384
        %v3386 = vlaneseq
        %v3387 = vshrl.u32 %v3386, 7
        %v3388 = vsub.s32 1, %v3387
        %v3389 = vrot.slane %v2512, %v3388
        %v3390 = vlaneseq
        %v3391 = vshrl.u32 %v3390, 7
        %v3392 = vsub.s32 2, %v3391
        %v3393 = vrot.slane %v2512, %v3392
        %v3394 = vlaneseq
        %v3395 = vshrl.u32 %v3394, 7
        %v3396 = vsub.s32 3, %v3395
        %v3397 = vrot.slane %v2512, %v3396
        %v3398 = vlaneseq
        %v3399 = vshrl.u32 %v3398, 7
        %v3400 = vsub.s32 4, %v3399
        %v3401 = vrot.slane %v2512, %v3400
        %v3402 = vlaneseq
        %v3403 = vshrl.u32 %v3402, 7
        %v3404 = vsub.s32 5, %v3403
        %v3405 = vrot.slane %v2512, %v3404
        %v3406 = vlaneseq
        %v3407 = vshrl.u32 %v3406, 7
        %v3408 = vsub.s32 6, %v3407
        %v3409 = vrot.slane %v2512, %v3408
        %v3410 = vlaneseq
        %v3411 = vshrl.u32 %v3410, 7
        %v3412 = vsub.s32 7, %v3411
        %v3413 = vrot.slane %v2512, %v3412
        %v3414 = vlaneseq
        %v3415 = vshrl.u32 %v3414, 7
        %v3416 = vsub.s32 0, %v3415
        %v3417 = vrot.slane %v2513, %v3416
        %v3418 = vlaneseq
        %v3419 = vshrl.u32 %v3418, 7
        %v3420 = vsub.s32 1, %v3419
        %v3421 = vrot.slane %v2513, %v3420
        %v3422 = vlaneseq
        %v3423 = vshrl.u32 %v3422, 7
        %v3424 = vsub.s32 2, %v3423
        %v3425 = vrot.slane %v2513, %v3424
        %v3426 = vlaneseq
        %v3427 = vshrl.u32 %v3426, 7
        %v3428 = vsub.s32 3, %v3427
        %v3429 = vrot.slane %v2513, %v3428
        %v3430 = vlaneseq
        %v3431 = vshrl.u32 %v3430, 7
        %v3432 = vsub.s32 4, %v3431
        %v3433 = vrot.slane %v2513, %v3432
        %v3434 = vlaneseq
        %v3435 = vshrl.u32 %v3434, 7
        %v3436 = vsub.s32 5, %v3435
        %v3437 = vrot.slane %v2513, %v3436
        %v3438 = vlaneseq
        %v3439 = vshrl.u32 %v3438, 7
        %v3440 = vsub.s32 6, %v3439
        %v3441 = vrot.slane %v2513, %v3440
        %v3442 = vlaneseq
        %v3443 = vshrl.u32 %v3442, 7
        %v3444 = vsub.s32 7, %v3443
        %v3445 = vrot.slane %v2513, %v3444
        %v3446 = vlaneseq
        %v3447 = vshrl.u32 %v3446, 7
        %v3448 = vsub.s32 0, %v3447
        %v3449 = vrot.slane %v2514, %v3448
        %v3450 = vlaneseq
        %v3451 = vshrl.u32 %v3450, 7
        %v3452 = vsub.s32 1, %v3451
        %v3453 = vrot.slane %v2514, %v3452
        %v3454 = vlaneseq
        %v3455 = vshrl.u32 %v3454, 7
        %v3456 = vsub.s32 2, %v3455
        %v3457 = vrot.slane %v2514, %v3456
        %v3458 = vlaneseq
        %v3459 = vshrl.u32 %v3458, 7
        %v3460 = vsub.s32 3, %v3459
        %v3461 = vrot.slane %v2514, %v3460
        %v3462 = vlaneseq
        %v3463 = vshrl.u32 %v3462, 7
        %v3464 = vsub.s32 4, %v3463
        %v3465 = vrot.slane %v2514, %v3464
        %v3466 = vlaneseq
        %v3467 = vshrl.u32 %v3466, 7
        %v3468 = vsub.s32 5, %v3467
        %v3469 = vrot.slane %v2514, %v3468
        %v3470 = vlaneseq
        %v3471 = vshrl.u32 %v3470, 7
        %v3472 = vsub.s32 6, %v3471
        %v3473 = vrot.slane %v2514, %v3472
        %v3474 = vlaneseq
        %v3475 = vshrl.u32 %v3474, 7
        %v3476 = vsub.s32 7, %v3475
        %v3477 = vrot.slane %v2514, %v3476
        %v3478 = vlaneseq
        %v3479 = vshrl.u32 %v3478, 7
        %v3480 = vsub.s32 0, %v3479
        %v3481 = vrot.slane %v2515, %v3480
        %v3482 = vlaneseq
        %v3483 = vshrl.u32 %v3482, 7
        %v3484 = vsub.s32 1, %v3483
        %v3485 = vrot.slane %v2515, %v3484
        %v3486 = vlaneseq
        %v3487 = vshrl.u32 %v3486, 7
        %v3488 = vsub.s32 2, %v3487
        %v3489 = vrot.slane %v2515, %v3488
        %v3490 = vlaneseq
        %v3491 = vshrl.u32 %v3490, 7
        %v3492 = vsub.s32 3, %v3491
        %v3493 = vrot.slane %v2515, %v3492
        %v3494 = vlaneseq
        %v3495 = vshrl.u32 %v3494, 7
        %v3496 = vsub.s32 4, %v3495
        %v3497 = vrot.slane %v2515, %v3496
        %v3498 = vlaneseq
        %v3499 = vshrl.u32 %v3498, 7
        %v3500 = vsub.s32 5, %v3499
        %v3501 = vrot.slane %v2515, %v3500
        %v3502 = vlaneseq
        %v3503 = vshrl.u32 %v3502, 7
        %v3504 = vsub.s32 6, %v3503
        %v3505 = vrot.slane %v2515, %v3504
        %v3506 = vlaneseq
        %v3507 = vshrl.u32 %v3506, 7
        %v3508 = vsub.s32 7, %v3507
        %v3509 = vrot.slane %v2515, %v3508
        %v3510 = vlaneseq
        %v3511 = vshrl.u32 %v3510, 7
        %v3512 = vsub.s32 0, %v3511
        %v3513 = vrot.slane %v2516, %v3512
        %v3514 = vlaneseq
        %v3515 = vshrl.u32 %v3514, 7
        %v3516 = vsub.s32 1, %v3515
        %v3517 = vrot.slane %v2516, %v3516
        %v3518 = vlaneseq
        %v3519 = vshrl.u32 %v3518, 7
        %v3520 = vsub.s32 2, %v3519
        %v3521 = vrot.slane %v2516, %v3520
        %v3522 = vlaneseq
        %v3523 = vshrl.u32 %v3522, 7
        %v3524 = vsub.s32 3, %v3523
        %v3525 = vrot.slane %v2516, %v3524
        %v3526 = vlaneseq
        %v3527 = vshrl.u32 %v3526, 7
        %v3528 = vsub.s32 4, %v3527
        %v3529 = vrot.slane %v2516, %v3528
        %v3530 = vlaneseq
        %v3531 = vshrl.u32 %v3530, 7
        %v3532 = vsub.s32 5, %v3531
        %v3533 = vrot.slane %v2516, %v3532
        %v3534 = vlaneseq
        %v3535 = vshrl.u32 %v3534, 7
        %v3536 = vsub.s32 6, %v3535
        %v3537 = vrot.slane %v2516, %v3536
        %v3538 = vlaneseq
        %v3539 = vshrl.u32 %v3538, 7
        %v3540 = vsub.s32 7, %v3539
        %v3541 = vrot.slane %v2516, %v3540
        %v3542 = vlaneseq
        %v3543 = vshrl.u32 %v3542, 7
        %v3544 = vsub.s32 0, %v3543
        %v3545 = vrot.slane %v2517, %v3544
        %v3546 = vlaneseq
        %v3547 = vshrl.u32 %v3546, 7
        %v3548 = vsub.s32 1, %v3547
        %v3549 = vrot.slane %v2517, %v3548
        %v3550 = vlaneseq
        %v3551 = vshrl.u32 %v3550, 7
        %v3552 = vsub.s32 2, %v3551
        %v3553 = vrot.slane %v2517, %v3552
        %v3554 = vlaneseq
        %v3555 = vshrl.u32 %v3554, 7
        %v3556 = vsub.s32 3, %v3555
        %v3557 = vrot.slane %v2517, %v3556
        %v3558 = vlaneseq
        %v3559 = vshrl.u32 %v3558, 7
        %v3560 = vsub.s32 4, %v3559
        %v3561 = vrot.slane %v2517, %v3560
        %v3562 = vlaneseq
        %v3563 = vshrl.u32 %v3562, 7
        %v3564 = vsub.s32 5, %v3563
        %v3565 = vrot.slane %v2517, %v3564
        %v3566 = vlaneseq
        %v3567 = vshrl.u32 %v3566, 7
        %v3568 = vsub.s32 6, %v3567
        %v3569 = vrot.slane %v2517, %v3568
        %v3570 = vlaneseq
        %v3571 = vshrl.u32 %v3570, 7
        %v3572 = vsub.s32 7, %v3571
        %v3573 = vrot.slane %v2517, %v3572
        %v3574 = vcombine.low %v2553, %v2557
        %v3575 = vcombine.low %v2561, %v2565
        %v3576 = vcombine.low %v2569, %v2573
        %v3577 = vcombine.low %v2577, %v2581
        %v3579 = vunpack.c.l.s4 1966171168
        %v3580 = vunpack.c.0.s8 %v3579
        %v3581 = vlaneseq
        %v3582 = vshrl.u32 %v3581, 7
        %v3583 = vsub.s32 %v3580, %v3582
        %v3584 = vrot.slane %v3574, %v3583
        %v3586 = vunpack.c.l.s4 1966171168
        %v3587 = vunpack.c.0.s8 %v3586
        %v3588 = vlaneseq
        %v3589 = vshrl.u32 %v3588, 7
        %v3590 = vsub.s32 %v3587, %v3589
        %v3591 = vrot.slane %v3575, %v3590
        %v3593 = vunpack.c.l.s4 1966171168
        %v3594 = vunpack.c.0.s8 %v3593
        %v3595 = vlaneseq
        %v3596 = vshrl.u32 %v3595, 7
        %v3597 = vsub.s32 %v3594, %v3596
        %v3598 = vrot.slane %v3576, %v3597
        %v3600 = vunpack.c.l.s4 1966171168
        %v3601 = vunpack.c.0.s8 %v3600
        %v3602 = vlaneseq
        %v3603 = vshrl.u32 %v3602, 7
        %v3604 = vsub.s32 %v3601, %v3603
        %v3605 = vrot.slane %v3577, %v3604
        %v3606 = vcombine.low %v3584, %v3591
        %v3607 = vcombine.low %v3598, %v3605
        %v3609 = vunpack.c.l.s4 1966171168
        %v3610 = vunpack.c.0.s8 %v3609
        %v3611 = vlaneseq
        %v3612 = vshrl.u32 %v3611, 7
        %v3613 = vsub.s32 %v3610, %v3612
        %v3614 = vrot.slane %v3606, %v3613
        %v3616 = vunpack.c.l.s4 1966171168
        %v3617 = vunpack.c.0.s8 %v3616
        %v3618 = vlaneseq
        %v3619 = vshrl.u32 %v3618, 7
        %v3620 = vsub.s32 %v3617, %v3619
        %v3621 = vrot.slane %v3607, %v3620
        %v3622 = vcombine.low %v3614, %v3621
        %v3623 = vcombine.low %v2585, %v2589
        %v3624 = vcombine.low %v2593, %v2597
        %v3625 = vcombine.low %v2601, %v2605
        %v3626 = vcombine.low %v2609, %v2613
        %v3628 = vunpack.c.l.s4 1966171168
        %v3629 = vunpack.c.0.s8 %v3628
        %v3630 = vlaneseq
        %v3631 = vshrl.u32 %v3630, 7
        %v3632 = vsub.s32 %v3629, %v3631
        %v3633 = vrot.slane %v3623, %v3632
        %v3635 = vunpack.c.l.s4 1966171168
        %v3636 = vunpack.c.0.s8 %v3635
        %v3637 = vlaneseq
        %v3638 = vshrl.u32 %v3637, 7
        %v3639 = vsub.s32 %v3636, %v3638
        %v3640 = vrot.slane %v3624, %v3639
        %v3642 = vunpack.c.l.s4 1966171168
        %v3643 = vunpack.c.0.s8 %v3642
        %v3644 = vlaneseq
        %v3645 = vshrl.u32 %v3644, 7
        %v3646 = vsub.s32 %v3643, %v3645
        %v3647 = vrot.slane %v3625, %v3646
        %v3649 = vunpack.c.l.s4 1966171168
        %v3650 = vunpack.c.0.s8 %v3649
        %v3651 = vlaneseq
        %v3652 = vshrl.u32 %v3651, 7
        %v3653 = vsub.s32 %v3650, %v3652
        %v3654 = vrot.slane %v3626, %v3653
        %v3655 = vcombine.low %v3633, %v3640
        %v3656 = vcombine.low %v3647, %v3654
        %v3658 = vunpack.c.l.s4 1966171168
        %v3659 = vunpack.c.0.s8 %v3658
        %v3660 = vlaneseq
        %v3661 = vshrl.u32 %v3660, 7
        %v3662 = vsub.s32 %v3659, %v3661
        %v3663 = vrot.slane %v3655, %v3662
        %v3665 = vunpack.c.l.s4 1966171168
        %v3666 = vunpack.c.0.s8 %v3665
        %v3667 = vlaneseq
        %v3668 = vshrl.u32 %v3667, 7
        %v3669 = vsub.s32 %v3666, %v3668
        %v3670 = vrot.slane %v3656, %v3669
        %v3671 = vcombine.low %v3663, %v3670
        %v3672 = vcombine.low %v2617, %v2621
        %v3673 = vcombine.low %v2625, %v2629
        %v3674 = vcombine.low %v2633, %v2637
        %v3675 = vcombine.low %v2641, %v2645
        %v3677 = vunpack.c.l.s4 1966171168
        %v3678 = vunpack.c.0.s8 %v3677
        %v3679 = vlaneseq
        %v3680 = vshrl.u32 %v3679, 7
        %v3681 = vsub.s32 %v3678, %v3680
        %v3682 = vrot.slane %v3672, %v3681
        %v3684 = vunpack.c.l.s4 1966171168
        %v3685 = vunpack.c.0.s8 %v3684
        %v3686 = vlaneseq
        %v3687 = vshrl.u32 %v3686, 7
        %v3688 = vsub.s32 %v3685, %v3687
        %v3689 = vrot.slane %v3673, %v3688
        %v3691 = vunpack.c.l.s4 1966171168
        %v3692 = vunpack.c.0.s8 %v3691
        %v3693 = vlaneseq
        %v3694 = vshrl.u32 %v3693, 7
        %v3695 = vsub.s32 %v3692, %v3694
        %v3696 = vrot.slane %v3674, %v3695
        %v3698 = vunpack.c.l.s4 1966171168
        %v3699 = vunpack.c.0.s8 %v3698
        %v3700 = vlaneseq
        %v3701 = vshrl.u32 %v3700, 7
        %v3702 = vsub.s32 %v3699, %v3701
        %v3703 = vrot.slane %v3675, %v3702
        %v3704 = vcombine.low %v3682, %v3689
        %v3705 = vcombine.low %v3696, %v3703
        %v3707 = vunpack.c.l.s4 1966171168
        %v3708 = vunpack.c.0.s8 %v3707
        %v3709 = vlaneseq
        %v3710 = vshrl.u32 %v3709, 7
        %v3711 = vsub.s32 %v3708, %v3710
        %v3712 = vrot.slane %v3704, %v3711
        %v3714 = vunpack.c.l.s4 1966171168
        %v3715 = vunpack.c.0.s8 %v3714
        %v3716 = vlaneseq
        %v3717 = vshrl.u32 %v3716, 7
        %v3718 = vsub.s32 %v3715, %v3717
        %v3719 = vrot.slane %v3705, %v3718
        %v3720 = vcombine.low %v3712, %v3719
        %v3721 = vcombine.low %v2649, %v2653
        %v3722 = vcombine.low %v2657, %v2661
        %v3723 = vcombine.low %v2665, %v2669
        %v3724 = vcombine.low %v2673, %v2677
        %v3726 = vunpack.c.l.s4 1966171168
        %v3727 = vunpack.c.0.s8 %v3726
        %v3728 = vlaneseq
        %v3729 = vshrl.u32 %v3728, 7
        %v3730 = vsub.s32 %v3727, %v3729
        %v3731 = vrot.slane %v3721, %v3730
        %v3733 = vunpack.c.l.s4 1966171168
        %v3734 = vunpack.c.0.s8 %v3733
        %v3735 = vlaneseq
        %v3736 = vshrl.u32 %v3735, 7
        %v3737 = vsub.s32 %v3734, %v3736
        %v3738 = vrot.slane %v3722, %v3737
        %v3740 = vunpack.c.l.s4 1966171168
        %v3741 = vunpack.c.0.s8 %v3740
        %v3742 = vlaneseq
        %v3743 = vshrl.u32 %v3742, 7
        %v3744 = vsub.s32 %v3741, %v3743
        %v3745 = vrot.slane %v3723, %v3744
        %v3747 = vunpack.c.l.s4 1966171168
        %v3748 = vunpack.c.0.s8 %v3747
        %v3749 = vlaneseq
        %v3750 = vshrl.u32 %v3749, 7
        %v3751 = vsub.s32 %v3748, %v3750
        %v3752 = vrot.slane %v3724, %v3751
        %v3753 = vcombine.low %v3731, %v3738
        %v3754 = vcombine.low %v3745, %v3752
        %v3756 = vunpack.c.l.s4 1966171168
        %v3757 = vunpack.c.0.s8 %v3756
        %v3758 = vlaneseq
        %v3759 = vshrl.u32 %v3758, 7
        %v3760 = vsub.s32 %v3757, %v3759
        %v3761 = vrot.slane %v3753, %v3760
        %v3763 = vunpack.c.l.s4 1966171168
        %v3764 = vunpack.c.0.s8 %v3763
        %v3765 = vlaneseq
        %v3766 = vshrl.u32 %v3765, 7
        %v3767 = vsub.s32 %v3764, %v3766
        %v3768 = vrot.slane %v3754, %v3767
        %v3769 = vcombine.low %v3761, %v3768
        %v3770 = vcombine.low %v2681, %v2685
        %v3771 = vcombine.low %v2689, %v2693
        %v3772 = vcombine.low %v2697, %v2701
        %v3773 = vcombine.low %v2705, %v2709
        %v3775 = vunpack.c.l.s4 1966171168
        %v3776 = vunpack.c.0.s8 %v3775
        %v3777 = vlaneseq
        %v3778 = vshrl.u32 %v3777, 7
        %v3779 = vsub.s32 %v3776, %v3778
        %v3780 = vrot.slane %v3770, %v3779
        %v3782 = vunpack.c.l.s4 1966171168
        %v3783 = vunpack.c.0.s8 %v3782
        %v3784 = vlaneseq
        %v3785 = vshrl.u32 %v3784, 7
        %v3786 = vsub.s32 %v3783, %v3785
        %v3787 = vrot.slane %v3771, %v3786
        %v3789 = vunpack.c.l.s4 1966171168
        %v3790 = vunpack.c.0.s8 %v3789
        %v3791 = vlaneseq
        %v3792 = vshrl.u32 %v3791, 7
        %v3793 = vsub.s32 %v3790, %v3792
        %v3794 = vrot.slane %v3772, %v3793
        %v3796 = vunpack.c.l.s4 1966171168
        %v3797 = vunpack.c.0.s8 %v3796
        %v3798 = vlaneseq
        %v3799 = vshrl.u32 %v3798, 7
        %v3800 = vsub.s32 %v3797, %v3799
        %v3801 = vrot.slane %v3773, %v3800
        %v3802 = vcombine.low %v3780, %v3787
        %v3803 = vcombine.low %v3794, %v3801
        %v3805 = vunpack.c.l.s4 1966171168
        %v3806 = vunpack.c.0.s8 %v3805
        %v3807 = vlaneseq
        %v3808 = vshrl.u32 %v3807, 7
        %v3809 = vsub.s32 %v3806, %v3808
        %v3810 = vrot.slane %v3802, %v3809
        %v3812 = vunpack.c.l.s4 1966171168
        %v3813 = vunpack.c.0.s8 %v3812
        %v3814 = vlaneseq
        %v3815 = vshrl.u32 %v3814, 7
        %v3816 = vsub.s32 %v3813, %v3815
        %v3817 = vrot.slane %v3803, %v3816
        %v3818 = vcombine.low %v3810, %v3817
        %v3819 = vcombine.low %v2713, %v2717
        %v3820 = vcombine.low %v2721, %v2725
        %v3821 = vcombine.low %v2729, %v2733
        %v3822 = vcombine.low %v2737, %v2741
        %v3824 = vunpack.c.l.s4 1966171168
        %v3825 = vunpack.c.0.s8 %v3824
        %v3826 = vlaneseq
        %v3827 = vshrl.u32 %v3826, 7
        %v3828 = vsub.s32 %v3825, %v3827
        %v3829 = vrot.slane %v3819, %v3828
        %v3831 = vunpack.c.l.s4 1966171168
        %v3832 = vunpack.c.0.s8 %v3831
        %v3833 = vlaneseq
        %v3834 = vshrl.u32 %v3833, 7
        %v3835 = vsub.s32 %v3832, %v3834
        %v3836 = vrot.slane %v3820, %v3835
        %v3838 = vunpack.c.l.s4 1966171168
        %v3839 = vunpack.c.0.s8 %v3838
        %v3840 = vlaneseq
        %v3841 = vshrl.u32 %v3840, 7
        %v3842 = vsub.s32 %v3839, %v3841
        %v3843 = vrot.slane %v3821, %v3842
        %v3845 = vunpack.c.l.s4 1966171168
        %v3846 = vunpack.c.0.s8 %v3845
        %v3847 = vlaneseq
        %v3848 = vshrl.u32 %v3847, 7
        %v3849 = vsub.s32 %v3846, %v3848
        %v3850 = vrot.slane %v3822, %v3849
        %v3851 = vcombine.low %v3829, %v3836
        %v3852 = vcombine.low %v3843, %v3850
        %v3854 = vunpack.c.l.s4 1966171168
        %v3855 = vunpack.c.0.s8 %v3854
        %v3856 = vlaneseq
        %v3857 = vshrl.u32 %v3856, 7
        %v3858 = vsub.s32 %v3855, %v3857
        %v3859 = vrot.slane %v3851, %v3858
        %v3861 = vunpack.c.l.s4 1966171168
        %v3862 = vunpack.c.0.s8 %v3861
        %v3863 = vlaneseq
        %v3864 = vshrl.u32 %v3863, 7
        %v3865 = vsub.s32 %v3862, %v3864
        %v3866 = vrot.slane %v3852, %v3865
        %v3867 = vcombine.low %v3859, %v3866
        %v3868 = vcombine.low %v2745, %v2749
        %v3869 = vcombine.low %v2753, %v2757
        %v3870 = vcombine.low %v2761, %v2765
        %v3871 = vcombine.low %v2769, %v2773
        %v3873 = vunpack.c.l.s4 1966171168
        %v3874 = vunpack.c.0.s8 %v3873
        %v3875 = vlaneseq
        %v3876 = vshrl.u32 %v3875, 7
        %v3877 = vsub.s32 %v3874, %v3876
        %v3878 = vrot.slane %v3868, %v3877
        %v3880 = vunpack.c.l.s4 1966171168
        %v3881 = vunpack.c.0.s8 %v3880
        %v3882 = vlaneseq
        %v3883 = vshrl.u32 %v3882, 7
        %v3884 = vsub.s32 %v3881, %v3883
        %v3885 = vrot.slane %v3869, %v3884
        %v3887 = vunpack.c.l.s4 1966171168
        %v3888 = vunpack.c.0.s8 %v3887
        %v3889 = vlaneseq
        %v3890 = vshrl.u32 %v3889, 7
        %v3891 = vsub.s32 %v3888, %v3890
        %v3892 = vrot.slane %v3870, %v3891
        %v3894 = vunpack.c.l.s4 1966171168
        %v3895 = vunpack.c.0.s8 %v3894
        %v3896 = vlaneseq
        %v3897 = vshrl.u32 %v3896, 7
        %v3898 = vsub.s32 %v3895, %v3897
        %v3899 = vrot.slane %v3871, %v3898
        %v3900 = vcombine.low %v3878, %v3885
        %v3901 = vcombine.low %v3892, %v3899
        %v3903 = vunpack.c.l.s4 1966171168
        %v3904 = vunpack.c.0.s8 %v3903
        %v3905 = vlaneseq
        %v3906 = vshrl.u32 %v3905, 7
        %v3907 = vsub.s32 %v3904, %v3906
        %v3908 = vrot.slane %v3900, %v3907
        %v3910 = vunpack.c.l.s4 1966171168
        %v3911 = vunpack.c.0.s8 %v3910
        %v3912 = vlaneseq
        %v3913 = vshrl.u32 %v3912, 7
        %v3914 = vsub.s32 %v3911, %v3913
        %v3915 = vrot.slane %v3901, %v3914
        %v3916 = vcombine.low %v3908, %v3915
        %v3917 = vcombine.low %v2777, %v2781
        %v3918 = vcombine.low %v2785, %v2789
        %v3919 = vcombine.low %v2793, %v2797
        %v3920 = vcombine.low %v2801, %v2805
        %v3922 = vunpack.c.l.s4 1966171168
        %v3923 = vunpack.c.0.s8 %v3922
        %v3924 = vlaneseq
        %v3925 = vshrl.u32 %v3924, 7
        %v3926 = vsub.s32 %v3923, %v3925
        %v3927 = vrot.slane %v3917, %v3926
        %v3929 = vunpack.c.l.s4 1966171168
        %v3930 = vunpack.c.0.s8 %v3929
        %v3931 = vlaneseq
        %v3932 = vshrl.u32 %v3931, 7
        %v3933 = vsub.s32 %v3930, %v3932
        %v3934 = vrot.slane %v3918, %v3933
        %v3936 = vunpack.c.l.s4 1966171168
        %v3937 = vunpack.c.0.s8 %v3936
        %v3938 = vlaneseq
        %v3939 = vshrl.u32 %v3938, 7
        %v3940 = vsub.s32 %v3937, %v3939
        %v3941 = vrot.slane %v3919, %v3940
        %v3943 = vunpack.c.l.s4 1966171168
        %v3944 = vunpack.c.0.s8 %v3943
        %v3945 = vlaneseq
        %v3946 = vshrl.u32 %v3945, 7
        %v3947 = vsub.s32 %v3944, %v3946
        %v3948 = vrot.slane %v3920, %v3947
        %v3949 = vcombine.low %v3927, %v3934
        %v3950 = vcombine.low %v3941, %v3948
        %v3952 = vunpack.c.l.s4 1966171168
        %v3953 = vunpack.c.0.s8 %v3952
        %v3954 = vlaneseq
        %v3955 = vshrl.u32 %v3954, 7
        %v3956 = vsub.s32 %v3953, %v3955
        %v3957 = vrot.slane %v3949, %v3956
        %v3959 = vunpack.c.l.s4 1966171168
        %v3960 = vunpack.c.0.s8 %v3959
        %v3961 = vlaneseq
        %v3962 = vshrl.u32 %v3961, 7
        %v3963 = vsub.s32 %v3960, %v3962
        %v3964 = vrot.slane %v3950, %v3963
        %v3965 = vcombine.low %v3957, %v3964
        %v3966 = vcombine.low %v2809, %v2813
        %v3967 = vcombine.low %v2817, %v2821
        %v3968 = vcombine.low %v2825, %v2829
        %v3969 = vcombine.low %v2833, %v2837
        %v3971 = vunpack.c.l.s4 1966171168
        %v3972 = vunpack.c.0.s8 %v3971
        %v3973 = vlaneseq
        %v3974 = vshrl.u32 %v3973, 7
        %v3975 = vsub.s32 %v3972, %v3974
        %v3976 = vrot.slane %v3966, %v3975
        %v3978 = vunpack.c.l.s4 1966171168
        %v3979 = vunpack.c.0.s8 %v3978
        %v3980 = vlaneseq
        %v3981 = vshrl.u32 %v3980, 7
        %v3982 = vsub.s32 %v3979, %v3981
        %v3983 = vrot.slane %v3967, %v3982
        %v3985 = vunpack.c.l.s4 1966171168
        %v3986 = vunpack.c.0.s8 %v3985
        %v3987 = vlaneseq
        %v3988 = vshrl.u32 %v3987, 7
        %v3989 = vsub.s32 %v3986, %v3988
        %v3990 = vrot.slane %v3968, %v3989
        %v3992 = vunpack.c.l.s4 1966171168
        %v3993 = vunpack.c.0.s8 %v3992
        %v3994 = vlaneseq
        %v3995 = vshrl.u32 %v3994, 7
        %v3996 = vsub.s32 %v3993, %v3995
        %v3997 = vrot.slane %v3969, %v3996
        %v3998 = vcombine.low %v3976, %v3983
        %v3999 = vcombine.low %v3990, %v3997
        %v4001 = vunpack.c.l.s4 1966171168
        %v4002 = vunpack.c.0.s8 %v4001
        %v4003 = vlaneseq
        %v4004 = vshrl.u32 %v4003, 7
        %v4005 = vsub.s32 %v4002, %v4004
        %v4006 = vrot.slane %v3998, %v4005
        %v4008 = vunpack.c.l.s4 1966171168
        %v4009 = vunpack.c.0.s8 %v4008
        %v4010 = vlaneseq
        %v4011 = vshrl.u32 %v4010, 7
        %v4012 = vsub.s32 %v4009, %v4011
        %v4013 = vrot.slane %v3999, %v4012
        %v4014 = vcombine.low %v4006, %v4013
        %v4015 = vcombine.low %v2841, %v2845
        %v4016 = vcombine.low %v2849, %v2853
        %v4017 = vcombine.low %v2857, %v2861
        %v4018 = vcombine.low %v2865, %v2869
        %v4020 = vunpack.c.l.s4 1966171168
        %v4021 = vunpack.c.0.s8 %v4020
        %v4022 = vlaneseq
        %v4023 = vshrl.u32 %v4022, 7
        %v4024 = vsub.s32 %v4021, %v4023
        %v4025 = vrot.slane %v4015, %v4024
        %v4027 = vunpack.c.l.s4 1966171168
        %v4028 = vunpack.c.0.s8 %v4027
        %v4029 = vlaneseq
        %v4030 = vshrl.u32 %v4029, 7
        %v4031 = vsub.s32 %v4028, %v4030
        %v4032 = vrot.slane %v4016, %v4031
        %v4034 = vunpack.c.l.s4 1966171168
        %v4035 = vunpack.c.0.s8 %v4034
        %v4036 = vlaneseq
        %v4037 = vshrl.u32 %v4036, 7
        %v4038 = vsub.s32 %v4035, %v4037
        %v4039 = vrot.slane %v4017, %v4038
        %v4041 = vunpack.c.l.s4 1966171168
        %v4042 = vunpack.c.0.s8 %v4041
        %v4043 = vlaneseq
        %v4044 = vshrl.u32 %v4043, 7
        %v4045 = vsub.s32 %v4042, %v4044
        %v4046 = vrot.slane %v4018, %v4045
        %v4047 = vcombine.low %v4025, %v4032
        %v4048 = vcombine.low %v4039, %v4046
        %v4050 = vunpack.c.l.s4 1966171168
        %v4051 = vunpack.c.0.s8 %v4050
        %v4052 = vlaneseq
        %v4053 = vshrl.u32 %v4052, 7
        %v4054 = vsub.s32 %v4051, %v4053
        %v4055 = vrot.slane %v4047, %v4054
        %v4057 = vunpack.c.l.s4 1966171168
        %v4058 = vunpack.c.0.s8 %v4057
        %v4059 = vlaneseq
        %v4060 = vshrl.u32 %v4059, 7
        %v4061 = vsub.s32 %v4058, %v4060
        %v4062 = vrot.slane %v4048, %v4061
        %v4063 = vcombine.low %v4055, %v4062
        %v4064 = vcombine.low %v2873, %v2877
        %v4065 = vcombine.low %v2881, %v2885
        %v4066 = vcombine.low %v2889, %v2893
        %v4067 = vcombine.low %v2897, %v2901
        %v4069 = vunpack.c.l.s4 1966171168
        %v4070 = vunpack.c.0.s8 %v4069
        %v4071 = vlaneseq
        %v4072 = vshrl.u32 %v4071, 7
        %v4073 = vsub.s32 %v4070, %v4072
        %v4074 = vrot.slane %v4064, %v4073
        %v4076 = vunpack.c.l.s4 1966171168
        %v4077 = vunpack.c.0.s8 %v4076
        %v4078 = vlaneseq
        %v4079 = vshrl.u32 %v4078, 7
        %v4080 = vsub.s32 %v4077, %v4079
        %v4081 = vrot.slane %v4065, %v4080
        %v4083 = vunpack.c.l.s4 1966171168
        %v4084 = vunpack.c.0.s8 %v4083
        %v4085 = vlaneseq
        %v4086 = vshrl.u32 %v4085, 7
        %v4087 = vsub.s32 %v4084, %v4086
        %v4088 = vrot.slane %v4066, %v4087
        %v4090 = vunpack.c.l.s4 1966171168
        %v4091 = vunpack.c.0.s8 %v4090
        %v4092 = vlaneseq
        %v4093 = vshrl.u32 %v4092, 7
        %v4094 = vsub.s32 %v4091, %v4093
        %v4095 = vrot.slane %v4067, %v4094
        %v4096 = vcombine.low %v4074, %v4081
        %v4097 = vcombine.low %v4088, %v4095
        %v4099 = vunpack.c.l.s4 1966171168
        %v4100 = vunpack.c.0.s8 %v4099
        %v4101 = vlaneseq
        %v4102 = vshrl.u32 %v4101, 7
        %v4103 = vsub.s32 %v4100, %v4102
        %v4104 = vrot.slane %v4096, %v4103
        %v4106 = vunpack.c.l.s4 1966171168
        %v4107 = vunpack.c.0.s8 %v4106
        %v4108 = vlaneseq
        %v4109 = vshrl.u32 %v4108, 7
        %v4110 = vsub.s32 %v4107, %v4109
        %v4111 = vrot.slane %v4097, %v4110
        %v4112 = vcombine.low %v4104, %v4111
        %v4113 = vcombine.low %v2905, %v2909
        %v4114 = vcombine.low %v2913, %v2917
        %v4115 = vcombine.low %v2921, %v2925
        %v4116 = vcombine.low %v2929, %v2933
        %v4118 = vunpack.c.l.s4 1966171168
        %v4119 = vunpack.c.0.s8 %v4118
        %v4120 = vlaneseq
        %v4121 = vshrl.u32 %v4120, 7
        %v4122 = vsub.s32 %v4119, %v4121
        %v4123 = vrot.slane %v4113, %v4122
        %v4125 = vunpack.c.l.s4 1966171168
        %v4126 = vunpack.c.0.s8 %v4125
        %v4127 = vlaneseq
        %v4128 = vshrl.u32 %v4127, 7
        %v4129 = vsub.s32 %v4126, %v4128
        %v4130 = vrot.slane %v4114, %v4129
        %v4132 = vunpack.c.l.s4 1966171168
        %v4133 = vunpack.c.0.s8 %v4132
        %v4134 = vlaneseq
        %v4135 = vshrl.u32 %v4134, 7
        %v4136 = vsub.s32 %v4133, %v4135
        %v4137 = vrot.slane %v4115, %v4136
        %v4139 = vunpack.c.l.s4 1966171168
        %v4140 = vunpack.c.0.s8 %v4139
        %v4141 = vlaneseq
        %v4142 = vshrl.u32 %v4141, 7
        %v4143 = vsub.s32 %v4140, %v4142
        %v4144 = vrot.slane %v4116, %v4143
        %v4145 = vcombine.low %v4123, %v4130
        %v4146 = vcombine.low %v4137, %v4144
        %v4148 = vunpack.c.l.s4 1966171168
        %v4149 = vunpack.c.0.s8 %v4148
        %v4150 = vlaneseq
        %v4151 = vshrl.u32 %v4150, 7
        %v4152 = vsub.s32 %v4149, %v4151
        %v4153 = vrot.slane %v4145, %v4152
        %v4155 = vunpack.c.l.s4 1966171168
        %v4156 = vunpack.c.0.s8 %v4155
        %v4157 = vlaneseq
        %v4158 = vshrl.u32 %v4157, 7
        %v4159 = vsub.s32 %v4156, %v4158
        %v4160 = vrot.slane %v4146, %v4159
        %v4161 = vcombine.low %v4153, %v4160
        %v4162 = vcombine.low %v2937, %v2941
        %v4163 = vcombine.low %v2945, %v2949
        %v4164 = vcombine.low %v2953, %v2957
        %v4165 = vcombine.low %v2961, %v2965
        %v4167 = vunpack.c.l.s4 1966171168
        %v4168 = vunpack.c.0.s8 %v4167
        %v4169 = vlaneseq
        %v4170 = vshrl.u32 %v4169, 7
        %v4171 = vsub.s32 %v4168, %v4170
        %v4172 = vrot.slane %v4162, %v4171
        %v4174 = vunpack.c.l.s4 1966171168
        %v4175 = vunpack.c.0.s8 %v4174
        %v4176 = vlaneseq
        %v4177 = vshrl.u32 %v4176, 7
        %v4178 = vsub.s32 %v4175, %v4177
        %v4179 = vrot.slane %v4163, %v4178
        %v4181 = vunpack.c.l.s4 1966171168
        %v4182 = vunpack.c.0.s8 %v4181
        %v4183 = vlaneseq
        %v4184 = vshrl.u32 %v4183, 7
        %v4185 = vsub.s32 %v4182, %v4184
        %v4186 = vrot.slane %v4164, %v4185
        %v4188 = vunpack.c.l.s4 1966171168
        %v4189 = vunpack.c.0.s8 %v4188
        %v4190 = vlaneseq
        %v4191 = vshrl.u32 %v4190, 7
        %v4192 = vsub.s32 %v4189, %v4191
        %v4193 = vrot.slane %v4165, %v4192
        %v4194 = vcombine.low %v4172, %v4179
        %v4195 = vcombine.low %v4186, %v4193
        %v4197 = vunpack.c.l.s4 1966171168
        %v4198 = vunpack.c.0.s8 %v4197
        %v4199 = vlaneseq
        %v4200 = vshrl.u32 %v4199, 7
        %v4201 = vsub.s32 %v4198, %v4200
        %v4202 = vrot.slane %v4194, %v4201
        %v4204 = vunpack.c.l.s4 1966171168
        %v4205 = vunpack.c.0.s8 %v4204
        %v4206 = vlaneseq
        %v4207 = vshrl.u32 %v4206, 7
        %v4208 = vsub.s32 %v4205, %v4207
        %v4209 = vrot.slane %v4195, %v4208
        %v4210 = vcombine.low %v4202, %v4209
        %v4211 = vcombine.low %v2969, %v2973
        %v4212 = vcombine.low %v2977, %v2981
        %v4213 = vcombine.low %v2985, %v2989
        %v4214 = vcombine.low %v2993, %v2997
        %v4216 = vunpack.c.l.s4 1966171168
        %v4217 = vunpack.c.0.s8 %v4216
        %v4218 = vlaneseq
        %v4219 = vshrl.u32 %v4218, 7
        %v4220 = vsub.s32 %v4217, %v4219
        %v4221 = vrot.slane %v4211, %v4220
        %v4223 = vunpack.c.l.s4 1966171168
        %v4224 = vunpack.c.0.s8 %v4223
        %v4225 = vlaneseq
        %v4226 = vshrl.u32 %v4225, 7
        %v4227 = vsub.s32 %v4224, %v4226
        %v4228 = vrot.slane %v4212, %v4227
        %v4230 = vunpack.c.l.s4 1966171168
        %v4231 = vunpack.c.0.s8 %v4230
        %v4232 = vlaneseq
        %v4233 = vshrl.u32 %v4232, 7
        %v4234 = vsub.s32 %v4231, %v4233
        %v4235 = vrot.slane %v4213, %v4234
        %v4237 = vunpack.c.l.s4 1966171168
        %v4238 = vunpack.c.0.s8 %v4237
        %v4239 = vlaneseq
        %v4240 = vshrl.u32 %v4239, 7
        %v4241 = vsub.s32 %v4238, %v4240
        %v4242 = vrot.slane %v4214, %v4241
        %v4243 = vcombine.low %v4221, %v4228
        %v4244 = vcombine.low %v4235, %v4242
        %v4246 = vunpack.c.l.s4 1966171168
        %v4247 = vunpack.c.0.s8 %v4246
        %v4248 = vlaneseq
        %v4249 = vshrl.u32 %v4248, 7
        %v4250 = vsub.s32 %v4247, %v4249
        %v4251 = vrot.slane %v4243, %v4250
        %v4253 = vunpack.c.l.s4 1966171168
        %v4254 = vunpack.c.0.s8 %v4253
        %v4255 = vlaneseq
        %v4256 = vshrl.u32 %v4255, 7
        %v4257 = vsub.s32 %v4254, %v4256
        %v4258 = vrot.slane %v4244, %v4257
        %v4259 = vcombine.low %v4251, %v4258
        %v4260 = vcombine.low %v3001, %v3005
        %v4261 = vcombine.low %v3009, %v3013
        %v4262 = vcombine.low %v3017, %v3021
        %v4263 = vcombine.low %v3025, %v3029
        %v4265 = vunpack.c.l.s4 1966171168
        %v4266 = vunpack.c.0.s8 %v4265
        %v4267 = vlaneseq
        %v4268 = vshrl.u32 %v4267, 7
        %v4269 = vsub.s32 %v4266, %v4268
        %v4270 = vrot.slane %v4260, %v4269
        %v4272 = vunpack.c.l.s4 1966171168
        %v4273 = vunpack.c.0.s8 %v4272
        %v4274 = vlaneseq
        %v4275 = vshrl.u32 %v4274, 7
        %v4276 = vsub.s32 %v4273, %v4275
        %v4277 = vrot.slane %v4261, %v4276
        %v4279 = vunpack.c.l.s4 1966171168
        %v4280 = vunpack.c.0.s8 %v4279
        %v4281 = vlaneseq
        %v4282 = vshrl.u32 %v4281, 7
        %v4283 = vsub.s32 %v4280, %v4282
        %v4284 = vrot.slane %v4262, %v4283
        %v4286 = vunpack.c.l.s4 1966171168
        %v4287 = vunpack.c.0.s8 %v4286
        %v4288 = vlaneseq
        %v4289 = vshrl.u32 %v4288, 7
        %v4290 = vsub.s32 %v4287, %v4289
        %v4291 = vrot.slane %v4263, %v4290
        %v4292 = vcombine.low %v4270, %v4277
        %v4293 = vcombine.low %v4284, %v4291
        %v4295 = vunpack.c.l.s4 1966171168
        %v4296 = vunpack.c.0.s8 %v4295
        %v4297 = vlaneseq
        %v4298 = vshrl.u32 %v4297, 7
        %v4299 = vsub.s32 %v4296, %v4298
        %v4300 = vrot.slane %v4292, %v4299
        %v4302 = vunpack.c.l.s4 1966171168
        %v4303 = vunpack.c.0.s8 %v4302
        %v4304 = vlaneseq
        %v4305 = vshrl.u32 %v4304, 7
        %v4306 = vsub.s32 %v4303, %v4305
        %v4307 = vrot.slane %v4293, %v4306
        %v4308 = vcombine.low %v4300, %v4307
        %v4309 = vcombine.low %v3033, %v3037
        %v4310 = vcombine.low %v3041, %v3045
        %v4311 = vcombine.low %v3049, %v3053
        %v4312 = vcombine.low %v3057, %v3061
        %v4314 = vunpack.c.l.s4 1966171168
        %v4315 = vunpack.c.0.s8 %v4314
        %v4316 = vlaneseq
        %v4317 = vshrl.u32 %v4316, 7
        %v4318 = vsub.s32 %v4315, %v4317
        %v4319 = vrot.slane %v4309, %v4318
        %v4321 = vunpack.c.l.s4 1966171168
        %v4322 = vunpack.c.0.s8 %v4321
        %v4323 = vlaneseq
        %v4324 = vshrl.u32 %v4323, 7
        %v4325 = vsub.s32 %v4322, %v4324
        %v4326 = vrot.slane %v4310, %v4325
        %v4328 = vunpack.c.l.s4 1966171168
        %v4329 = vunpack.c.0.s8 %v4328
        %v4330 = vlaneseq
        %v4331 = vshrl.u32 %v4330, 7
        %v4332 = vsub.s32 %v4329, %v4331
        %v4333 = vrot.slane %v4311, %v4332
        %v4335 = vunpack.c.l.s4 1966171168
        %v4336 = vunpack.c.0.s8 %v4335
        %v4337 = vlaneseq
        %v4338 = vshrl.u32 %v4337, 7
        %v4339 = vsub.s32 %v4336, %v4338
        %v4340 = vrot.slane %v4312, %v4339
        %v4341 = vcombine.low %v4319, %v4326
        %v4342 = vcombine.low %v4333, %v4340
        %v4344 = vunpack.c.l.s4 1966171168
        %v4345 = vunpack.c.0.s8 %v4344
        %v4346 = vlaneseq
        %v4347 = vshrl.u32 %v4346, 7
        %v4348 = vsub.s32 %v4345, %v4347
        %v4349 = vrot.slane %v4341, %v4348
        %v4351 = vunpack.c.l.s4 1966171168
        %v4352 = vunpack.c.0.s8 %v4351
        %v4353 = vlaneseq
        %v4354 = vshrl.u32 %v4353, 7
        %v4355 = vsub.s32 %v4352, %v4354
        %v4356 = vrot.slane %v4342, %v4355
        %v4357 = vcombine.low %v4349, %v4356
        %v4358 = vcombine.low %v3065, %v3069
        %v4359 = vcombine.low %v3073, %v3077
        %v4360 = vcombine.low %v3081, %v3085
        %v4361 = vcombine.low %v3089, %v3093
        %v4363 = vunpack.c.l.s4 1966171168
        %v4364 = vunpack.c.0.s8 %v4363
        %v4365 = vlaneseq
        %v4366 = vshrl.u32 %v4365, 7
        %v4367 = vsub.s32 %v4364, %v4366
        %v4368 = vrot.slane %v4358, %v4367
        %v4370 = vunpack.c.l.s4 1966171168
        %v4371 = vunpack.c.0.s8 %v4370
        %v4372 = vlaneseq
        %v4373 = vshrl.u32 %v4372, 7
        %v4374 = vsub.s32 %v4371, %v4373
        %v4375 = vrot.slane %v4359, %v4374
        %v4377 = vunpack.c.l.s4 1966171168
        %v4378 = vunpack.c.0.s8 %v4377
        %v4379 = vlaneseq
        %v4380 = vshrl.u32 %v4379, 7
        %v4381 = vsub.s32 %v4378, %v4380
        %v4382 = vrot.slane %v4360, %v4381
        %v4384 = vunpack.c.l.s4 1966171168
        %v4385 = vunpack.c.0.s8 %v4384
        %v4386 = vlaneseq
        %v4387 = vshrl.u32 %v4386, 7
        %v4388 = vsub.s32 %v4385, %v4387
        %v4389 = vrot.slane %v4361, %v4388
        %v4390 = vcombine.low %v4368, %v4375
        %v4391 = vcombine.low %v4382, %v4389
        %v4393 = vunpack.c.l.s4 1966171168
        %v4394 = vunpack.c.0.s8 %v4393
        %v4395 = vlaneseq
        %v4396 = vshrl.u32 %v4395, 7
        %v4397 = vsub.s32 %v4394, %v4396
        %v4398 = vrot.slane %v4390, %v4397
        %v4400 = vunpack.c.l.s4 1966171168
        %v4401 = vunpack.c.0.s8 %v4400
        %v4402 = vlaneseq
        %v4403 = vshrl.u32 %v4402, 7
        %v4404 = vsub.s32 %v4401, %v4403
        %v4405 = vrot.slane %v4391, %v4404
        %v4406 = vcombine.low %v4398, %v4405
        %v4407 = vcombine.low %v3097, %v3101
        %v4408 = vcombine.low %v3105, %v3109
        %v4409 = vcombine.low %v3113, %v3117
        %v4410 = vcombine.low %v3121, %v3125
        %v4412 = vunpack.c.l.s4 1966171168
        %v4413 = vunpack.c.0.s8 %v4412
        %v4414 = vlaneseq
        %v4415 = vshrl.u32 %v4414, 7
        %v4416 = vsub.s32 %v4413, %v4415
        %v4417 = vrot.slane %v4407, %v4416
        %v4419 = vunpack.c.l.s4 1966171168
        %v4420 = vunpack.c.0.s8 %v4419
        %v4421 = vlaneseq
        %v4422 = vshrl.u32 %v4421, 7
        %v4423 = vsub.s32 %v4420, %v4422
        %v4424 = vrot.slane %v4408, %v4423
        %v4426 = vunpack.c.l.s4 1966171168
        %v4427 = vunpack.c.0.s8 %v4426
        %v4428 = vlaneseq
        %v4429 = vshrl.u32 %v4428, 7
        %v4430 = vsub.s32 %v4427, %v4429
        %v4431 = vrot.slane %v4409, %v4430
        %v4433 = vunpack.c.l.s4 1966171168
        %v4434 = vunpack.c.0.s8 %v4433
        %v4435 = vlaneseq
        %v4436 = vshrl.u32 %v4435, 7
        %v4437 = vsub.s32 %v4434, %v4436
        %v4438 = vrot.slane %v4410, %v4437
        %v4439 = vcombine.low %v4417, %v4424
        %v4440 = vcombine.low %v4431, %v4438
        %v4442 = vunpack.c.l.s4 1966171168
        %v4443 = vunpack.c.0.s8 %v4442
        %v4444 = vlaneseq
        %v4445 = vshrl.u32 %v4444, 7
        %v4446 = vsub.s32 %v4443, %v4445
        %v4447 = vrot.slane %v4439, %v4446
        %v4449 = vunpack.c.l.s4 1966171168
        %v4450 = vunpack.c.0.s8 %v4449
        %v4451 = vlaneseq
        %v4452 = vshrl.u32 %v4451, 7
        %v4453 = vsub.s32 %v4450, %v4452
        %v4454 = vrot.slane %v4440, %v4453
        %v4455 = vcombine.low %v4447, %v4454
        %v4456 = vcombine.low %v3129, %v3133
        %v4457 = vcombine.low %v3137, %v3141
        %v4458 = vcombine.low %v3145, %v3149
        %v4459 = vcombine.low %v3153, %v3157
        %v4461 = vunpack.c.l.s4 1966171168
        %v4462 = vunpack.c.0.s8 %v4461
        %v4463 = vlaneseq
        %v4464 = vshrl.u32 %v4463, 7
        %v4465 = vsub.s32 %v4462, %v4464
        %v4466 = vrot.slane %v4456, %v4465
        %v4468 = vunpack.c.l.s4 1966171168
        %v4469 = vunpack.c.0.s8 %v4468
        %v4470 = vlaneseq
        %v4471 = vshrl.u32 %v4470, 7
        %v4472 = vsub.s32 %v4469, %v4471
        %v4473 = vrot.slane %v4457, %v4472
        %v4475 = vunpack.c.l.s4 1966171168
        %v4476 = vunpack.c.0.s8 %v4475
        %v4477 = vlaneseq
        %v4478 = vshrl.u32 %v4477, 7
        %v4479 = vsub.s32 %v4476, %v4478
        %v4480 = vrot.slane %v4458, %v4479
        %v4482 = vunpack.c.l.s4 1966171168
        %v4483 = vunpack.c.0.s8 %v4482
        %v4484 = vlaneseq
        %v4485 = vshrl.u32 %v4484, 7
        %v4486 = vsub.s32 %v4483, %v4485
        %v4487 = vrot.slane %v4459, %v4486
        %v4488 = vcombine.low %v4466, %v4473
        %v4489 = vcombine.low %v4480, %v4487
        %v4491 = vunpack.c.l.s4 1966171168
        %v4492 = vunpack.c.0.s8 %v4491
        %v4493 = vlaneseq
        %v4494 = vshrl.u32 %v4493, 7
        %v4495 = vsub.s32 %v4492, %v4494
        %v4496 = vrot.slane %v4488, %v4495
        %v4498 = vunpack.c.l.s4 1966171168
        %v4499 = vunpack.c.0.s8 %v4498
        %v4500 = vlaneseq
        %v4501 = vshrl.u32 %v4500, 7
        %v4502 = vsub.s32 %v4499, %v4501
        %v4503 = vrot.slane %v4489, %v4502
        %v4504 = vcombine.low %v4496, %v4503
        %v4505 = vcombine.low %v3161, %v3165
        %v4506 = vcombine.low %v3169, %v3173
        %v4507 = vcombine.low %v3177, %v3181
        %v4508 = vcombine.low %v3185, %v3189
        %v4510 = vunpack.c.l.s4 1966171168
        %v4511 = vunpack.c.0.s8 %v4510
        %v4512 = vlaneseq
        %v4513 = vshrl.u32 %v4512, 7
        %v4514 = vsub.s32 %v4511, %v4513
        %v4515 = vrot.slane %v4505, %v4514
        %v4517 = vunpack.c.l.s4 1966171168
        %v4518 = vunpack.c.0.s8 %v4517
        %v4519 = vlaneseq
        %v4520 = vshrl.u32 %v4519, 7
        %v4521 = vsub.s32 %v4518, %v4520
        %v4522 = vrot.slane %v4506, %v4521
        %v4524 = vunpack.c.l.s4 1966171168
        %v4525 = vunpack.c.0.s8 %v4524
        %v4526 = vlaneseq
        %v4527 = vshrl.u32 %v4526, 7
        %v4528 = vsub.s32 %v4525, %v4527
        %v4529 = vrot.slane %v4507, %v4528
        %v4531 = vunpack.c.l.s4 1966171168
        %v4532 = vunpack.c.0.s8 %v4531
        %v4533 = vlaneseq
        %v4534 = vshrl.u32 %v4533, 7
        %v4535 = vsub.s32 %v4532, %v4534
        %v4536 = vrot.slane %v4508, %v4535
        %v4537 = vcombine.low %v4515, %v4522
        %v4538 = vcombine.low %v4529, %v4536
        %v4540 = vunpack.c.l.s4 1966171168
        %v4541 = vunpack.c.0.s8 %v4540
        %v4542 = vlaneseq
        %v4543 = vshrl.u32 %v4542, 7
        %v4544 = vsub.s32 %v4541, %v4543
        %v4545 = vrot.slane %v4537, %v4544
        %v4547 = vunpack.c.l.s4 1966171168
        %v4548 = vunpack.c.0.s8 %v4547
        %v4549 = vlaneseq
        %v4550 = vshrl.u32 %v4549, 7
        %v4551 = vsub.s32 %v4548, %v4550
        %v4552 = vrot.slane %v4538, %v4551
        %v4553 = vcombine.low %v4545, %v4552
        %v4554 = vcombine.low %v3193, %v3197
        %v4555 = vcombine.low %v3201, %v3205
        %v4556 = vcombine.low %v3209, %v3213
        %v4557 = vcombine.low %v3217, %v3221
        %v4559 = vunpack.c.l.s4 1966171168
        %v4560 = vunpack.c.0.s8 %v4559
        %v4561 = vlaneseq
        %v4562 = vshrl.u32 %v4561, 7
        %v4563 = vsub.s32 %v4560, %v4562
        %v4564 = vrot.slane %v4554, %v4563
        %v4566 = vunpack.c.l.s4 1966171168
        %v4567 = vunpack.c.0.s8 %v4566
        %v4568 = vlaneseq
        %v4569 = vshrl.u32 %v4568, 7
        %v4570 = vsub.s32 %v4567, %v4569
        %v4571 = vrot.slane %v4555, %v4570
        %v4573 = vunpack.c.l.s4 1966171168
        %v4574 = vunpack.c.0.s8 %v4573
        %v4575 = vlaneseq
        %v4576 = vshrl.u32 %v4575, 7
        %v4577 = vsub.s32 %v4574, %v4576
        %v4578 = vrot.slane %v4556, %v4577
        %v4580 = vunpack.c.l.s4 1966171168
        %v4581 = vunpack.c.0.s8 %v4580
        %v4582 = vlaneseq
        %v4583 = vshrl.u32 %v4582, 7
        %v4584 = vsub.s32 %v4581, %v4583
        %v4585 = vrot.slane %v4557, %v4584
        %v4586 = vcombine.low %v4564, %v4571
        %v4587 = vcombine.low %v4578, %v4585
        %v4589 = vunpack.c.l.s4 1966171168
        %v4590 = vunpack.c.0.s8 %v4589
        %v4591 = vlaneseq
        %v4592 = vshrl.u32 %v4591, 7
        %v4593 = vsub.s32 %v4590, %v4592
        %v4594 = vrot.slane %v4586, %v4593
        %v4596 = vunpack.c.l.s4 1966171168
        %v4597 = vunpack.c.0.s8 %v4596
        %v4598 = vlaneseq
        %v4599 = vshrl.u32 %v4598, 7
        %v4600 = vsub.s32 %v4597, %v4599
        %v4601 = vrot.slane %v4587, %v4600
        %v4602 = vcombine.low %v4594, %v4601
        %v4603 = vcombine.low %v3225, %v3229
        %v4604 = vcombine.low %v3233, %v3237
        %v4605 = vcombine.low %v3241, %v3245
        %v4606 = vcombine.low %v3249, %v3253
        %v4608 = vunpack.c.l.s4 1966171168
        %v4609 = vunpack.c.0.s8 %v4608
        %v4610 = vlaneseq
        %v4611 = vshrl.u32 %v4610, 7
        %v4612 = vsub.s32 %v4609, %v4611
        %v4613 = vrot.slane %v4603, %v4612
        %v4615 = vunpack.c.l.s4 1966171168
        %v4616 = vunpack.c.0.s8 %v4615
        %v4617 = vlaneseq
        %v4618 = vshrl.u32 %v4617, 7
        %v4619 = vsub.s32 %v4616, %v4618
        %v4620 = vrot.slane %v4604, %v4619
        %v4622 = vunpack.c.l.s4 1966171168
        %v4623 = vunpack.c.0.s8 %v4622
        %v4624 = vlaneseq
        %v4625 = vshrl.u32 %v4624, 7
        %v4626 = vsub.s32 %v4623, %v4625
        %v4627 = vrot.slane %v4605, %v4626
        %v4629 = vunpack.c.l.s4 1966171168
        %v4630 = vunpack.c.0.s8 %v4629
        %v4631 = vlaneseq
        %v4632 = vshrl.u32 %v4631, 7
        %v4633 = vsub.s32 %v4630, %v4632
        %v4634 = vrot.slane %v4606, %v4633
        %v4635 = vcombine.low %v4613, %v4620
        %v4636 = vcombine.low %v4627, %v4634
        %v4638 = vunpack.c.l.s4 1966171168
        %v4639 = vunpack.c.0.s8 %v4638
        %v4640 = vlaneseq
        %v4641 = vshrl.u32 %v4640, 7
        %v4642 = vsub.s32 %v4639, %v4641
        %v4643 = vrot.slane %v4635, %v4642
        %v4645 = vunpack.c.l.s4 1966171168
        %v4646 = vunpack.c.0.s8 %v4645
        %v4647 = vlaneseq
        %v4648 = vshrl.u32 %v4647, 7
        %v4649 = vsub.s32 %v4646, %v4648
        %v4650 = vrot.slane %v4636, %v4649
        %v4651 = vcombine.low %v4643, %v4650
        %v4652 = vcombine.low %v3257, %v3261
        %v4653 = vcombine.low %v3265, %v3269
        %v4654 = vcombine.low %v3273, %v3277
        %v4655 = vcombine.low %v3281, %v3285
        %v4657 = vunpack.c.l.s4 1966171168
        %v4658 = vunpack.c.0.s8 %v4657
        %v4659 = vlaneseq
        %v4660 = vshrl.u32 %v4659, 7
        %v4661 = vsub.s32 %v4658, %v4660
        %v4662 = vrot.slane %v4652, %v4661
        %v4664 = vunpack.c.l.s4 1966171168
        %v4665 = vunpack.c.0.s8 %v4664
        %v4666 = vlaneseq
        %v4667 = vshrl.u32 %v4666, 7
        %v4668 = vsub.s32 %v4665, %v4667
        %v4669 = vrot.slane %v4653, %v4668
        %v4671 = vunpack.c.l.s4 1966171168
        %v4672 = vunpack.c.0.s8 %v4671
        %v4673 = vlaneseq
        %v4674 = vshrl.u32 %v4673, 7
        %v4675 = vsub.s32 %v4672, %v4674
        %v4676 = vrot.slane %v4654, %v4675
        %v4678 = vunpack.c.l.s4 1966171168
        %v4679 = vunpack.c.0.s8 %v4678
        %v4680 = vlaneseq
        %v4681 = vshrl.u32 %v4680, 7
        %v4682 = vsub.s32 %v4679, %v4681
        %v4683 = vrot.slane %v4655, %v4682
        %v4684 = vcombine.low %v4662, %v4669
        %v4685 = vcombine.low %v4676, %v4683
        %v4687 = vunpack.c.l.s4 1966171168
        %v4688 = vunpack.c.0.s8 %v4687
        %v4689 = vlaneseq
        %v4690 = vshrl.u32 %v4689, 7
        %v4691 = vsub.s32 %v4688, %v4690
        %v4692 = vrot.slane %v4684, %v4691
        %v4694 = vunpack.c.l.s4 1966171168
        %v4695 = vunpack.c.0.s8 %v4694
        %v4696 = vlaneseq
        %v4697 = vshrl.u32 %v4696, 7
        %v4698 = vsub.s32 %v4695, %v4697
        %v4699 = vrot.slane %v4685, %v4698
        %v4700 = vcombine.low %v4692, %v4699
        %v4701 = vcombine.low %v3289, %v3293
        %v4702 = vcombine.low %v3297, %v3301
        %v4703 = vcombine.low %v3305, %v3309
        %v4704 = vcombine.low %v3313, %v3317
        %v4706 = vunpack.c.l.s4 1966171168
        %v4707 = vunpack.c.0.s8 %v4706
        %v4708 = vlaneseq
        %v4709 = vshrl.u32 %v4708, 7
        %v4710 = vsub.s32 %v4707, %v4709
        %v4711 = vrot.slane %v4701, %v4710
        %v4713 = vunpack.c.l.s4 1966171168
        %v4714 = vunpack.c.0.s8 %v4713
        %v4715 = vlaneseq
        %v4716 = vshrl.u32 %v4715, 7
        %v4717 = vsub.s32 %v4714, %v4716
        %v4718 = vrot.slane %v4702, %v4717
        %v4720 = vunpack.c.l.s4 1966171168
        %v4721 = vunpack.c.0.s8 %v4720
        %v4722 = vlaneseq
        %v4723 = vshrl.u32 %v4722, 7
        %v4724 = vsub.s32 %v4721, %v4723
        %v4725 = vrot.slane %v4703, %v4724
        %v4727 = vunpack.c.l.s4 1966171168
        %v4728 = vunpack.c.0.s8 %v4727
        %v4729 = vlaneseq
        %v4730 = vshrl.u32 %v4729, 7
        %v4731 = vsub.s32 %v4728, %v4730
        %v4732 = vrot.slane %v4704, %v4731
        %v4733 = vcombine.low %v4711, %v4718
        %v4734 = vcombine.low %v4725, %v4732
        %v4736 = vunpack.c.l.s4 1966171168
        %v4737 = vunpack.c.0.s8 %v4736
        %v4738 = vlaneseq
        %v4739 = vshrl.u32 %v4738, 7
        %v4740 = vsub.s32 %v4737, %v4739
        %v4741 = vrot.slane %v4733, %v4740
        %v4743 = vunpack.c.l.s4 1966171168
        %v4744 = vunpack.c.0.s8 %v4743
        %v4745 = vlaneseq
        %v4746 = vshrl.u32 %v4745, 7
        %v4747 = vsub.s32 %v4744, %v4746
        %v4748 = vrot.slane %v4734, %v4747
        %v4749 = vcombine.low %v4741, %v4748
        %v4750 = vcombine.low %v3321, %v3325
        %v4751 = vcombine.low %v3329, %v3333
        %v4752 = vcombine.low %v3337, %v3341
        %v4753 = vcombine.low %v3345, %v3349
        %v4755 = vunpack.c.l.s4 1966171168
        %v4756 = vunpack.c.0.s8 %v4755
        %v4757 = vlaneseq
        %v4758 = vshrl.u32 %v4757, 7
        %v4759 = vsub.s32 %v4756, %v4758
        %v4760 = vrot.slane %v4750, %v4759
        %v4762 = vunpack.c.l.s4 1966171168
        %v4763 = vunpack.c.0.s8 %v4762
        %v4764 = vlaneseq
        %v4765 = vshrl.u32 %v4764, 7
        %v4766 = vsub.s32 %v4763, %v4765
        %v4767 = vrot.slane %v4751, %v4766
        %v4769 = vunpack.c.l.s4 1966171168
        %v4770 = vunpack.c.0.s8 %v4769
        %v4771 = vlaneseq
        %v4772 = vshrl.u32 %v4771, 7
        %v4773 = vsub.s32 %v4770, %v4772
        %v4774 = vrot.slane %v4752, %v4773
        %v4776 = vunpack.c.l.s4 1966171168
        %v4777 = vunpack.c.0.s8 %v4776
        %v4778 = vlaneseq
        %v4779 = vshrl.u32 %v4778, 7
        %v4780 = vsub.s32 %v4777, %v4779
        %v4781 = vrot.slane %v4753, %v4780
        %v4782 = vcombine.low %v4760, %v4767
        %v4783 = vcombine.low %v4774, %v4781
        %v4785 = vunpack.c.l.s4 1966171168
        %v4786 = vunpack.c.0.s8 %v4785
        %v4787 = vlaneseq
        %v4788 = vshrl.u32 %v4787, 7
        %v4789 = vsub.s32 %v4786, %v4788
        %v4790 = vrot.slane %v4782, %v4789
        %v4792 = vunpack.c.l.s4 1966171168
        %v4793 = vunpack.c.0.s8 %v4792
        %v4794 = vlaneseq
        %v4795 = vshrl.u32 %v4794, 7
        %v4796 = vsub.s32 %v4793, %v4795
        %v4797 = vrot.slane %v4783, %v4796
        %v4798 = vcombine.low %v4790, %v4797
        %v4799 = vcombine.low %v3353, %v3357
        %v4800 = vcombine.low %v3361, %v3365
        %v4801 = vcombine.low %v3369, %v3373
        %v4802 = vcombine.low %v3377, %v3381
        %v4804 = vunpack.c.l.s4 1966171168
        %v4805 = vunpack.c.0.s8 %v4804
        %v4806 = vlaneseq
        %v4807 = vshrl.u32 %v4806, 7
        %v4808 = vsub.s32 %v4805, %v4807
        %v4809 = vrot.slane %v4799, %v4808
        %v4811 = vunpack.c.l.s4 1966171168
        %v4812 = vunpack.c.0.s8 %v4811
        %v4813 = vlaneseq
        %v4814 = vshrl.u32 %v4813, 7
        %v4815 = vsub.s32 %v4812, %v4814
        %v4816 = vrot.slane %v4800, %v4815
        %v4818 = vunpack.c.l.s4 1966171168
        %v4819 = vunpack.c.0.s8 %v4818
        %v4820 = vlaneseq
        %v4821 = vshrl.u32 %v4820, 7
        %v4822 = vsub.s32 %v4819, %v4821
        %v4823 = vrot.slane %v4801, %v4822
        %v4825 = vunpack.c.l.s4 1966171168
        %v4826 = vunpack.c.0.s8 %v4825
        %v4827 = vlaneseq
        %v4828 = vshrl.u32 %v4827, 7
        %v4829 = vsub.s32 %v4826, %v4828
        %v4830 = vrot.slane %v4802, %v4829
        %v4831 = vcombine.low %v4809, %v4816
        %v4832 = vcombine.low %v4823, %v4830
        %v4834 = vunpack.c.l.s4 1966171168
        %v4835 = vunpack.c.0.s8 %v4834
        %v4836 = vlaneseq
        %v4837 = vshrl.u32 %v4836, 7
        %v4838 = vsub.s32 %v4835, %v4837
        %v4839 = vrot.slane %v4831, %v4838
        %v4841 = vunpack.c.l.s4 1966171168
        %v4842 = vunpack.c.0.s8 %v4841
        %v4843 = vlaneseq
        %v4844 = vshrl.u32 %v4843, 7
        %v4845 = vsub.s32 %v4842, %v4844
        %v4846 = vrot.slane %v4832, %v4845
        %v4847 = vcombine.low %v4839, %v4846
        %v4848 = vcombine.low %v3385, %v3389
        %v4849 = vcombine.low %v3393, %v3397
        %v4850 = vcombine.low %v3401, %v3405
        %v4851 = vcombine.low %v3409, %v3413
        %v4853 = vunpack.c.l.s4 1966171168
        %v4854 = vunpack.c.0.s8 %v4853
        %v4855 = vlaneseq
        %v4856 = vshrl.u32 %v4855, 7
        %v4857 = vsub.s32 %v4854, %v4856
        %v4858 = vrot.slane %v4848, %v4857
        %v4860 = vunpack.c.l.s4 1966171168
        %v4861 = vunpack.c.0.s8 %v4860
        %v4862 = vlaneseq
        %v4863 = vshrl.u32 %v4862, 7
        %v4864 = vsub.s32 %v4861, %v4863
        %v4865 = vrot.slane %v4849, %v4864
        %v4867 = vunpack.c.l.s4 1966171168
        %v4868 = vunpack.c.0.s8 %v4867
        %v4869 = vlaneseq
        %v4870 = vshrl.u32 %v4869, 7
        %v4871 = vsub.s32 %v4868, %v4870
        %v4872 = vrot.slane %v4850, %v4871
        %v4874 = vunpack.c.l.s4 1966171168
        %v4875 = vunpack.c.0.s8 %v4874
        %v4876 = vlaneseq
        %v4877 = vshrl.u32 %v4876, 7
        %v4878 = vsub.s32 %v4875, %v4877
        %v4879 = vrot.slane %v4851, %v4878
        %v4880 = vcombine.low %v4858, %v4865
        %v4881 = vcombine.low %v4872, %v4879
        %v4883 = vunpack.c.l.s4 1966171168
        %v4884 = vunpack.c.0.s8 %v4883
        %v4885 = vlaneseq
        %v4886 = vshrl.u32 %v4885, 7
        %v4887 = vsub.s32 %v4884, %v4886
        %v4888 = vrot.slane %v4880, %v4887
        %v4890 = vunpack.c.l.s4 1966171168
        %v4891 = vunpack.c.0.s8 %v4890
        %v4892 = vlaneseq
        %v4893 = vshrl.u32 %v4892, 7
        %v4894 = vsub.s32 %v4891, %v4893
        %v4895 = vrot.slane %v4881, %v4894
        %v4896 = vcombine.low %v4888, %v4895
        %v4897 = vcombine.low %v3417, %v3421
        %v4898 = vcombine.low %v3425, %v3429
        %v4899 = vcombine.low %v3433, %v3437
        %v4900 = vcombine.low %v3441, %v3445
        %v4902 = vunpack.c.l.s4 1966171168
        %v4903 = vunpack.c.0.s8 %v4902
        %v4904 = vlaneseq
        %v4905 = vshrl.u32 %v4904, 7
        %v4906 = vsub.s32 %v4903, %v4905
        %v4907 = vrot.slane %v4897, %v4906
        %v4909 = vunpack.c.l.s4 1966171168
        %v4910 = vunpack.c.0.s8 %v4909
        %v4911 = vlaneseq
        %v4912 = vshrl.u32 %v4911, 7
        %v4913 = vsub.s32 %v4910, %v4912
        %v4914 = vrot.slane %v4898, %v4913
        %v4916 = vunpack.c.l.s4 1966171168
        %v4917 = vunpack.c.0.s8 %v4916
        %v4918 = vlaneseq
        %v4919 = vshrl.u32 %v4918, 7
        %v4920 = vsub.s32 %v4917, %v4919
        %v4921 = vrot.slane %v4899, %v4920
        %v4923 = vunpack.c.l.s4 1966171168
        %v4924 = vunpack.c.0.s8 %v4923
        %v4925 = vlaneseq
        %v4926 = vshrl.u32 %v4925, 7
        %v4927 = vsub.s32 %v4924, %v4926
        %v4928 = vrot.slane %v4900, %v4927
        %v4929 = vcombine.low %v4907, %v4914
        %v4930 = vcombine.low %v4921, %v4928
        %v4932 = vunpack.c.l.s4 1966171168
        %v4933 = vunpack.c.0.s8 %v4932
        %v4934 = vlaneseq
        %v4935 = vshrl.u32 %v4934, 7
        %v4936 = vsub.s32 %v4933, %v4935
        %v4937 = vrot.slane %v4929, %v4936
        %v4939 = vunpack.c.l.s4 1966171168
        %v4940 = vunpack.c.0.s8 %v4939
        %v4941 = vlaneseq
        %v4942 = vshrl.u32 %v4941, 7
        %v4943 = vsub.s32 %v4940, %v4942
        %v4944 = vrot.slane %v4930, %v4943
        %v4945 = vcombine.low %v4937, %v4944
        %v4946 = vcombine.low %v3449, %v3453
        %v4947 = vcombine.low %v3457, %v3461
        %v4948 = vcombine.low %v3465, %v3469
        %v4949 = vcombine.low %v3473, %v3477
        %v4951 = vunpack.c.l.s4 1966171168
        %v4952 = vunpack.c.0.s8 %v4951
        %v4953 = vlaneseq
        %v4954 = vshrl.u32 %v4953, 7
        %v4955 = vsub.s32 %v4952, %v4954
        %v4956 = vrot.slane %v4946, %v4955
        %v4958 = vunpack.c.l.s4 1966171168
        %v4959 = vunpack.c.0.s8 %v4958
        %v4960 = vlaneseq
        %v4961 = vshrl.u32 %v4960, 7
        %v4962 = vsub.s32 %v4959, %v4961
        %v4963 = vrot.slane %v4947, %v4962
        %v4965 = vunpack.c.l.s4 1966171168
        %v4966 = vunpack.c.0.s8 %v4965
        %v4967 = vlaneseq
        %v4968 = vshrl.u32 %v4967, 7
        %v4969 = vsub.s32 %v4966, %v4968
        %v4970 = vrot.slane %v4948, %v4969
        %v4972 = vunpack.c.l.s4 1966171168
        %v4973 = vunpack.c.0.s8 %v4972
        %v4974 = vlaneseq
        %v4975 = vshrl.u32 %v4974, 7
        %v4976 = vsub.s32 %v4973, %v4975
        %v4977 = vrot.slane %v4949, %v4976
        %v4978 = vcombine.low %v4956, %v4963
        %v4979 = vcombine.low %v4970, %v4977
        %v4981 = vunpack.c.l.s4 1966171168
        %v4982 = vunpack.c.0.s8 %v4981
        %v4983 = vlaneseq
        %v4984 = vshrl.u32 %v4983, 7
        %v4985 = vsub.s32 %v4982, %v4984
        %v4986 = vrot.slane %v4978, %v4985
        %v4988 = vunpack.c.l.s4 1966171168
        %v4989 = vunpack.c.0.s8 %v4988
        %v4990 = vlaneseq
        %v4991 = vshrl.u32 %v4990, 7
        %v4992 = vsub.s32 %v4989, %v4991
        %v4993 = vrot.slane %v4979, %v4992
        %v4994 = vcombine.low %v4986, %v4993
        %v4995 = vcombine.low %v3481, %v3485
        %v4996 = vcombine.low %v3489, %v3493
        %v4997 = vcombine.low %v3497, %v3501
        %v4998 = vcombine.low %v3505, %v3509
        %v5000 = vunpack.c.l.s4 1966171168
        %v5001 = vunpack.c.0.s8 %v5000
        %v5002 = vlaneseq
        %v5003 = vshrl.u32 %v5002, 7
        %v5004 = vsub.s32 %v5001, %v5003
        %v5005 = vrot.slane %v4995, %v5004
        %v5007 = vunpack.c.l.s4 1966171168
        %v5008 = vunpack.c.0.s8 %v5007
        %v5009 = vlaneseq
        %v5010 = vshrl.u32 %v5009, 7
        %v5011 = vsub.s32 %v5008, %v5010
        %v5012 = vrot.slane %v4996, %v5011
        %v5014 = vunpack.c.l.s4 1966171168
        %v5015 = vunpack.c.0.s8 %v5014
        %v5016 = vlaneseq
        %v5017 = vshrl.u32 %v5016, 7
        %v5018 = vsub.s32 %v5015, %v5017
        %v5019 = vrot.slane %v4997, %v5018
        %v5021 = vunpack.c.l.s4 1966171168
        %v5022 = vunpack.c.0.s8 %v5021
        %v5023 = vlaneseq
        %v5024 = vshrl.u32 %v5023, 7
        %v5025 = vsub.s32 %v5022, %v5024
        %v5026 = vrot.slane %v4998, %v5025
        %v5027 = vcombine.low %v5005, %v5012
        %v5028 = vcombine.low %v5019, %v5026
        %v5030 = vunpack.c.l.s4 1966171168
        %v5031 = vunpack.c.0.s8 %v5030
        %v5032 = vlaneseq
        %v5033 = vshrl.u32 %v5032, 7
        %v5034 = vsub.s32 %v5031, %v5033
        %v5035 = vrot.slane %v5027, %v5034
        %v5037 = vunpack.c.l.s4 1966171168
        %v5038 = vunpack.c.0.s8 %v5037
        %v5039 = vlaneseq
        %v5040 = vshrl.u32 %v5039, 7
        %v5041 = vsub.s32 %v5038, %v5040
        %v5042 = vrot.slane %v5028, %v5041
        %v5043 = vcombine.low %v5035, %v5042
        %v5044 = vcombine.low %v3513, %v3517
        %v5045 = vcombine.low %v3521, %v3525
        %v5046 = vcombine.low %v3529, %v3533
        %v5047 = vcombine.low %v3537, %v3541
        %v5049 = vunpack.c.l.s4 1966171168
        %v5050 = vunpack.c.0.s8 %v5049
        %v5051 = vlaneseq
        %v5052 = vshrl.u32 %v5051, 7
        %v5053 = vsub.s32 %v5050, %v5052
        %v5054 = vrot.slane %v5044, %v5053
        %v5056 = vunpack.c.l.s4 1966171168
        %v5057 = vunpack.c.0.s8 %v5056
        %v5058 = vlaneseq
        %v5059 = vshrl.u32 %v5058, 7
        %v5060 = vsub.s32 %v5057, %v5059
        %v5061 = vrot.slane %v5045, %v5060
        %v5063 = vunpack.c.l.s4 1966171168
        %v5064 = vunpack.c.0.s8 %v5063
        %v5065 = vlaneseq
        %v5066 = vshrl.u32 %v5065, 7
        %v5067 = vsub.s32 %v5064, %v5066
        %v5068 = vrot.slane %v5046, %v5067
        %v5070 = vunpack.c.l.s4 1966171168
        %v5071 = vunpack.c.0.s8 %v5070
        %v5072 = vlaneseq
        %v5073 = vshrl.u32 %v5072, 7
        %v5074 = vsub.s32 %v5071, %v5073
        %v5075 = vrot.slane %v5047, %v5074
        %v5076 = vcombine.low %v5054, %v5061
        %v5077 = vcombine.low %v5068, %v5075
        %v5079 = vunpack.c.l.s4 1966171168
        %v5080 = vunpack.c.0.s8 %v5079
        %v5081 = vlaneseq
        %v5082 = vshrl.u32 %v5081, 7
        %v5083 = vsub.s32 %v5080, %v5082
        %v5084 = vrot.slane %v5076, %v5083
        %v5086 = vunpack.c.l.s4 1966171168
        %v5087 = vunpack.c.0.s8 %v5086
        %v5088 = vlaneseq
        %v5089 = vshrl.u32 %v5088, 7
        %v5090 = vsub.s32 %v5087, %v5089
        %v5091 = vrot.slane %v5077, %v5090
        %v5092 = vcombine.low %v5084, %v5091
        %v5093 = vcombine.low %v3545, %v3549
        %v5094 = vcombine.low %v3553, %v3557
        %v5095 = vcombine.low %v3561, %v3565
        %v5096 = vcombine.low %v3569, %v3573
        %v5098 = vunpack.c.l.s4 1966171168
        %v5099 = vunpack.c.0.s8 %v5098
        %v5100 = vlaneseq
        %v5101 = vshrl.u32 %v5100, 7
        %v5102 = vsub.s32 %v5099, %v5101
        %v5103 = vrot.slane %v5093, %v5102
        %v5105 = vunpack.c.l.s4 1966171168
        %v5106 = vunpack.c.0.s8 %v5105
        %v5107 = vlaneseq
        %v5108 = vshrl.u32 %v5107, 7
        %v5109 = vsub.s32 %v5106, %v5108
        %v5110 = vrot.slane %v5094, %v5109
        %v5112 = vunpack.c.l.s4 1966171168
        %v5113 = vunpack.c.0.s8 %v5112
        %v5114 = vlaneseq
        %v5115 = vshrl.u32 %v5114, 7
        %v5116 = vsub.s32 %v5113, %v5115
        %v5117 = vrot.slane %v5095, %v5116
        %v5119 = vunpack.c.l.s4 1966171168
        %v5120 = vunpack.c.0.s8 %v5119
        %v5121 = vlaneseq
        %v5122 = vshrl.u32 %v5121, 7
        %v5123 = vsub.s32 %v5120, %v5122
        %v5124 = vrot.slane %v5096, %v5123
        %v5125 = vcombine.low %v5103, %v5110
        %v5126 = vcombine.low %v5117, %v5124
        %v5128 = vunpack.c.l.s4 1966171168
        %v5129 = vunpack.c.0.s8 %v5128
        %v5130 = vlaneseq
        %v5131 = vshrl.u32 %v5130, 7
        %v5132 = vsub.s32 %v5129, %v5131
        %v5133 = vrot.slane %v5125, %v5132
        %v5135 = vunpack.c.l.s4 1966171168
        %v5136 = vunpack.c.0.s8 %v5135
        %v5137 = vlaneseq
        %v5138 = vshrl.u32 %v5137, 7
        %v5139 = vsub.s32 %v5136, %v5138
        %v5140 = vrot.slane %v5126, %v5139
        %v5141 = vcombine.low %v5133, %v5140
        %5142 = vset.pattern.permute.xlu0 0
        %5143 = vperm.xlu0 %5142, %v3622
        %v5144 = vpop.permute.xlu0 %5143
        %5145 = vset.pattern.permute.xlu0 0
        %5146 = vperm.xlu0 %5145, %v3671
        %v5147 = vpop.permute.xlu0 %5146
        %5148 = vset.pattern.permute.xlu0 0
        %5149 = vperm.xlu0 %5148, %v3720
        %v5150 = vpop.permute.xlu0 %5149
        %5151 = vset.pattern.permute.xlu0 0
        %5152 = vperm.xlu0 %5151, %v3769
        %v5153 = vpop.permute.xlu0 %5152
        %5154 = vset.pattern.permute.xlu0 0
        %5155 = vperm.xlu0 %5154, %v3818
        %v5156 = vpop.permute.xlu0 %5155
        %5157 = vset.pattern.permute.xlu0 0
        %5158 = vperm.xlu0 %5157, %v3867
        %v5159 = vpop.permute.xlu0 %5158
        %5160 = vset.pattern.permute.xlu0 0
        %5161 = vperm.xlu0 %5160, %v3916
        %v5162 = vpop.permute.xlu0 %5161
        %5163 = vset.pattern.permute.xlu0 0
        %5164 = vperm.xlu0 %5163, %v3965
        %v5165 = vpop.permute.xlu0 %5164
        %5166 = vset.pattern.permute.xlu0 0
        %5167 = vperm.xlu0 %5166, %v4014
        %v5168 = vpop.permute.xlu0 %5167
        %5169 = vset.pattern.permute.xlu0 0
        %5170 = vperm.xlu0 %5169, %v4063
        %v5171 = vpop.permute.xlu0 %5170
        %5172 = vset.pattern.permute.xlu0 0
        %5173 = vperm.xlu0 %5172, %v4112
        %v5174 = vpop.permute.xlu0 %5173
        %5175 = vset.pattern.permute.xlu0 0
        %5176 = vperm.xlu0 %5175, %v4161
        %v5177 = vpop.permute.xlu0 %5176
        %5178 = vset.pattern.permute.xlu0 0
        %5179 = vperm.xlu0 %5178, %v4210
        %v5180 = vpop.permute.xlu0 %5179
        %5181 = vset.pattern.permute.xlu0 0
        %5182 = vperm.xlu0 %5181, %v4259
        %v5183 = vpop.permute.xlu0 %5182
        %5184 = vset.pattern.permute.xlu0 0
        %5185 = vperm.xlu0 %5184, %v4308
        %v5186 = vpop.permute.xlu0 %5185
        %5187 = vset.pattern.permute.xlu0 0
        %5188 = vperm.xlu0 %5187, %v4357
        %v5189 = vpop.permute.xlu0 %5188
        %5190 = vset.pattern.permute.xlu0 0
        %5191 = vperm.xlu0 %5190, %v4406
        %v5192 = vpop.permute.xlu0 %5191
        %5193 = vset.pattern.permute.xlu0 0
        %5194 = vperm.xlu0 %5193, %v4455
        %v5195 = vpop.permute.xlu0 %5194
        %5196 = vset.pattern.permute.xlu0 0
        %5197 = vperm.xlu0 %5196, %v4504
        %v5198 = vpop.permute.xlu0 %5197
        %5199 = vset.pattern.permute.xlu0 0
        %5200 = vperm.xlu0 %5199, %v4553
        %v5201 = vpop.permute.xlu0 %5200
        %5202 = vset.pattern.permute.xlu0 0
        %5203 = vperm.xlu0 %5202, %v4602
        %v5204 = vpop.permute.xlu0 %5203
        %5205 = vset.pattern.permute.xlu0 0
        %5206 = vperm.xlu0 %5205, %v4651
        %v5207 = vpop.permute.xlu0 %5206
        %5208 = vset.pattern.permute.xlu0 0
        %5209 = vperm.xlu0 %5208, %v4700
        %v5210 = vpop.permute.xlu0 %5209
        %5211 = vset.pattern.permute.xlu0 0
        %5212 = vperm.xlu0 %5211, %v4749
        %v5213 = vpop.permute.xlu0 %5212
        %5214 = vset.pattern.permute.xlu0 0
        %5215 = vperm.xlu0 %5214, %v4798
        %v5216 = vpop.permute.xlu0 %5215
        %5217 = vset.pattern.permute.xlu0 0
        %5218 = vperm.xlu0 %5217, %v4847
        %v5219 = vpop.permute.xlu0 %5218
        %5220 = vset.pattern.permute.xlu0 0
        %5221 = vperm.xlu0 %5220, %v4896
        %v5222 = vpop.permute.xlu0 %5221
        %5223 = vset.pattern.permute.xlu0 0
        %5224 = vperm.xlu0 %5223, %v4945
        %v5225 = vpop.permute.xlu0 %5224
        %5226 = vset.pattern.permute.xlu0 0
        %5227 = vperm.xlu0 %5226, %v4994
        %v5228 = vpop.permute.xlu0 %5227
        %5229 = vset.pattern.permute.xlu0 0
        %5230 = vperm.xlu0 %5229, %v5043
        %v5231 = vpop.permute.xlu0 %5230
        %5232 = vset.pattern.permute.xlu0 0
        %5233 = vperm.xlu0 %5232, %v5092
        %v5234 = vpop.permute.xlu0 %5233
        %5235 = vset.pattern.permute.xlu0 0
        %5236 = vperm.xlu0 %5235, %v5141
        %v5237 = vpop.permute.xlu0 %5236
        %v5238 = vlaneseq
        %v5239 = vand.u32 %v5238, 127
        %v5240 = vlaneseq
        %v5241 = vshrl.u32 %v5240, 7
        %v5242 = vsub.s32 %v5239, %v5241
        %v5243 = vrot.slane %v5144, %v5242
        %v5244 = vadd.s32 %v5239, 4294967288
        %v5245 = vlaneseq
        %v5246 = vshrl.u32 %v5245, 7
        %v5247 = vsub.s32 %v5244, %v5246
        %v5248 = vrot.slane %v5147, %v5247
        %vm5249 = vcmask 130112
        %v5250 = vsel %vm5249, %v5248, %v5243
        %v5251 = vadd.s32 %v5239, 4294967280
        %v5252 = vlaneseq
        %v5253 = vshrl.u32 %v5252, 7
        %v5254 = vsub.s32 %v5251, %v5253
        %v5255 = vrot.slane %v5150, %v5254
        %vm5256 = vcmask 195712
        %v5257 = vsel %vm5256, %v5255, %v5250
        %v5258 = vadd.s32 %v5239, 4294967272
        %v5259 = vlaneseq
        %v5260 = vshrl.u32 %v5259, 7
        %v5261 = vsub.s32 %v5258, %v5260
        %v5262 = vrot.slane %v5153, %v5261
        %vm5263 = vcmask 261312
        %v5264 = vsel %vm5263, %v5262, %v5257
        %v5265 = vadd.s32 %v5239, 4294967264
        %v5266 = vlaneseq
        %v5267 = vshrl.u32 %v5266, 7
        %v5268 = vsub.s32 %v5265, %v5267
        %v5269 = vrot.slane %v5156, %v5268
        %vm5270 = vcmask 326912
        %v5271 = vsel %vm5270, %v5269, %v5264
        %v5272 = vadd.s32 %v5239, 4294967256
        %v5273 = vlaneseq
        %v5274 = vshrl.u32 %v5273, 7
        %v5275 = vsub.s32 %v5272, %v5274
        %v5276 = vrot.slane %v5159, %v5275
        %vm5277 = vcmask 392512
        %v5278 = vsel %vm5277, %v5276, %v5271
        %v5279 = vadd.s32 %v5239, 4294967248
        %v5280 = vlaneseq
        %v5281 = vshrl.u32 %v5280, 7
        %v5282 = vsub.s32 %v5279, %v5281
        %v5283 = vrot.slane %v5162, %v5282
        %vm5284 = vcmask 458112
        %v5285 = vsel %vm5284, %v5283, %v5278
        %v5286 = vadd.s32 %v5239, 4294967240
        %v5287 = vlaneseq
        %v5288 = vshrl.u32 %v5287, 7
        %v5289 = vsub.s32 %v5286, %v5288
        %v5290 = vrot.slane %v5165, %v5289
        %vm5291 = vcmask 523712
        %v5292 = vsel %vm5291, %v5290, %v5285
        %v5293 = vadd.s32 %v5239, 4294967232
        %v5294 = vlaneseq
        %v5295 = vshrl.u32 %v5294, 7
        %v5296 = vsub.s32 %v5293, %v5295
        %v5297 = vrot.slane %v5168, %v5296
        %vm5298 = vcmask 589312
        %v5299 = vsel %vm5298, %v5297, %v5292
        %v5300 = vadd.s32 %v5239, 4294967224
        %v5301 = vlaneseq
        %v5302 = vshrl.u32 %v5301, 7
        %v5303 = vsub.s32 %v5300, %v5302
        %v5304 = vrot.slane %v5171, %v5303
        %vm5305 = vcmask 654912
        %v5306 = vsel %vm5305, %v5304, %v5299
        %v5307 = vadd.s32 %v5239, 4294967216
        %v5308 = vlaneseq
        %v5309 = vshrl.u32 %v5308, 7
        %v5310 = vsub.s32 %v5307, %v5309
        %v5311 = vrot.slane %v5174, %v5310
        %vm5312 = vcmask 720512
        %v5313 = vsel %vm5312, %v5311, %v5306
        %v5314 = vadd.s32 %v5239, 4294967208
        %v5315 = vlaneseq
        %v5316 = vshrl.u32 %v5315, 7
        %v5317 = vsub.s32 %v5314, %v5316
        %v5318 = vrot.slane %v5177, %v5317
        %vm5319 = vcmask 786112
        %v5320 = vsel %vm5319, %v5318, %v5313
        %v5321 = vadd.s32 %v5239, 4294967200
        %v5322 = vlaneseq
        %v5323 = vshrl.u32 %v5322, 7
        %v5324 = vsub.s32 %v5321, %v5323
        %v5325 = vrot.slane %v5180, %v5324
        %vm5326 = vcmask 851712
        %v5327 = vsel %vm5326, %v5325, %v5320
        %v5328 = vadd.s32 %v5239, 4294967192
        %v5329 = vlaneseq
        %v5330 = vshrl.u32 %v5329, 7
        %v5331 = vsub.s32 %v5328, %v5330
        %v5332 = vrot.slane %v5183, %v5331
        %vm5333 = vcmask 917312
        %v5334 = vsel %vm5333, %v5332, %v5327
        %v5335 = vadd.s32 %v5239, 4294967184
        %v5336 = vlaneseq
        %v5337 = vshrl.u32 %v5336, 7
        %v5338 = vsub.s32 %v5335, %v5337
        %v5339 = vrot.slane %v5186, %v5338
        %vm5340 = vcmask 982912
        %v5341 = vsel %vm5340, %v5339, %v5334
        %v5342 = vadd.s32 %v5239, 4294967176
        %v5343 = vlaneseq
        %v5344 = vshrl.u32 %v5343, 7
        %v5345 = vsub.s32 %v5342, %v5344
        %v5346 = vrot.slane %v5189, %v5345
        %vm5347 = vcmask 1048512
        %v5348 = vsel %vm5347, %v5346, %v5341
        %v5349 = vlaneseq
        %v5350 = vshrl.u32 %v5349, 7
        %v5351 = vsub.s32 %v5239, %v5350
        %v5352 = vrot.slane %v5192, %v5351
        %v5353 = vlaneseq
        %v5354 = vshrl.u32 %v5353, 7
        %v5355 = vsub.s32 %v5244, %v5354
        %v5356 = vrot.slane %v5195, %v5355
        %v5357 = vsel %vm5249, %v5356, %v5352
        %v5358 = vlaneseq
        %v5359 = vshrl.u32 %v5358, 7
        %v5360 = vsub.s32 %v5251, %v5359
        %v5361 = vrot.slane %v5198, %v5360
        %v5362 = vsel %vm5256, %v5361, %v5357
        %v5363 = vlaneseq
        %v5364 = vshrl.u32 %v5363, 7
        %v5365 = vsub.s32 %v5258, %v5364
        %v5366 = vrot.slane %v5201, %v5365
        %v5367 = vsel %vm5263, %v5366, %v5362
        %v5368 = vlaneseq
        %v5369 = vshrl.u32 %v5368, 7
        %v5370 = vsub.s32 %v5265, %v5369
        %v5371 = vrot.slane %v5204, %v5370
        %v5372 = vsel %vm5270, %v5371, %v5367
        %v5373 = vlaneseq
        %v5374 = vshrl.u32 %v5373, 7
        %v5375 = vsub.s32 %v5272, %v5374
        %v5376 = vrot.slane %v5207, %v5375
        %v5377 = vsel %vm5277, %v5376, %v5372
        %v5378 = vlaneseq
        %v5379 = vshrl.u32 %v5378, 7
        %v5380 = vsub.s32 %v5279, %v5379
        %v5381 = vrot.slane %v5210, %v5380
        %v5382 = vsel %vm5284, %v5381, %v5377
        %v5383 = vlaneseq
        %v5384 = vshrl.u32 %v5383, 7
        %v5385 = vsub.s32 %v5286, %v5384
        %v5386 = vrot.slane %v5213, %v5385
        %v5387 = vsel %vm5291, %v5386, %v5382
        %v5388 = vlaneseq
        %v5389 = vshrl.u32 %v5388, 7
        %v5390 = vsub.s32 %v5293, %v5389
        %v5391 = vrot.slane %v5216, %v5390
        %v5392 = vsel %vm5298, %v5391, %v5387
        %v5393 = vlaneseq
        %v5394 = vshrl.u32 %v5393, 7
        %v5395 = vsub.s32 %v5300, %v5394
        %v5396 = vrot.slane %v5219, %v5395
        %v5397 = vsel %vm5305, %v5396, %v5392
        %v5398 = vlaneseq
        %v5399 = vshrl.u32 %v5398, 7
        %v5400 = vsub.s32 %v5307, %v5399
        %v5401 = vrot.slane %v5222, %v5400
        %v5402 = vsel %vm5312, %v5401, %v5397
        %v5403 = vlaneseq
        %v5404 = vshrl.u32 %v5403, 7
        %v5405 = vsub.s32 %v5314, %v5404
        %v5406 = vrot.slane %v5225, %v5405
        %v5407 = vsel %vm5319, %v5406, %v5402
        %v5408 = vlaneseq
        %v5409 = vshrl.u32 %v5408, 7
        %v5410 = vsub.s32 %v5321, %v5409
        %v5411 = vrot.slane %v5228, %v5410
        %v5412 = vsel %vm5326, %v5411, %v5407
        %v5413 = vlaneseq
        %v5414 = vshrl.u32 %v5413, 7
        %v5415 = vsub.s32 %v5328, %v5414
        %v5416 = vrot.slane %v5231, %v5415
        %v5417 = vsel %vm5333, %v5416, %v5412
        %v5418 = vlaneseq
        %v5419 = vshrl.u32 %v5418, 7
        %v5420 = vsub.s32 %v5335, %v5419
        %v5421 = vrot.slane %v5234, %v5420
        %v5422 = vsel %vm5340, %v5421, %v5417
        %v5423 = vlaneseq
        %v5424 = vshrl.u32 %v5423, 7
        %v5425 = vsub.s32 %v5342, %v5424
        %v5426 = vrot.slane %v5237, %v5425
        %v5427 = vsel %vm5347, %v5426, %v5422
        %v5428 = vcombine.low %v5348, %v5427
        %v5430 = vunpack.c.l.s4 1966171168
        %v5431 = vunpack.c.0.s8 %v5430
        %v5432 = vlaneseq
        %v5433 = vshrl.u32 %v5432, 7
        %v5434 = vsub.s32 %v5431, %v5433
        %v5435 = vrot.slane %v5428, %v5434
        %v5437 = vunpack.c.l.s4 1966171168
        %v5438 = vunpack.c.0.s8 %v5437
        %v5439 = vlaneseq
        %v5440 = vshrl.u32 %v5439, 7
        %v5441 = vsub.s32 %v5438, %v5440
        %v5442 = vrot.slane %v5435, %v5441
        %v5444 = vlaneseq
        %vm5445 = vcmp.ge.s32.totalorder %v5444, 0
        %vm5446 = vcmp.lt.s32.totalorder %v5444, 256
        %vm5447 = vmand %vm5445, %vm5446
        %5448 = vst.msk [vmem:[%s292] sm:$0x3] %vm5447, %v5442
        %s5449 = sand.u32 %s144, 1
        %s5450 = scalar_lea.sflag [#allocation5], %s5449
        %s5451 = sand.u32 %s144, 1
        %s5452 = smul.addr %s5451, 2
        %s5453 = scalar_lea.vmem [#allocation11], %s5452
        // Predicated region
        $region57: #{tpu_custom_call.1} parent=39 // pred_check
          %p5454 = pneg %p154
        $region58: #{tpu_custom_call.1} parent=39 // pred_check_branch
          %5456 = sbr.rel (%p5454) target = $region60
        $region59: #{tpu_custom_call.1} parent=39 // pred_region
          %s5457 = smul.u32 2, %s26
          %s5458 = ssub.s32 3, %s5457
          %p5459 = scmp.lt.s32.totalorder %s5458, 2
          %s5460 = scalar_select %p5459, %s5458, 2
          %s5461 = smul.u32 16, %s5460
          %s5463 = ssub.s32 32, %s5461
          %5464 = vsyncadd %s5450, %s5463
          %p5465 = scmp.ne.s32.totalorder 0, %s5461
          %s5466 = smul.addr %s5457, 16
          %s5467 = scalar_lea.hbm %s5, %s5466
          %s5468 = sshll.u32 %s5460, 4
          %s5469 = sshll.u32 %s5453, 4
          %s5470 = int_to_ptr.vmem [resolvable:$true] %s5469
          %5472 = dma.vmem_to_hbm [thread:$0]  (%p5465), %s5470, %s5468, %s5467, %s5450
        $region60: #{tpu_custom_call.1} parent=39 // pred_fallthru
          _
      $region40: #{tpu_custom_call.1} parent=5 // pred_fallthru
        _
      %p5473 = scmp.le.s32.totalorder 2, %s21
      // Predicated region
      $region61: #{tpu_custom_call.1} parent=5 // pred_check
        %p5474 = pneg %p5473
      $region62: #{tpu_custom_call.1} parent=5 // pred_check_branch
        %5476 = sbr.rel (%p5474) target = $region64
      $region63: #{tpu_custom_call.1} parent=5 // pred_region
        %s5477 = ssub.s32 %s21, 2
        // Predicated region
        $region65: #{tpu_custom_call.1} parent=63 // pred_check
          %p5478 = pneg %p160
        $region66: #{tpu_custom_call.1} parent=63 // pred_check_branch
          %5480 = sbr.rel (%p5478) target = $region68
        $region67: #{tpu_custom_call.1} parent=63 // pred_region
          %s5481 = sand.u32 %s145, 1
          %s5482 = scalar_lea.sflag [#allocation5], %s5481
          %s5483 = sand.u32 %s145, 1
          %s5484 = smul.addr %s5483, 2
          %s5485 = scalar_lea.vmem [#allocation11], %s5484
          %5486 = dma.done %s5482, 32
        $region68: #{tpu_custom_call.1} parent=63 // pred_fallthru
          _
      $region64: #{tpu_custom_call.1} parent=5 // pred_fallthru
        _
    $region6: #{tpu_custom_call.1} parent=1 // loop_footer
      %s25 = sadd.s32 1, %s21
    $region7: #{tpu_custom_call.1} parent=1 // loop_footer_branch
      %20 = sbr.rel target = $region3
    $region8: #{tpu_custom_call.1} parent=1 // loop_exit
      _
    %5487 = vsyncpa [#allocation4], 1
    %s5488 = scalar_lea.sflag [#allocation4], 1
    %5489 = vsyncpa %s5488, 1
    %5490 = vsyncpa [#allocation7], 1
    %5491 = vsyncpa [#allocation10], 1
    %5492 = vsyncpa [#allocation5], 1
    %s5493 = scalar_lea.sflag [#allocation5], 1
    %5494 = vsyncpa %s5493, 1

</llo_original>
